<compile_context>
chip_gen: v5e
topology: v5e:2x2
jax: 0.10.0
libtpu: 0.0.40
codegen_flags: <defaults>
</compile_context>

<pallas_src>
import functools
import math

import numpy as np
import jax
import jax.numpy as jnp
from jax.experimental import pallas as pl
from jax.experimental.pallas import tpu as pltpu

# ----------------------------- config (small synthetic CLIP) -----------------------------
CFG = dict(
    batch=2, img_channels=3, img_size=16, patch=8,            # 4 patches per image
    vis_width=32, vis_heads=2, vis_layers=2,
    visual_nctx=4, visual_prompt_layers=2,                    # cfg.TRAINER.COOP.VISUAL_*
    txt_width=32, txt_heads=2, txt_layers=2,
    text_nctx=4, text_prompt_layers=2,                        # cfg.TRAINER.COOP.TEXT_*
    n_cls=4, ctx_len=16,                                      # tokenized prompt length
    embed_dim=32,
)

_BLOCK_KEYS = ("ln1_g", "ln1_b", "ln2_g", "ln2_b", "w_in", "b_in", "w_out", "b_out",
               "w_fc", "b_fc", "w_proj", "b_proj")


# ----------------------------- in-kernel math helpers -----------------------------

def _mm(a, b):
    """bf16-in / f32-accumulate MXU matmul for weights & activations."""
    return jnp.dot(a.astype(jnp.bfloat16), b.astype(jnp.bfloat16),
                   preferred_element_type=jnp.float32)


def _mm_nt(a, b):
    """a @ b.T without materializing a transpose (contract last dims on the MXU)."""
    return jax.lax.dot_general(
        a.astype(jnp.bfloat16), b.astype(jnp.bfloat16),
        dimension_numbers=(((1,), (1,)), ((), ())),
        preferred_element_type=jnp.float32)


def _ln(x, g, b, eps=1e-5):
    x = x.astype(jnp.float32)
    mu = jnp.mean(x, axis=-1, keepdims=True)
    var = jnp.mean(jnp.square(x - mu), axis=-1, keepdims=True)
    return (x - mu) * jax.lax.rsqrt(var + eps) * g + b


def _transformer(x, mask, blk, heads, deep_update):
    """CLIP residual-attention stack for ONE sequence (grid instance), resident in VMEM.

    QKV is one fused (D, 3D) matmul; heads are static lane slices of the fused projection;
    the output projection is a single (D, D) matmul on the concatenated head outputs.
    TODO(synk): at production depth (12-24 layers) move the layer loop onto a grid axis with
    Buffered weight BlockSpecs instead of this static unroll (vreg pressure / VMEM residency).
    """
    (ln1_g, ln1_b, ln2_g, ln2_b, w_in, b_in, w_out, b_out,
     w_fc, b_fc, w_proj, b_proj) = blk
    L = w_in.shape[0]
    D = x.shape[-1]
    Dh = D // heads
    scale = 1.0 / math.sqrt(Dh)
    for l in range(L):
        x = deep_update(l, x)
        # ---- multi-head self-attention (fused QKV) ----
        h = _ln(x, ln1_g[l], ln1_b[l])
        qkv = _mm(h, w_in[l]) + b_in[l]                      # (S, 3D)
        head_out = []
        for hh in range(heads):
            q = qkv[:, hh * Dh:(hh + 1) * Dh]
            k = qkv[:, D + hh * Dh:D + (hh + 1) * Dh]
            v = qkv[:, 2 * D + hh * Dh:2 * D + (hh + 1) * Dh]
            s = _mm_nt(q, k) * scale
            if mask is not None:
                s = s + mask                                  # additive causal mask (in-kernel)
            s = s - jnp.max(s, axis=-1, keepdims=True)
            p = jnp.exp(s)
            p = p * pl.reciprocal(jnp.sum(p, axis=-1, keepdims=True), approx=True)
            head_out.append(_mm(p, v))                        # (S, Dh)
        o = jnp.concatenate(head_out, axis=-1) if heads > 1 else head_out[0]
        x = x + _mm(o, w_out[l]) + b_out[l]
        # ---- MLP with QuickGELU ----
        h = _ln(x, ln2_g[l], ln2_b[l])
        h = _mm(h, w_fc[l]) + b_fc[l]
        h = h * jax.nn.sigmoid(1.702 * h)                     # QuickGELU, f32
        x = x + _mm(h, w_proj[l]) + b_proj[l]
    return x


# ----------------------------- fused Pallas kernels -----------------------------

def _visual_kernel(patches_ref, conv_w_ref, base_ref, pslab_ref, keep_ref,
                   ln_pre_g_ref, ln_pre_b_ref,
                   ln1_g, ln1_b, ln2_g, ln2_b, w_in, b_in, w_out, b_out,
                   w_fc, b_fc, w_proj, b_proj,
                   ln_post_g_ref, ln_post_b_ref, vis_proj_ref,
                   out_ref, *, heads, vpl):
    # patch embedding (stride==kernel conv as matmul); patch rows are zero-padded on the host so
    # the matmul directly yields an (S, D) slab with zero rows at the CLS / prompt positions.
    tok = _mm(patches_ref[0], conv_w_ref[...])                # (S, D)
    # [CLS+pos | visual prompts (layer 0) | patch+pos] assembled with a single VPU add.
    x = tok + base_ref[...]
    # TODO(synk): ProVP's modified visual forward is not in the spec; ln_pre is applied to the
    # full [CLS|prompt|patch] sequence here (per review); plain VPT inserts prompts after ln_pre.
    x = _ln(x, ln_pre_g_ref[...], ln_pre_b_ref[...])

    def deep_update(l, xx):
        if 0 < l < vpl:                                       # deep VPT: overwrite prompt rows
            return xx * keep_ref[...] + pslab_ref[l]          # VPU masked add, no matmul
        return xx

    blk = (ln1_g, ln1_b, ln2_g, ln2_b, w_in, b_in, w_out, b_out,
           w_fc, b_fc, w_proj, b_proj)
    x = _transformer(x, None, blk, heads, deep_update)

    # epilogue: CLS row (static slice) -> ln_post -> visual projection -> L2 normalize
    cls_tok = x[0:1, :]
    feat = _mm(_ln(cls_tok, ln_post_g_ref[...], ln_post_b_ref[...]), vis_proj_ref[...])
    feat = feat * jax.lax.rsqrt(jnp.sum(feat * feat, axis=-1, keepdims=True) + 1e-12)
    out_ref[0] = feat.astype(out_ref.dtype)


def _text_logits_kernel(x0_ref, ctx_slab_ref, keep_ref, eot_oh_ref,
                        ln1_g, ln1_b, ln2_g, ln2_b, w_in, b_in, w_out, b_out,
                        w_fc, b_fc, w_proj, b_proj,
                        ln_final_g_ref, ln_final_b_ref, text_proj_ref,
                        img_ref, scale_ref, out_ref, *, heads, tpl):
    x = x0_ref[0].astype(jnp.float32)                         # (S, D) one class' prompt tokens
    S = x.shape[0]
    # causal attention mask generated in-kernel (no O(N^2) HBM traffic)
    row = jax.lax.broadcasted_iota(jnp.int32, (S, S), 0)
    col = jax.lax.broadcasted_iota(jnp.int32, (S, S), 1)
    causal = jnp.where(row >= col, 0.0, -1e9).astype(jnp.float32)

    def deep_update(l, xx):
        if 0 < l < tpl:
            # TODO(synk): exact deep-prompt hook of ProVP's modified text transformer is not in
            # the spec; standard deep replacement of the ctx rows is used.
            return xx * keep_ref[...] + ctx_slab_ref[l]
        return xx

    blk = (ln1_g, ln1_b, ln2_g, ln2_b, w_in, b_in, w_out, b_out,
           w_fc, b_fc, w_proj, b_proj)
    x = _transformer(x, causal, blk, heads, deep_update)

    # epilogue: EOT gather as one-hot masked sum -> ln_final -> text projection -> normalize
    eot = jnp.sum(x * eot_oh_ref[0], axis=0, keepdims=True)   # (1, D)
    txt = _mm(_ln(eot, ln_final_g_ref[...], ln_final_b_ref[...]), text_proj_ref[...])
    txt = txt * jax.lax.rsqrt(jnp.sum(txt * txt, axis=-1, keepdims=True) + 1e-12)

    # fused CLIP head: one column of logits per class grid step
    img = img_ref[...].astype(jnp.float32)                    # (B, E), already L2-normalized
    logits_row = scale_ref[...] * jax.lax.dot_general(
        txt, img, dimension_numbers=(((1,), (1,)), ((), ())),
        preferred_element_type=jnp.float32)                   # (1, B)
    out_ref[0] = logits_row.astype(out_ref.dtype)


# ----------------------------- Pallas wrappers (host glue) -----------------------------

def _full_spec(arr):
    """Whole-array block (resident in VMEM every grid step)."""
    nd = arr.ndim
    return pl.BlockSpec(tuple(arr.shape), lambda i, _n=nd: (0,) * _n)


def _block_args(params, prefix):
    return tuple(params[prefix + k] for k in _BLOCK_KEYS)


def visual_encode(params, image):
    B, C, H, W = image.shape
    ps, vw, E = CFG["patch"], CFG["vis_width"], CFG["embed_dim"]
    nctx, vpl = CFG["visual_nctx"], CFG["visual_prompt_layers"]
    heads = CFG["vis_heads"]
    nph, npw = H // ps, W // ps
    P = nph * npw
    S = 1 + nctx + P
    pd = C * ps * ps

    # NCHW -> (B, P, C*ps*ps) patch vectors, zero-padded with CLS+prompt rows (layout glue only)
    patches = image.reshape(B, C, nph, ps, npw, ps).transpose(0, 2, 4, 1, 3, 5)
    patches = patches.reshape(B, P, pd)
    patches_pad = jnp.concatenate(
        [jnp.zeros((B, 1 + nctx, pd), patches.dtype), patches], axis=1)        # (B, S, pd)

    pos = params["vis_pos"]                                                    # (1+P, vw)
    base = jnp.concatenate([
        (params["class_emb"] + pos[0]).reshape(1, vw),                         # CLS + pos[0]
        params["vprompts"][0],                                                 # layer-0 prompts
        pos[1:],                                                               # patch pos emb
    ], axis=0)                                                                 # (S, vw)

    pslab = jnp.concatenate([
        jnp.zeros((vpl, 1, vw), jnp.float32),
        params["vprompts"],
        jnp.zeros((vpl, P, vw), jnp.float32),
    ], axis=1)                                                                 # (vpl, S, vw)

    keep = np.ones((S, 1), np.float32)
    keep[1:1 + nctx, 0] = 0.0
    keep = jnp.asarray(keep)

    operands = (patches_pad, params["conv1_w"], base, pslab, keep,
                params["ln_pre_g"], params["ln_pre_b"],
                *_block_args(params, "vis_"),
                params["ln_post_g"], params["ln_post_b"], params["vis_proj"])

    in_specs = [pl.BlockSpec((1, S, pd), lambda b: (b, 0, 0))]
    in_specs += [_full_spec(a) for a in operands[1:]]

    out = pl.pallas_call(
        functools.partial(_visual_kernel, heads=heads, vpl=vpl),
        grid=(B,),
        out_shape=jax.ShapeDtypeStruct((B, 1, E), jnp.float32),
        in_specs=in_specs,
        out_specs=pl.BlockSpec((1, 1, E), lambda b: (b, 0, 0)),
        compiler_params=pltpu.CompilerParams(dimension_semantics=("parallel",)),
    )(*operands)
    return out[:, 0, :]                                                        # (B, E), normalized


def text_encode_logits(params, tokenized_prompts, image_features_norm):
    n_cls, T = tokenized_prompts.shape
    tw, E = CFG["txt_width"], CFG["embed_dim"]
    nctx, tpl = CFG["text_nctx"], CFG["text_prompt_layers"]
    heads = CFG["txt_heads"]
    B = image_features_norm.shape[0]

    # PromptLearner.forward(): prompts = [prefix | ctx[0] | suffix] + positional embedding
    ctx0 = jnp.broadcast_to(params["ctx"][0][None], (n_cls, nctx, tw))
    tprompts = jnp.concatenate([params["token_prefix"], ctx0, params["token_suffix"]], axis=1)
    x = tprompts + params["txt_pos"][None]                                     # (n_cls, T, tw)

    eot = np.asarray(tokenized_prompts).argmax(-1)                             # host-static
    smax = int(min(T, int(eot.max()) + 1))                                     # truncate to max EOT
    x = x[:, :smax]                                                            # (n_cls, smax, tw)

    ctx_slab = jnp.concatenate([
        jnp.zeros((tpl, 1, tw), jnp.float32),
        params["ctx"],
        jnp.zeros((tpl, smax - 1 - nctx, tw), jnp.float32),
    ], axis=1)                                                                 # (tpl, smax, tw)

    keep = np.ones((smax, 1), np.float32)
    keep[1:1 + nctx, 0] = 0.0
    keep = jnp.asarray(keep)

    eot_oh = np.zeros((n_cls, smax, 1), np.float32)
    for i in range(n_cls):
        eot_oh[i, int(eot[i]), 0] = 1.0
    eot_oh = jnp.asarray(eot_oh)

    scale = jnp.exp(params["logit_scale"]).reshape(1, 1)                       # exp(logit_scale)

    operands = (x, ctx_slab, keep, eot_oh,
                *_block_args(params, "txt_"),
                params["ln_final_g"], params["ln_final_b"], params["text_proj"],
                image_features_norm, scale)

    in_specs = [pl.BlockSpec((1, smax, tw), lambda i: (i, 0, 0)),
                _full_spec(ctx_slab), _full_spec(keep),
                pl.BlockSpec((1, smax, 1), lambda i: (i, 0, 0))]
    in_specs += [_full_spec(a) for a in operands[4:]]

    out = pl.pallas_call(
        functools.partial(_text_logits_kernel, heads=heads, tpl=tpl),
        grid=(n_cls,),
        out_shape=jax.ShapeDtypeStruct((n_cls, 1, B), jnp.float32),
        in_specs=in_specs,
        out_specs=pl.BlockSpec((1, 1, B), lambda i: (i, 0, 0)),
        compiler_params=pltpu.CompilerParams(dimension_semantics=("parallel",)),
    )(*operands)
    return out[:, 0, :].T                                                      # (B, n_cls)


def custom_clip_forward(params, image, tokenized_prompts):
    image_features = visual_encode(params, image)                  # normalized in-kernel
    return text_encode_logits(params, tokenized_prompts, image_features)


# ----------------------------- parameter init (synthetic mini-CLIP) -----------------------------

def _init_blocks(key, L, d):
    ks = jax.random.split(key, 4)

    def nrm(k, shape, std=0.02):
        return std * jax.random.normal(k, shape, jnp.float32)

    return {
        "ln1_g": jnp.ones((L, 1, d)), "ln1_b": jnp.zeros((L, 1, d)),
        "ln2_g": jnp.ones((L, 1, d)), "ln2_b": jnp.zeros((L, 1, d)),
        # fused QKV in-projection (same layout as nn.MultiheadAttention in_proj, head-contiguous)
        "w_in": nrm(ks[0], (L, d, 3 * d)), "b_in": jnp.zeros((L, 1, 3 * d)),
        "w_out": nrm(ks[1], (L, d, d)), "b_out": jnp.zeros((L, 1, d)),
        "w_fc": nrm(ks[2], (L, d, 4 * d)), "b_fc": jnp.zeros((L, 1, 4 * d)),
        "w_proj": nrm(ks[3], (L, 4 * d, d)), "b_proj": jnp.zeros((L, 1, d)),
    }


def init_params(key):
    ks = iter(jax.random.split(key, 32))

    def nrm(shape, std=0.02):
        return std * jax.random.normal(next(ks), shape, jnp.float32)

    vw, tw, E = CFG["vis_width"], CFG["txt_width"], CFG["embed_dim"]
    patch_dim = CFG["img_channels"] * CFG["patch"] ** 2
    n_patches = (CFG["img_size"] // CFG["patch"]) ** 2

    p = {}
    # ---- visual encoder ----
    p["conv1_w"] = nrm((patch_dim, vw))                           # conv patch embed as matmul
    p["class_emb"] = nrm((vw,))
    p["vis_pos"] = nrm((1 + n_patches, vw), 0.01)
    p["ln_pre_g"], p["ln_pre_b"] = jnp.ones((1, vw)), jnp.zeros((1, vw))
    for k, v in _init_blocks(next(ks), CFG["vis_layers"], vw).items():
        p["vis_" + k] = v
    p["ln_post_g"], p["ln_post_b"] = jnp.ones((1, vw)), jnp.zeros((1, vw))
    p["vis_proj"] = nrm((vw, E))

    # ---- VisualPromptLearner: uniform(-val, val), val = sqrt(6 / (3*14*14 + hidden)) ----
    val = math.sqrt(6.0 / float(3 * 14 * 14 + vw))
    p["vprompts"] = jax.random.uniform(
        next(ks), (CFG["visual_prompt_layers"], CFG["visual_nctx"], vw),
        jnp.float32, -val, val)

    # ---- TextPromptLearner params / buffers (synthetic token embeddings, std=0.02) ----
    p["ctx"] = nrm((CFG["text_prompt_layers"], CFG["text_nctx"], tw))
    p["token_prefix"] = nrm((CFG["n_cls"], 1, tw))
    p["token_suffix"] = nrm((CFG["n_cls"], CFG["ctx_len"] - 1 - CFG["text_nctx"], tw))

    # ---- text encoder ----
    p["txt_pos"] = nrm((CFG["ctx_len"], tw), 0.01)
    for k, v in _init_blocks(next(ks), CFG["txt_layers"], tw).items():
        p["txt_" + k] = v
    p["ln_final_g"], p["ln_final_b"] = jnp.ones((1, tw)), jnp.zeros((1, tw))
    p["text_proj"] = nrm((tw, E))
    p["logit_scale"] = jnp.array([math.log(1.0 / 0.07)], jnp.float32)
    return p


def make_tokenized_prompts():
    # synthetic stand-in for clip.tokenize: SOT=49406, EOT=49407 (max id -> argmax = EOT pos)
    # TODO(synk): real CLIP BPE tokenizer + token-embedding table not reproducible in-script.
    n_cls, T, n_ctx = CFG["n_cls"], CFG["ctx_len"], CFG["text_nctx"]
    tok = np.zeros((n_cls, T), np.int32)
    tok[:, 0] = 49406
    for i in range(n_cls):
        eot_pos = 1 + n_ctx + 1 + i
        tok[i, 1:eot_pos] = 400 + i
        tok[i, eot_pos] = 49407
    return tok


# ----------------------------- main -----------------------------

if __name__ == "__main__":
    key = jax.random.PRNGKey(0)
    pkey, ikey = jax.random.split(key)
    params = init_params(pkey)
    tokenized_prompts = make_tokenized_prompts()                 # host-static numpy buffer

    image = jax.random.normal(
        ikey, (CFG["batch"], CFG["img_channels"], CFG["img_size"], CFG["img_size"]),
        jnp.float32)

    # tokenized_prompts stays a trace-time constant (closure), never a traced jit argument.
    fwd = jax.jit(lambda p, img: custom_clip_forward(p, img, tokenized_prompts))
    logits = jax.block_until_ready(fwd(params, image))

    assert logits.shape == (CFG["batch"], CFG["n_cls"])
    assert bool(jnp.all(jnp.isfinite(logits)))
    print("KERNEL_OK")
</pallas_src>

<mosaic_0001>
module attributes {stable_mosaic.version = 11 : i64} {
  func.func @_visual_kernel(%arg0: i32, %arg1: memref<1x9x192xf32, #tpu.memory_space<vmem>>, %arg2: memref<192x32xf32, #tpu.memory_space<vmem>>, %arg3: memref<9x32xf32, #tpu.memory_space<vmem>>, %arg4: memref<2x9x32xf32, #tpu.memory_space<vmem>>, %arg5: memref<9x1xf32, #tpu.memory_space<vmem>>, %arg6: memref<1x32xf32, #tpu.memory_space<vmem>>, %arg7: memref<1x32xf32, #tpu.memory_space<vmem>>, %arg8: memref<2x1x32xf32, #tpu.memory_space<vmem>>, %arg9: memref<2x1x32xf32, #tpu.memory_space<vmem>>, %arg10: memref<2x1x32xf32, #tpu.memory_space<vmem>>, %arg11: memref<2x1x32xf32, #tpu.memory_space<vmem>>, %arg12: memref<2x32x96xf32, #tpu.memory_space<vmem>>, %arg13: memref<2x1x96xf32, #tpu.memory_space<vmem>>, %arg14: memref<2x32x32xf32, #tpu.memory_space<vmem>>, %arg15: memref<2x1x32xf32, #tpu.memory_space<vmem>>, %arg16: memref<2x32x128xf32, #tpu.memory_space<vmem>>, %arg17: memref<2x1x128xf32, #tpu.memory_space<vmem>>, %arg18: memref<2x128x32xf32, #tpu.memory_space<vmem>>, %arg19: memref<2x1x32xf32, #tpu.memory_space<vmem>>, %arg20: memref<1x32xf32, #tpu.memory_space<vmem>>, %arg21: memref<1x32xf32, #tpu.memory_space<vmem>>, %arg22: memref<32x32xf32, #tpu.memory_space<vmem>>, %arg23: memref<1x1x32xf32, #tpu.memory_space<vmem>>) attributes {dimension_semantics = [#tpu.dimension_semantics<parallel>], iteration_bounds = array<i64: 2>, scalar_prefetch = 0 : i64, scratch_operands = 0 : i64, tpu.core_type = #tpu.core_type<tc>, window_params = [{transform_indices = @transform_0, window_bounds = array<i64: 1, 9, 192>}, {pipeline_mode = #tpu.pipeline_mode<synchronous>, transform_indices = @transform_1, window_bounds = array<i64: 192, 32>}, {pipeline_mode = #tpu.pipeline_mode<synchronous>, transform_indices = @transform_2, window_bounds = array<i64: 9, 32>}, {pipeline_mode = #tpu.pipeline_mode<synchronous>, transform_indices = @transform_3, window_bounds = array<i64: 2, 9, 32>}, {pipeline_mode = #tpu.pipeline_mode<synchronous>, transform_indices = @transform_4, window_bounds = array<i64: 9, 1>}, {pipeline_mode = #tpu.pipeline_mode<synchronous>, transform_indices = @transform_5, window_bounds = array<i64: 1, 32>}, {pipeline_mode = #tpu.pipeline_mode<synchronous>, transform_indices = @transform_6, window_bounds = array<i64: 1, 32>}, {pipeline_mode = #tpu.pipeline_mode<synchronous>, transform_indices = @transform_7, window_bounds = array<i64: 2, 1, 32>}, {pipeline_mode = #tpu.pipeline_mode<synchronous>, transform_indices = @transform_8, window_bounds = array<i64: 2, 1, 32>}, {pipeline_mode = #tpu.pipeline_mode<synchronous>, transform_indices = @transform_9, window_bounds = array<i64: 2, 1, 32>}, {pipeline_mode = #tpu.pipeline_mode<synchronous>, transform_indices = @transform_10, window_bounds = array<i64: 2, 1, 32>}, {pipeline_mode = #tpu.pipeline_mode<synchronous>, transform_indices = @transform_11, window_bounds = array<i64: 2, 32, 96>}, {pipeline_mode = #tpu.pipeline_mode<synchronous>, transform_indices = @transform_12, window_bounds = array<i64: 2, 1, 96>}, {pipeline_mode = #tpu.pipeline_mode<synchronous>, transform_indices = @transform_13, window_bounds = array<i64: 2, 32, 32>}, {pipeline_mode = #tpu.pipeline_mode<synchronous>, transform_indices = @transform_14, window_bounds = array<i64: 2, 1, 32>}, {pipeline_mode = #tpu.pipeline_mode<synchronous>, transform_indices = @transform_15, window_bounds = array<i64: 2, 32, 128>}, {pipeline_mode = #tpu.pipeline_mode<synchronous>, transform_indices = @transform_16, window_bounds = array<i64: 2, 1, 128>}, {pipeline_mode = #tpu.pipeline_mode<synchronous>, transform_indices = @transform_17, window_bounds = array<i64: 2, 128, 32>}, {pipeline_mode = #tpu.pipeline_mode<synchronous>, transform_indices = @transform_18, window_bounds = array<i64: 2, 1, 32>}, {pipeline_mode = #tpu.pipeline_mode<synchronous>, transform_indices = @transform_19, window_bounds = array<i64: 1, 32>}, {pipeline_mode = #tpu.pipeline_mode<synchronous>, transform_indices = @transform_20, window_bounds = array<i64: 1, 32>}, {pipeline_mode = #tpu.pipeline_mode<synchronous>, transform_indices = @transform_21, window_bounds = array<i64: 32, 32>}, {transform_indices = @transform_22, window_bounds = array<i64: 1, 1, 32>}]} {
    %c0 = arith.constant 0 : index
    %c0_0 = arith.constant 0 : index
    %c0_1 = arith.constant 0 : index
    %0 = vector.load %arg1[%c0, %c0_0, %c0_1] : memref<1x9x192xf32, #tpu.memory_space<vmem>>, vector<1x9x192xf32>
    %1 = vector.shape_cast %0 : vector<1x9x192xf32> to vector<9x192xf32>
    %c0_2 = arith.constant 0 : index
    %c0_3 = arith.constant 0 : index
    %2 = vector.load %arg2[%c0_2, %c0_3] : memref<192x32xf32, #tpu.memory_space<vmem>>, vector<192x32xf32>
    %3 = arith.truncf %1 : vector<9x192xf32> to vector<9x192xbf16>
    %4 = arith.truncf %2 : vector<192x32xf32> to vector<192x32xbf16>
    %cst = arith.constant dense<0.000000e+00> : vector<9x32xf32>
    %5 = tpu.matmul %3, %4, %cst {dimension_numbers = #tpu.dot_dimension_numbers<[1], [0], [0], [1], [0, 0, 1, 1], [], []>} : vector<9x192xbf16>, vector<192x32xbf16>, vector<9x32xf32> -> vector<9x32xf32>
    %c0_4 = arith.constant 0 : index
    %c0_5 = arith.constant 0 : index
    %6 = vector.load %arg3[%c0_4, %c0_5] : memref<9x32xf32, #tpu.memory_space<vmem>>, vector<9x32xf32>
    %7 = arith.addf %5, %6 : vector<9x32xf32>
    %c0_6 = arith.constant 0 : index
    %c0_7 = arith.constant 0 : index
    %8 = vector.load %arg6[%c0_6, %c0_7] : memref<1x32xf32, #tpu.memory_space<vmem>>, vector<1x32xf32>
    %c0_8 = arith.constant 0 : index
    %c0_9 = arith.constant 0 : index
    %9 = vector.load %arg7[%c0_8, %c0_9] : memref<1x32xf32, #tpu.memory_space<vmem>>, vector<1x32xf32>
    %cst_10 = arith.constant dense<0.000000e+00> : vector<9xf32>
    %10 = vector.multi_reduction <add>, %7, %cst_10 [1] : vector<9x32xf32> to vector<9xf32>
    %11 = vector.shape_cast %10 : vector<9xf32> to vector<9x1xf32>
    %cst_11 = arith.constant 3.200000e+01 : f32
    %12 = vector.broadcast %cst_11 : f32 to vector<9x1xf32>
    %13 = arith.divf %11, %12 : vector<9x1xf32>
    %14 = vector.broadcast %13 : vector<9x1xf32> to vector<9x32xf32>
    %15 = arith.subf %7, %14 : vector<9x32xf32>
    %16 = arith.mulf %15, %15 : vector<9x32xf32>
    %cst_12 = arith.constant dense<0.000000e+00> : vector<9xf32>
    %17 = vector.multi_reduction <add>, %16, %cst_12 [1] : vector<9x32xf32> to vector<9xf32>
    %18 = vector.shape_cast %17 : vector<9xf32> to vector<9x1xf32>
    %cst_13 = arith.constant 3.200000e+01 : f32
    %19 = vector.broadcast %cst_13 : f32 to vector<9x1xf32>
    %20 = arith.divf %18, %19 : vector<9x1xf32>
    %21 = vector.broadcast %13 : vector<9x1xf32> to vector<9x32xf32>
    %22 = arith.subf %7, %21 : vector<9x32xf32>
    %cst_14 = arith.constant 9.99999974E-6 : f32
    %23 = vector.broadcast %cst_14 : f32 to vector<9x1xf32>
    %24 = arith.addf %20, %23 : vector<9x1xf32>
    %25 = math.rsqrt %24 : vector<9x1xf32>
    %26 = vector.broadcast %25 : vector<9x1xf32> to vector<9x32xf32>
    %27 = arith.mulf %22, %26 : vector<9x32xf32>
    %28 = vector.broadcast %8 : vector<1x32xf32> to vector<9x32xf32>
    %29 = arith.mulf %27, %28 : vector<9x32xf32>
    %30 = vector.broadcast %9 : vector<1x32xf32> to vector<9x32xf32>
    %31 = arith.addf %29, %30 : vector<9x32xf32>
    %c0_15 = arith.constant 0 : index
    %c0_16 = arith.constant 0 : index
    %c0_17 = arith.constant 0 : index
    %32 = vector.load %arg8[%c0_15, %c0_16, %c0_17] : memref<2x1x32xf32, #tpu.memory_space<vmem>>, vector<1x1x32xf32>
    %33 = vector.shape_cast %32 : vector<1x1x32xf32> to vector<1x32xf32>
    %c0_18 = arith.constant 0 : index
    %c0_19 = arith.constant 0 : index
    %c0_20 = arith.constant 0 : index
    %34 = vector.load %arg9[%c0_18, %c0_19, %c0_20] : memref<2x1x32xf32, #tpu.memory_space<vmem>>, vector<1x1x32xf32>
    %35 = vector.shape_cast %34 : vector<1x1x32xf32> to vector<1x32xf32>
    %cst_21 = arith.constant dense<0.000000e+00> : vector<9xf32>
    %36 = vector.multi_reduction <add>, %31, %cst_21 [1] : vector<9x32xf32> to vector<9xf32>
    %37 = vector.shape_cast %36 : vector<9xf32> to vector<9x1xf32>
    %cst_22 = arith.constant 3.200000e+01 : f32
    %38 = vector.broadcast %cst_22 : f32 to vector<9x1xf32>
    %39 = arith.divf %37, %38 : vector<9x1xf32>
    %40 = vector.broadcast %39 : vector<9x1xf32> to vector<9x32xf32>
    %41 = arith.subf %31, %40 : vector<9x32xf32>
    %42 = arith.mulf %41, %41 : vector<9x32xf32>
    %cst_23 = arith.constant dense<0.000000e+00> : vector<9xf32>
    %43 = vector.multi_reduction <add>, %42, %cst_23 [1] : vector<9x32xf32> to vector<9xf32>
    %44 = vector.shape_cast %43 : vector<9xf32> to vector<9x1xf32>
    %cst_24 = arith.constant 3.200000e+01 : f32
    %45 = vector.broadcast %cst_24 : f32 to vector<9x1xf32>
    %46 = arith.divf %44, %45 : vector<9x1xf32>
    %47 = vector.broadcast %39 : vector<9x1xf32> to vector<9x32xf32>
    %48 = arith.subf %31, %47 : vector<9x32xf32>
    %cst_25 = arith.constant 9.99999974E-6 : f32
    %49 = vector.broadcast %cst_25 : f32 to vector<9x1xf32>
    %50 = arith.addf %46, %49 : vector<9x1xf32>
    %51 = math.rsqrt %50 : vector<9x1xf32>
    %52 = vector.broadcast %51 : vector<9x1xf32> to vector<9x32xf32>
    %53 = arith.mulf %48, %52 : vector<9x32xf32>
    %54 = vector.broadcast %33 : vector<1x32xf32> to vector<9x32xf32>
    %55 = arith.mulf %53, %54 : vector<9x32xf32>
    %56 = vector.broadcast %35 : vector<1x32xf32> to vector<9x32xf32>
    %57 = arith.addf %55, %56 : vector<9x32xf32>
    %c0_26 = arith.constant 0 : index
    %c0_27 = arith.constant 0 : index
    %c0_28 = arith.constant 0 : index
    %58 = vector.load %arg12[%c0_26, %c0_27, %c0_28] : memref<2x32x96xf32, #tpu.memory_space<vmem>>, vector<1x32x96xf32>
    %59 = vector.shape_cast %58 : vector<1x32x96xf32> to vector<32x96xf32>
    %60 = arith.truncf %57 : vector<9x32xf32> to vector<9x32xbf16>
    %61 = arith.truncf %59 : vector<32x96xf32> to vector<32x96xbf16>
    %cst_29 = arith.constant dense<0.000000e+00> : vector<9x96xf32>
    %62 = tpu.matmul %60, %61, %cst_29 {dimension_numbers = #tpu.dot_dimension_numbers<[1], [0], [0], [1], [0, 0, 1, 1], [], []>} : vector<9x32xbf16>, vector<32x96xbf16>, vector<9x96xf32> -> vector<9x96xf32>
    %c0_30 = arith.constant 0 : index
    %c0_31 = arith.constant 0 : index
    %c0_32 = arith.constant 0 : index
    %63 = vector.load %arg13[%c0_30, %c0_31, %c0_32] : memref<2x1x96xf32, #tpu.memory_space<vmem>>, vector<1x1x96xf32>
    %64 = vector.shape_cast %63 : vector<1x1x96xf32> to vector<1x96xf32>
    %65 = vector.broadcast %64 : vector<1x96xf32> to vector<9x96xf32>
    %66 = arith.addf %62, %65 : vector<9x96xf32>
    %67 = vector.extract_strided_slice %66 {offsets = [0, 0], sizes = [9, 16], strides = [1, 1]} : vector<9x96xf32> to vector<9x16xf32>
    %68 = vector.extract_strided_slice %66 {offsets = [0, 32], sizes = [9, 16], strides = [1, 1]} : vector<9x96xf32> to vector<9x16xf32>
    %69 = vector.extract_strided_slice %66 {offsets = [0, 64], sizes = [9, 16], strides = [1, 1]} : vector<9x96xf32> to vector<9x16xf32>
    %70 = arith.truncf %67 : vector<9x16xf32> to vector<9x16xbf16>
    %71 = arith.truncf %68 : vector<9x16xf32> to vector<9x16xbf16>
    %cst_33 = arith.constant dense<0.000000e+00> : vector<9x9xf32>
    %72 = tpu.matmul %70, %71, %cst_33 {dimension_numbers = #tpu.dot_dimension_numbers<[1], [1], [0], [0], [0, 0, 1, 0], [], []>} : vector<9x16xbf16>, vector<9x16xbf16>, vector<9x9xf32> -> vector<9x9xf32>
    %cst_34 = arith.constant 2.500000e-01 : f32
    %73 = vector.broadcast %cst_34 : f32 to vector<9x9xf32>
    %74 = arith.mulf %72, %73 : vector<9x9xf32>
    %cst_35 = arith.constant dense<0xFF800000> : vector<9xf32>
    %75 = vector.multi_reduction <maximumf>, %74, %cst_35 [1] : vector<9x9xf32> to vector<9xf32>
    %76 = vector.shape_cast %75 : vector<9xf32> to vector<9x1xf32>
    %77 = vector.broadcast %76 : vector<9x1xf32> to vector<9x9xf32>
    %78 = arith.subf %74, %77 : vector<9x9xf32>
    %79 = math.exp %78 : vector<9x9xf32>
    %cst_36 = arith.constant dense<0.000000e+00> : vector<9xf32>
    %80 = vector.multi_reduction <add>, %79, %cst_36 [1] : vector<9x9xf32> to vector<9xf32>
    %81 = vector.shape_cast %80 : vector<9xf32> to vector<9x1xf32>
    %82 = tpu.reciprocal %81 {approx = true} : vector<9x1xf32> -> vector<9x1xf32>
    %83 = vector.broadcast %82 : vector<9x1xf32> to vector<9x9xf32>
    %84 = arith.mulf %79, %83 : vector<9x9xf32>
    %85 = arith.truncf %84 : vector<9x9xf32> to vector<9x9xbf16>
    %86 = arith.truncf %69 : vector<9x16xf32> to vector<9x16xbf16>
    %cst_37 = arith.constant dense<0.000000e+00> : vector<9x16xf32>
    %87 = tpu.matmul %85, %86, %cst_37 {dimension_numbers = #tpu.dot_dimension_numbers<[1], [0], [0], [1], [0, 0, 1, 1], [], []>} : vector<9x9xbf16>, vector<9x16xbf16>, vector<9x16xf32> -> vector<9x16xf32>
    %88 = vector.extract_strided_slice %66 {offsets = [0, 16], sizes = [9, 16], strides = [1, 1]} : vector<9x96xf32> to vector<9x16xf32>
    %89 = vector.extract_strided_slice %66 {offsets = [0, 48], sizes = [9, 16], strides = [1, 1]} : vector<9x96xf32> to vector<9x16xf32>
    %90 = vector.extract_strided_slice %66 {offsets = [0, 80], sizes = [9, 16], strides = [1, 1]} : vector<9x96xf32> to vector<9x16xf32>
    %91 = arith.truncf %88 : vector<9x16xf32> to vector<9x16xbf16>
    %92 = arith.truncf %89 : vector<9x16xf32> to vector<9x16xbf16>
    %cst_38 = arith.constant dense<0.000000e+00> : vector<9x9xf32>
    %93 = tpu.matmul %91, %92, %cst_38 {dimension_numbers = #tpu.dot_dimension_numbers<[1], [1], [0], [0], [0, 0, 1, 0], [], []>} : vector<9x16xbf16>, vector<9x16xbf16>, vector<9x9xf32> -> vector<9x9xf32>
    %cst_39 = arith.constant 2.500000e-01 : f32
    %94 = vector.broadcast %cst_39 : f32 to vector<9x9xf32>
    %95 = arith.mulf %93, %94 : vector<9x9xf32>
    %cst_40 = arith.constant dense<0xFF800000> : vector<9xf32>
    %96 = vector.multi_reduction <maximumf>, %95, %cst_40 [1] : vector<9x9xf32> to vector<9xf32>
    %97 = vector.shape_cast %96 : vector<9xf32> to vector<9x1xf32>
    %98 = vector.broadcast %97 : vector<9x1xf32> to vector<9x9xf32>
    %99 = arith.subf %95, %98 : vector<9x9xf32>
    %100 = math.exp %99 : vector<9x9xf32>
    %cst_41 = arith.constant dense<0.000000e+00> : vector<9xf32>
    %101 = vector.multi_reduction <add>, %100, %cst_41 [1] : vector<9x9xf32> to vector<9xf32>
    %102 = vector.shape_cast %101 : vector<9xf32> to vector<9x1xf32>
    %103 = tpu.reciprocal %102 {approx = true} : vector<9x1xf32> -> vector<9x1xf32>
    %104 = vector.broadcast %103 : vector<9x1xf32> to vector<9x9xf32>
    %105 = arith.mulf %100, %104 : vector<9x9xf32>
    %106 = arith.truncf %105 : vector<9x9xf32> to vector<9x9xbf16>
    %107 = arith.truncf %90 : vector<9x16xf32> to vector<9x16xbf16>
    %cst_42 = arith.constant dense<0.000000e+00> : vector<9x16xf32>
    %108 = tpu.matmul %106, %107, %cst_42 {dimension_numbers = #tpu.dot_dimension_numbers<[1], [0], [0], [1], [0, 0, 1, 1], [], []>} : vector<9x9xbf16>, vector<9x16xbf16>, vector<9x16xf32> -> vector<9x16xf32>
    %109 = tpu.concatenate %87, %108 in 1 : vector<9x16xf32>, vector<9x16xf32> -> vector<9x32xf32>
    %c0_43 = arith.constant 0 : index
    %c0_44 = arith.constant 0 : index
    %c0_45 = arith.constant 0 : index
    %110 = vector.load %arg14[%c0_43, %c0_44, %c0_45] : memref<2x32x32xf32, #tpu.memory_space<vmem>>, vector<1x32x32xf32>
    %111 = vector.shape_cast %110 : vector<1x32x32xf32> to vector<32x32xf32>
    %112 = arith.truncf %109 : vector<9x32xf32> to vector<9x32xbf16>
    %113 = arith.truncf %111 : vector<32x32xf32> to vector<32x32xbf16>
    %cst_46 = arith.constant dense<0.000000e+00> : vector<9x32xf32>
    %114 = tpu.matmul %112, %113, %cst_46 {dimension_numbers = #tpu.dot_dimension_numbers<[1], [0], [0], [1], [0, 0, 1, 1], [], []>} : vector<9x32xbf16>, vector<32x32xbf16>, vector<9x32xf32> -> vector<9x32xf32>
    %115 = arith.addf %31, %114 : vector<9x32xf32>
    %c0_47 = arith.constant 0 : index
    %c0_48 = arith.constant 0 : index
    %c0_49 = arith.constant 0 : index
    %116 = vector.load %arg15[%c0_47, %c0_48, %c0_49] : memref<2x1x32xf32, #tpu.memory_space<vmem>>, vector<1x1x32xf32>
    %117 = vector.shape_cast %116 : vector<1x1x32xf32> to vector<1x32xf32>
    %118 = vector.broadcast %117 : vector<1x32xf32> to vector<9x32xf32>
    %119 = arith.addf %115, %118 : vector<9x32xf32>
    %c0_50 = arith.constant 0 : index
    %c0_51 = arith.constant 0 : index
    %c0_52 = arith.constant 0 : index
    %120 = vector.load %arg10[%c0_50, %c0_51, %c0_52] : memref<2x1x32xf32, #tpu.memory_space<vmem>>, vector<1x1x32xf32>
    %121 = vector.shape_cast %120 : vector<1x1x32xf32> to vector<1x32xf32>
    %c0_53 = arith.constant 0 : index
    %c0_54 = arith.constant 0 : index
    %c0_55 = arith.constant 0 : index
    %122 = vector.load %arg11[%c0_53, %c0_54, %c0_55] : memref<2x1x32xf32, #tpu.memory_space<vmem>>, vector<1x1x32xf32>
    %123 = vector.shape_cast %122 : vector<1x1x32xf32> to vector<1x32xf32>
    %cst_56 = arith.constant dense<0.000000e+00> : vector<9xf32>
    %124 = vector.multi_reduction <add>, %119, %cst_56 [1] : vector<9x32xf32> to vector<9xf32>
    %125 = vector.shape_cast %124 : vector<9xf32> to vector<9x1xf32>
    %cst_57 = arith.constant 3.200000e+01 : f32
    %126 = vector.broadcast %cst_57 : f32 to vector<9x1xf32>
    %127 = arith.divf %125, %126 : vector<9x1xf32>
    %128 = vector.broadcast %127 : vector<9x1xf32> to vector<9x32xf32>
    %129 = arith.subf %119, %128 : vector<9x32xf32>
    %130 = arith.mulf %129, %129 : vector<9x32xf32>
    %cst_58 = arith.constant dense<0.000000e+00> : vector<9xf32>
    %131 = vector.multi_reduction <add>, %130, %cst_58 [1] : vector<9x32xf32> to vector<9xf32>
    %132 = vector.shape_cast %131 : vector<9xf32> to vector<9x1xf32>
    %cst_59 = arith.constant 3.200000e+01 : f32
    %133 = vector.broadcast %cst_59 : f32 to vector<9x1xf32>
    %134 = arith.divf %132, %133 : vector<9x1xf32>
    %135 = vector.broadcast %127 : vector<9x1xf32> to vector<9x32xf32>
    %136 = arith.subf %119, %135 : vector<9x32xf32>
    %cst_60 = arith.constant 9.99999974E-6 : f32
    %137 = vector.broadcast %cst_60 : f32 to vector<9x1xf32>
    %138 = arith.addf %134, %137 : vector<9x1xf32>
    %139 = math.rsqrt %138 : vector<9x1xf32>
    %140 = vector.broadcast %139 : vector<9x1xf32> to vector<9x32xf32>
    %141 = arith.mulf %136, %140 : vector<9x32xf32>
    %142 = vector.broadcast %121 : vector<1x32xf32> to vector<9x32xf32>
    %143 = arith.mulf %141, %142 : vector<9x32xf32>
    %144 = vector.broadcast %123 : vector<1x32xf32> to vector<9x32xf32>
    %145 = arith.addf %143, %144 : vector<9x32xf32>
    %c0_61 = arith.constant 0 : index
    %c0_62 = arith.constant 0 : index
    %c0_63 = arith.constant 0 : index
    %146 = vector.load %arg16[%c0_61, %c0_62, %c0_63] : memref<2x32x128xf32, #tpu.memory_space<vmem>>, vector<1x32x128xf32>
    %147 = vector.shape_cast %146 : vector<1x32x128xf32> to vector<32x128xf32>
    %148 = arith.truncf %145 : vector<9x32xf32> to vector<9x32xbf16>
    %149 = arith.truncf %147 : vector<32x128xf32> to vector<32x128xbf16>
    %cst_64 = arith.constant dense<0.000000e+00> : vector<9x128xf32>
    %150 = tpu.matmul %148, %149, %cst_64 {dimension_numbers = #tpu.dot_dimension_numbers<[1], [0], [0], [1], [0, 0, 1, 1], [], []>} : vector<9x32xbf16>, vector<32x128xbf16>, vector<9x128xf32> -> vector<9x128xf32>
    %c0_65 = arith.constant 0 : index
    %c0_66 = arith.constant 0 : index
    %c0_67 = arith.constant 0 : index
    %151 = vector.load %arg17[%c0_65, %c0_66, %c0_67] : memref<2x1x128xf32, #tpu.memory_space<vmem>>, vector<1x1x128xf32>
    %152 = vector.shape_cast %151 : vector<1x1x128xf32> to vector<1x128xf32>
    %153 = vector.broadcast %152 : vector<1x128xf32> to vector<9x128xf32>
    %154 = arith.addf %150, %153 : vector<9x128xf32>
    %cst_68 = arith.constant 1.702000e+00 : f32
    %155 = vector.broadcast %cst_68 : f32 to vector<9x128xf32>
    %156 = arith.mulf %155, %154 : vector<9x128xf32>
    %157 = arith.negf %156 : vector<9x128xf32>
    %158 = math.exp %157 : vector<9x128xf32>
    %cst_69 = arith.constant 1.000000e+00 : f32
    %159 = vector.broadcast %cst_69 : f32 to vector<9x128xf32>
    %160 = arith.addf %159, %158 : vector<9x128xf32>
    %161 = arith.divf %159, %160 : vector<9x128xf32>
    %162 = arith.mulf %154, %161 : vector<9x128xf32>
    %c0_70 = arith.constant 0 : index
    %c0_71 = arith.constant 0 : index
    %c0_72 = arith.constant 0 : index
    %163 = vector.load %arg18[%c0_70, %c0_71, %c0_72] : memref<2x128x32xf32, #tpu.memory_space<vmem>>, vector<1x128x32xf32>
    %164 = vector.shape_cast %163 : vector<1x128x32xf32> to vector<128x32xf32>
    %165 = arith.truncf %162 : vector<9x128xf32> to vector<9x128xbf16>
    %166 = arith.truncf %164 : vector<128x32xf32> to vector<128x32xbf16>
    %cst_73 = arith.constant dense<0.000000e+00> : vector<9x32xf32>
    %167 = tpu.matmul %165, %166, %cst_73 {dimension_numbers = #tpu.dot_dimension_numbers<[1], [0], [0], [1], [0, 0, 1, 1], [], []>} : vector<9x128xbf16>, vector<128x32xbf16>, vector<9x32xf32> -> vector<9x32xf32>
    %168 = arith.addf %119, %167 : vector<9x32xf32>
    %c0_74 = arith.constant 0 : index
    %c0_75 = arith.constant 0 : index
    %c0_76 = arith.constant 0 : index
    %169 = vector.load %arg19[%c0_74, %c0_75, %c0_76] : memref<2x1x32xf32, #tpu.memory_space<vmem>>, vector<1x1x32xf32>
    %170 = vector.shape_cast %169 : vector<1x1x32xf32> to vector<1x32xf32>
    %171 = vector.broadcast %170 : vector<1x32xf32> to vector<9x32xf32>
    %172 = arith.addf %168, %171 : vector<9x32xf32>
    %c0_77 = arith.constant 0 : index
    %c0_78 = arith.constant 0 : index
    %173 = vector.load %arg5[%c0_77, %c0_78] : memref<9x1xf32, #tpu.memory_space<vmem>>, vector<9x1xf32>
    %174 = vector.broadcast %173 : vector<9x1xf32> to vector<9x32xf32>
    %175 = arith.mulf %172, %174 : vector<9x32xf32>
    %c1 = arith.constant 1 : index
    %c0_79 = arith.constant 0 : index
    %c0_80 = arith.constant 0 : index
    %176 = vector.load %arg4[%c1, %c0_79, %c0_80] : memref<2x9x32xf32, #tpu.memory_space<vmem>>, vector<1x9x32xf32>
    %177 = vector.shape_cast %176 : vector<1x9x32xf32> to vector<9x32xf32>
    %178 = arith.addf %175, %177 : vector<9x32xf32>
    %c1_81 = arith.constant 1 : index
    %c0_82 = arith.constant 0 : index
    %c0_83 = arith.constant 0 : index
    %179 = vector.load %arg8[%c1_81, %c0_82, %c0_83] : memref<2x1x32xf32, #tpu.memory_space<vmem>>, vector<1x1x32xf32>
    %180 = vector.shape_cast %179 : vector<1x1x32xf32> to vector<1x32xf32>
    %c1_84 = arith.constant 1 : index
    %c0_85 = arith.constant 0 : index
    %c0_86 = arith.constant 0 : index
    %181 = vector.load %arg9[%c1_84, %c0_85, %c0_86] : memref<2x1x32xf32, #tpu.memory_space<vmem>>, vector<1x1x32xf32>
    %182 = vector.shape_cast %181 : vector<1x1x32xf32> to vector<1x32xf32>
    %cst_87 = arith.constant dense<0.000000e+00> : vector<9xf32>
    %183 = vector.multi_reduction <add>, %178, %cst_87 [1] : vector<9x32xf32> to vector<9xf32>
    %184 = vector.shape_cast %183 : vector<9xf32> to vector<9x1xf32>
    %cst_88 = arith.constant 3.200000e+01 : f32
    %185 = vector.broadcast %cst_88 : f32 to vector<9x1xf32>
    %186 = arith.divf %184, %185 : vector<9x1xf32>
    %187 = vector.broadcast %186 : vector<9x1xf32> to vector<9x32xf32>
    %188 = arith.subf %178, %187 : vector<9x32xf32>
    %189 = arith.mulf %188, %188 : vector<9x32xf32>
    %cst_89 = arith.constant dense<0.000000e+00> : vector<9xf32>
    %190 = vector.multi_reduction <add>, %189, %cst_89 [1] : vector<9x32xf32> to vector<9xf32>
    %191 = vector.shape_cast %190 : vector<9xf32> to vector<9x1xf32>
    %cst_90 = arith.constant 3.200000e+01 : f32
    %192 = vector.broadcast %cst_90 : f32 to vector<9x1xf32>
    %193 = arith.divf %191, %192 : vector<9x1xf32>
    %194 = vector.broadcast %186 : vector<9x1xf32> to vector<9x32xf32>
    %195 = arith.subf %178, %194 : vector<9x32xf32>
    %cst_91 = arith.constant 9.99999974E-6 : f32
    %196 = vector.broadcast %cst_91 : f32 to vector<9x1xf32>
    %197 = arith.addf %193, %196 : vector<9x1xf32>
    %198 = math.rsqrt %197 : vector<9x1xf32>
    %199 = vector.broadcast %198 : vector<9x1xf32> to vector<9x32xf32>
    %200 = arith.mulf %195, %199 : vector<9x32xf32>
    %201 = vector.broadcast %180 : vector<1x32xf32> to vector<9x32xf32>
    %202 = arith.mulf %200, %201 : vector<9x32xf32>
    %203 = vector.broadcast %182 : vector<1x32xf32> to vector<9x32xf32>
    %204 = arith.addf %202, %203 : vector<9x32xf32>
    %c1_92 = arith.constant 1 : index
    %c0_93 = arith.constant 0 : index
    %c0_94 = arith.constant 0 : index
    %205 = vector.load %arg12[%c1_92, %c0_93, %c0_94] : memref<2x32x96xf32, #tpu.memory_space<vmem>>, vector<1x32x96xf32>
    %206 = vector.shape_cast %205 : vector<1x32x96xf32> to vector<32x96xf32>
    %207 = arith.truncf %204 : vector<9x32xf32> to vector<9x32xbf16>
    %208 = arith.truncf %206 : vector<32x96xf32> to vector<32x96xbf16>
    %cst_95 = arith.constant dense<0.000000e+00> : vector<9x96xf32>
    %209 = tpu.matmul %207, %208, %cst_95 {dimension_numbers = #tpu.dot_dimension_numbers<[1], [0], [0], [1], [0, 0, 1, 1], [], []>} : vector<9x32xbf16>, vector<32x96xbf16>, vector<9x96xf32> -> vector<9x96xf32>
    %c1_96 = arith.constant 1 : index
    %c0_97 = arith.constant 0 : index
    %c0_98 = arith.constant 0 : index
    %210 = vector.load %arg13[%c1_96, %c0_97, %c0_98] : memref<2x1x96xf32, #tpu.memory_space<vmem>>, vector<1x1x96xf32>
    %211 = vector.shape_cast %210 : vector<1x1x96xf32> to vector<1x96xf32>
    %212 = vector.broadcast %211 : vector<1x96xf32> to vector<9x96xf32>
    %213 = arith.addf %209, %212 : vector<9x96xf32>
    %214 = vector.extract_strided_slice %213 {offsets = [0, 0], sizes = [9, 16], strides = [1, 1]} : vector<9x96xf32> to vector<9x16xf32>
    %215 = vector.extract_strided_slice %213 {offsets = [0, 32], sizes = [9, 16], strides = [1, 1]} : vector<9x96xf32> to vector<9x16xf32>
    %216 = vector.extract_strided_slice %213 {offsets = [0, 64], sizes = [9, 16], strides = [1, 1]} : vector<9x96xf32> to vector<9x16xf32>
    %217 = arith.truncf %214 : vector<9x16xf32> to vector<9x16xbf16>
    %218 = arith.truncf %215 : vector<9x16xf32> to vector<9x16xbf16>
    %cst_99 = arith.constant dense<0.000000e+00> : vector<9x9xf32>
    %219 = tpu.matmul %217, %218, %cst_99 {dimension_numbers = #tpu.dot_dimension_numbers<[1], [1], [0], [0], [0, 0, 1, 0], [], []>} : vector<9x16xbf16>, vector<9x16xbf16>, vector<9x9xf32> -> vector<9x9xf32>
    %cst_100 = arith.constant 2.500000e-01 : f32
    %220 = vector.broadcast %cst_100 : f32 to vector<9x9xf32>
    %221 = arith.mulf %219, %220 : vector<9x9xf32>
    %cst_101 = arith.constant dense<0xFF800000> : vector<9xf32>
    %222 = vector.multi_reduction <maximumf>, %221, %cst_101 [1] : vector<9x9xf32> to vector<9xf32>
    %223 = vector.shape_cast %222 : vector<9xf32> to vector<9x1xf32>
    %224 = vector.broadcast %223 : vector<9x1xf32> to vector<9x9xf32>
    %225 = arith.subf %221, %224 : vector<9x9xf32>
    %226 = math.exp %225 : vector<9x9xf32>
    %cst_102 = arith.constant dense<0.000000e+00> : vector<9xf32>
    %227 = vector.multi_reduction <add>, %226, %cst_102 [1] : vector<9x9xf32> to vector<9xf32>
    %228 = vector.shape_cast %227 : vector<9xf32> to vector<9x1xf32>
    %229 = tpu.reciprocal %228 {approx = true} : vector<9x1xf32> -> vector<9x1xf32>
    %230 = vector.broadcast %229 : vector<9x1xf32> to vector<9x9xf32>
    %231 = arith.mulf %226, %230 : vector<9x9xf32>
    %232 = arith.truncf %231 : vector<9x9xf32> to vector<9x9xbf16>
    %233 = arith.truncf %216 : vector<9x16xf32> to vector<9x16xbf16>
    %cst_103 = arith.constant dense<0.000000e+00> : vector<9x16xf32>
    %234 = tpu.matmul %232, %233, %cst_103 {dimension_numbers = #tpu.dot_dimension_numbers<[1], [0], [0], [1], [0, 0, 1, 1], [], []>} : vector<9x9xbf16>, vector<9x16xbf16>, vector<9x16xf32> -> vector<9x16xf32>
    %235 = vector.extract_strided_slice %213 {offsets = [0, 16], sizes = [9, 16], strides = [1, 1]} : vector<9x96xf32> to vector<9x16xf32>
    %236 = vector.extract_strided_slice %213 {offsets = [0, 48], sizes = [9, 16], strides = [1, 1]} : vector<9x96xf32> to vector<9x16xf32>
    %237 = vector.extract_strided_slice %213 {offsets = [0, 80], sizes = [9, 16], strides = [1, 1]} : vector<9x96xf32> to vector<9x16xf32>
    %238 = arith.truncf %235 : vector<9x16xf32> to vector<9x16xbf16>
    %239 = arith.truncf %236 : vector<9x16xf32> to vector<9x16xbf16>
    %cst_104 = arith.constant dense<0.000000e+00> : vector<9x9xf32>
    %240 = tpu.matmul %238, %239, %cst_104 {dimension_numbers = #tpu.dot_dimension_numbers<[1], [1], [0], [0], [0, 0, 1, 0], [], []>} : vector<9x16xbf16>, vector<9x16xbf16>, vector<9x9xf32> -> vector<9x9xf32>
    %cst_105 = arith.constant 2.500000e-01 : f32
    %241 = vector.broadcast %cst_105 : f32 to vector<9x9xf32>
    %242 = arith.mulf %240, %241 : vector<9x9xf32>
    %cst_106 = arith.constant dense<0xFF800000> : vector<9xf32>
    %243 = vector.multi_reduction <maximumf>, %242, %cst_106 [1] : vector<9x9xf32> to vector<9xf32>
    %244 = vector.shape_cast %243 : vector<9xf32> to vector<9x1xf32>
    %245 = vector.broadcast %244 : vector<9x1xf32> to vector<9x9xf32>
    %246 = arith.subf %242, %245 : vector<9x9xf32>
    %247 = math.exp %246 : vector<9x9xf32>
    %cst_107 = arith.constant dense<0.000000e+00> : vector<9xf32>
    %248 = vector.multi_reduction <add>, %247, %cst_107 [1] : vector<9x9xf32> to vector<9xf32>
    %249 = vector.shape_cast %248 : vector<9xf32> to vector<9x1xf32>
    %250 = tpu.reciprocal %249 {approx = true} : vector<9x1xf32> -> vector<9x1xf32>
    %251 = vector.broadcast %250 : vector<9x1xf32> to vector<9x9xf32>
    %252 = arith.mulf %247, %251 : vector<9x9xf32>
    %253 = arith.truncf %252 : vector<9x9xf32> to vector<9x9xbf16>
    %254 = arith.truncf %237 : vector<9x16xf32> to vector<9x16xbf16>
    %cst_108 = arith.constant dense<0.000000e+00> : vector<9x16xf32>
    %255 = tpu.matmul %253, %254, %cst_108 {dimension_numbers = #tpu.dot_dimension_numbers<[1], [0], [0], [1], [0, 0, 1, 1], [], []>} : vector<9x9xbf16>, vector<9x16xbf16>, vector<9x16xf32> -> vector<9x16xf32>
    %256 = tpu.concatenate %234, %255 in 1 : vector<9x16xf32>, vector<9x16xf32> -> vector<9x32xf32>
    %c1_109 = arith.constant 1 : index
    %c0_110 = arith.constant 0 : index
    %c0_111 = arith.constant 0 : index
    %257 = vector.load %arg14[%c1_109, %c0_110, %c0_111] : memref<2x32x32xf32, #tpu.memory_space<vmem>>, vector<1x32x32xf32>
    %258 = vector.shape_cast %257 : vector<1x32x32xf32> to vector<32x32xf32>
    %259 = arith.truncf %256 : vector<9x32xf32> to vector<9x32xbf16>
    %260 = arith.truncf %258 : vector<32x32xf32> to vector<32x32xbf16>
    %cst_112 = arith.constant dense<0.000000e+00> : vector<9x32xf32>
    %261 = tpu.matmul %259, %260, %cst_112 {dimension_numbers = #tpu.dot_dimension_numbers<[1], [0], [0], [1], [0, 0, 1, 1], [], []>} : vector<9x32xbf16>, vector<32x32xbf16>, vector<9x32xf32> -> vector<9x32xf32>
    %262 = arith.addf %178, %261 : vector<9x32xf32>
    %c1_113 = arith.constant 1 : index
    %c0_114 = arith.constant 0 : index
    %c0_115 = arith.constant 0 : index
    %263 = vector.load %arg15[%c1_113, %c0_114, %c0_115] : memref<2x1x32xf32, #tpu.memory_space<vmem>>, vector<1x1x32xf32>
    %264 = vector.shape_cast %263 : vector<1x1x32xf32> to vector<1x32xf32>
    %265 = vector.broadcast %264 : vector<1x32xf32> to vector<9x32xf32>
    %266 = arith.addf %262, %265 : vector<9x32xf32>
    %c1_116 = arith.constant 1 : index
    %c0_117 = arith.constant 0 : index
    %c0_118 = arith.constant 0 : index
    %267 = vector.load %arg10[%c1_116, %c0_117, %c0_118] : memref<2x1x32xf32, #tpu.memory_space<vmem>>, vector<1x1x32xf32>
    %268 = vector.shape_cast %267 : vector<1x1x32xf32> to vector<1x32xf32>
    %c1_119 = arith.constant 1 : index
    %c0_120 = arith.constant 0 : index
    %c0_121 = arith.constant 0 : index
    %269 = vector.load %arg11[%c1_119, %c0_120, %c0_121] : memref<2x1x32xf32, #tpu.memory_space<vmem>>, vector<1x1x32xf32>
    %270 = vector.shape_cast %269 : vector<1x1x32xf32> to vector<1x32xf32>
    %cst_122 = arith.constant dense<0.000000e+00> : vector<9xf32>
    %271 = vector.multi_reduction <add>, %266, %cst_122 [1] : vector<9x32xf32> to vector<9xf32>
    %272 = vector.shape_cast %271 : vector<9xf32> to vector<9x1xf32>
    %cst_123 = arith.constant 3.200000e+01 : f32
    %273 = vector.broadcast %cst_123 : f32 to vector<9x1xf32>
    %274 = arith.divf %272, %273 : vector<9x1xf32>
    %275 = vector.broadcast %274 : vector<9x1xf32> to vector<9x32xf32>
    %276 = arith.subf %266, %275 : vector<9x32xf32>
    %277 = arith.mulf %276, %276 : vector<9x32xf32>
    %cst_124 = arith.constant dense<0.000000e+00> : vector<9xf32>
    %278 = vector.multi_reduction <add>, %277, %cst_124 [1] : vector<9x32xf32> to vector<9xf32>
    %279 = vector.shape_cast %278 : vector<9xf32> to vector<9x1xf32>
    %cst_125 = arith.constant 3.200000e+01 : f32
    %280 = vector.broadcast %cst_125 : f32 to vector<9x1xf32>
    %281 = arith.divf %279, %280 : vector<9x1xf32>
    %282 = vector.broadcast %274 : vector<9x1xf32> to vector<9x32xf32>
    %283 = arith.subf %266, %282 : vector<9x32xf32>
    %cst_126 = arith.constant 9.99999974E-6 : f32
    %284 = vector.broadcast %cst_126 : f32 to vector<9x1xf32>
    %285 = arith.addf %281, %284 : vector<9x1xf32>
    %286 = math.rsqrt %285 : vector<9x1xf32>
    %287 = vector.broadcast %286 : vector<9x1xf32> to vector<9x32xf32>
    %288 = arith.mulf %283, %287 : vector<9x32xf32>
    %289 = vector.broadcast %268 : vector<1x32xf32> to vector<9x32xf32>
    %290 = arith.mulf %288, %289 : vector<9x32xf32>
    %291 = vector.broadcast %270 : vector<1x32xf32> to vector<9x32xf32>
    %292 = arith.addf %290, %291 : vector<9x32xf32>
    %c1_127 = arith.constant 1 : index
    %c0_128 = arith.constant 0 : index
    %c0_129 = arith.constant 0 : index
    %293 = vector.load %arg16[%c1_127, %c0_128, %c0_129] : memref<2x32x128xf32, #tpu.memory_space<vmem>>, vector<1x32x128xf32>
    %294 = vector.shape_cast %293 : vector<1x32x128xf32> to vector<32x128xf32>
    %295 = arith.truncf %292 : vector<9x32xf32> to vector<9x32xbf16>
    %296 = arith.truncf %294 : vector<32x128xf32> to vector<32x128xbf16>
    %cst_130 = arith.constant dense<0.000000e+00> : vector<9x128xf32>
    %297 = tpu.matmul %295, %296, %cst_130 {dimension_numbers = #tpu.dot_dimension_numbers<[1], [0], [0], [1], [0, 0, 1, 1], [], []>} : vector<9x32xbf16>, vector<32x128xbf16>, vector<9x128xf32> -> vector<9x128xf32>
    %c1_131 = arith.constant 1 : index
    %c0_132 = arith.constant 0 : index
    %c0_133 = arith.constant 0 : index
    %298 = vector.load %arg17[%c1_131, %c0_132, %c0_133] : memref<2x1x128xf32, #tpu.memory_space<vmem>>, vector<1x1x128xf32>
    %299 = vector.shape_cast %298 : vector<1x1x128xf32> to vector<1x128xf32>
    %300 = vector.broadcast %299 : vector<1x128xf32> to vector<9x128xf32>
    %301 = arith.addf %297, %300 : vector<9x128xf32>
    %cst_134 = arith.constant 1.702000e+00 : f32
    %302 = vector.broadcast %cst_134 : f32 to vector<9x128xf32>
    %303 = arith.mulf %302, %301 : vector<9x128xf32>
    %304 = arith.negf %303 : vector<9x128xf32>
    %305 = math.exp %304 : vector<9x128xf32>
    %cst_135 = arith.constant 1.000000e+00 : f32
    %306 = vector.broadcast %cst_135 : f32 to vector<9x128xf32>
    %307 = arith.addf %306, %305 : vector<9x128xf32>
    %308 = arith.divf %306, %307 : vector<9x128xf32>
    %309 = arith.mulf %301, %308 : vector<9x128xf32>
    %c1_136 = arith.constant 1 : index
    %c0_137 = arith.constant 0 : index
    %c0_138 = arith.constant 0 : index
    %310 = vector.load %arg18[%c1_136, %c0_137, %c0_138] : memref<2x128x32xf32, #tpu.memory_space<vmem>>, vector<1x128x32xf32>
    %311 = vector.shape_cast %310 : vector<1x128x32xf32> to vector<128x32xf32>
    %312 = arith.truncf %309 : vector<9x128xf32> to vector<9x128xbf16>
    %313 = arith.truncf %311 : vector<128x32xf32> to vector<128x32xbf16>
    %cst_139 = arith.constant dense<0.000000e+00> : vector<9x32xf32>
    %314 = tpu.matmul %312, %313, %cst_139 {dimension_numbers = #tpu.dot_dimension_numbers<[1], [0], [0], [1], [0, 0, 1, 1], [], []>} : vector<9x128xbf16>, vector<128x32xbf16>, vector<9x32xf32> -> vector<9x32xf32>
    %315 = arith.addf %266, %314 : vector<9x32xf32>
    %c1_140 = arith.constant 1 : index
    %c0_141 = arith.constant 0 : index
    %c0_142 = arith.constant 0 : index
    %316 = vector.load %arg19[%c1_140, %c0_141, %c0_142] : memref<2x1x32xf32, #tpu.memory_space<vmem>>, vector<1x1x32xf32>
    %317 = vector.shape_cast %316 : vector<1x1x32xf32> to vector<1x32xf32>
    %318 = vector.broadcast %317 : vector<1x32xf32> to vector<9x32xf32>
    %319 = arith.addf %315, %318 : vector<9x32xf32>
    %320 = vector.extract_strided_slice %319 {offsets = [0, 0], sizes = [1, 32], strides = [1, 1]} : vector<9x32xf32> to vector<1x32xf32>
    %c0_143 = arith.constant 0 : index
    %c0_144 = arith.constant 0 : index
    %321 = vector.load %arg20[%c0_143, %c0_144] : memref<1x32xf32, #tpu.memory_space<vmem>>, vector<1x32xf32>
    %c0_145 = arith.constant 0 : index
    %c0_146 = arith.constant 0 : index
    %322 = vector.load %arg21[%c0_145, %c0_146] : memref<1x32xf32, #tpu.memory_space<vmem>>, vector<1x32xf32>
    %cst_147 = arith.constant dense<0.000000e+00> : vector<1xf32>
    %323 = vector.multi_reduction <add>, %320, %cst_147 [1] : vector<1x32xf32> to vector<1xf32>
    %324 = vector.shape_cast %323 : vector<1xf32> to vector<1x1xf32>
    %cst_148 = arith.constant 3.200000e+01 : f32
    %325 = vector.broadcast %cst_148 : f32 to vector<1x1xf32>
    %326 = arith.divf %324, %325 : vector<1x1xf32>
    %327 = vector.broadcast %326 : vector<1x1xf32> to vector<1x32xf32>
    %328 = arith.subf %320, %327 : vector<1x32xf32>
    %329 = arith.mulf %328, %328 : vector<1x32xf32>
    %cst_149 = arith.constant dense<0.000000e+00> : vector<1xf32>
    %330 = vector.multi_reduction <add>, %329, %cst_149 [1] : vector<1x32xf32> to vector<1xf32>
    %331 = vector.shape_cast %330 : vector<1xf32> to vector<1x1xf32>
    %cst_150 = arith.constant 3.200000e+01 : f32
    %332 = vector.broadcast %cst_150 : f32 to vector<1x1xf32>
    %333 = arith.divf %331, %332 : vector<1x1xf32>
    %334 = vector.broadcast %326 : vector<1x1xf32> to vector<1x32xf32>
    %335 = arith.subf %320, %334 : vector<1x32xf32>
    %cst_151 = arith.constant 9.99999974E-6 : f32
    %336 = vector.broadcast %cst_151 : f32 to vector<1x1xf32>
    %337 = arith.addf %333, %336 : vector<1x1xf32>
    %338 = math.rsqrt %337 : vector<1x1xf32>
    %339 = vector.broadcast %338 : vector<1x1xf32> to vector<1x32xf32>
    %340 = arith.mulf %335, %339 : vector<1x32xf32>
    %341 = arith.mulf %340, %321 : vector<1x32xf32>
    %342 = arith.addf %341, %322 : vector<1x32xf32>
    %c0_152 = arith.constant 0 : index
    %c0_153 = arith.constant 0 : index
    %343 = vector.load %arg22[%c0_152, %c0_153] : memref<32x32xf32, #tpu.memory_space<vmem>>, vector<32x32xf32>
    %344 = arith.truncf %342 : vector<1x32xf32> to vector<1x32xbf16>
    %345 = arith.truncf %343 : vector<32x32xf32> to vector<32x32xbf16>
    %cst_154 = arith.constant dense<0.000000e+00> : vector<1x32xf32>
    %346 = tpu.matmul %344, %345, %cst_154 {dimension_numbers = #tpu.dot_dimension_numbers<[1], [0], [0], [1], [0, 0, 1, 1], [], []>} : vector<1x32xbf16>, vector<32x32xbf16>, vector<1x32xf32> -> vector<1x32xf32>
    %347 = arith.mulf %346, %346 : vector<1x32xf32>
    %cst_155 = arith.constant dense<0.000000e+00> : vector<1xf32>
    %348 = vector.multi_reduction <add>, %347, %cst_155 [1] : vector<1x32xf32> to vector<1xf32>
    %349 = vector.shape_cast %348 : vector<1xf32> to vector<1x1xf32>
    %cst_156 = arith.constant 9.99999996E-13 : f32
    %350 = vector.broadcast %cst_156 : f32 to vector<1x1xf32>
    %351 = arith.addf %349, %350 : vector<1x1xf32>
    %352 = math.rsqrt %351 : vector<1x1xf32>
    %353 = vector.broadcast %352 : vector<1x1xf32> to vector<1x32xf32>
    %354 = arith.mulf %346, %353 : vector<1x32xf32>
    %c0_157 = arith.constant 0 : index
    %c0_158 = arith.constant 0 : index
    %c0_159 = arith.constant 0 : index
    %355 = vector.load %arg23[%c0_157, %c0_158, %c0_159] : memref<1x1x32xf32, #tpu.memory_space<vmem>>, vector<1x1x32xf32>
    %356 = vector.shape_cast %355 : vector<1x1x32xf32> to vector<1x32xf32>
    %357 = vector.shape_cast %354 : vector<1x32xf32> to vector<1x1x32xf32>
    tpu.vector_store %arg23[%c0_157, %c0_158, %c0_159], %357 {strides = array<i32>} : memref<1x1x32xf32, #tpu.memory_space<vmem>>, vector<1x1x32xf32>,
    return
  }
  func.func @transform_0(%arg0: i32) -> (i32, i32, i32) {
    %c0_i32 = arith.constant 0 : i32
    %c0_i32_0 = arith.constant 0 : i32
    %c0_i32_1 = arith.constant 0 : i32
    return %arg0, %c0_i32, %c0_i32_0 : i32, i32, i32
  }
  func.func @transform_1(%arg0: i32) -> (i32, i32) {
    %c0_i32 = arith.constant 0 : i32
    %c0_i32_0 = arith.constant 0 : i32
    %c0_i32_1 = arith.constant 0 : i32
    return %c0_i32, %c0_i32_0 : i32, i32
  }
  func.func @transform_2(%arg0: i32) -> (i32, i32) {
    %c0_i32 = arith.constant 0 : i32
    %c0_i32_0 = arith.constant 0 : i32
    %c0_i32_1 = arith.constant 0 : i32
    return %c0_i32, %c0_i32_0 : i32, i32
  }
  func.func @transform_3(%arg0: i32) -> (i32, i32, i32) {
    %c0_i32 = arith.constant 0 : i32
    %c0_i32_0 = arith.constant 0 : i32
    %c0_i32_1 = arith.constant 0 : i32
    %c0_i32_2 = arith.constant 0 : i32
    return %c0_i32, %c0_i32_0, %c0_i32_1 : i32, i32, i32
  }
  func.func @transform_4(%arg0: i32) -> (i32, i32) {
    %c0_i32 = arith.constant 0 : i32
    %c0_i32_0 = arith.constant 0 : i32
    %c0_i32_1 = arith.constant 0 : i32
    return %c0_i32, %c0_i32_0 : i32, i32
  }
  func.func @transform_5(%arg0: i32) -> (i32, i32) {
    %c0_i32 = arith.constant 0 : i32
    %c0_i32_0 = arith.constant 0 : i32
    %c0_i32_1 = arith.constant 0 : i32
    return %c0_i32, %c0_i32_0 : i32, i32
  }
  func.func @transform_6(%arg0: i32) -> (i32, i32) {
    %c0_i32 = arith.constant 0 : i32
    %c0_i32_0 = arith.constant 0 : i32
    %c0_i32_1 = arith.constant 0 : i32
    return %c0_i32, %c0_i32_0 : i32, i32
  }
  func.func @transform_7(%arg0: i32) -> (i32, i32, i32) {
    %c0_i32 = arith.constant 0 : i32
    %c0_i32_0 = arith.constant 0 : i32
    %c0_i32_1 = arith.constant 0 : i32
    %c0_i32_2 = arith.constant 0 : i32
    return %c0_i32, %c0_i32_0, %c0_i32_1 : i32, i32, i32
  }
  func.func @transform_8(%arg0: i32) -> (i32, i32, i32) {
    %c0_i32 = arith.constant 0 : i32
    %c0_i32_0 = arith.constant 0 : i32
    %c0_i32_1 = arith.constant 0 : i32
    %c0_i32_2 = arith.constant 0 : i32
    return %c0_i32, %c0_i32_0, %c0_i32_1 : i32, i32, i32
  }
  func.func @transform_9(%arg0: i32) -> (i32, i32, i32) {
    %c0_i32 = arith.constant 0 : i32
    %c0_i32_0 = arith.constant 0 : i32
    %c0_i32_1 = arith.constant 0 : i32
    %c0_i32_2 = arith.constant 0 : i32
    return %c0_i32, %c0_i32_0, %c0_i32_1 : i32, i32, i32
  }
  func.func @transform_10(%arg0: i32) -> (i32, i32, i32) {
    %c0_i32 = arith.constant 0 : i32
    %c0_i32_0 = arith.constant 0 : i32
    %c0_i32_1 = arith.constant 0 : i32
    %c0_i32_2 = arith.constant 0 : i32
    return %c0_i32, %c0_i32_0, %c0_i32_1 : i32, i32, i32
  }
  func.func @transform_11(%arg0: i32) -> (i32, i32, i32) {
    %c0_i32 = arith.constant 0 : i32
    %c0_i32_0 = arith.constant 0 : i32
    %c0_i32_1 = arith.constant 0 : i32
    %c0_i32_2 = arith.constant 0 : i32
    return %c0_i32, %c0_i32_0, %c0_i32_1 : i32, i32, i32
  }
  func.func @transform_12(%arg0: i32) -> (i32, i32, i32) {
    %c0_i32 = arith.constant 0 : i32
    %c0_i32_0 = arith.constant 0 : i32
    %c0_i32_1 = arith.constant 0 : i32
    %c0_i32_2 = arith.constant 0 : i32
    return %c0_i32, %c0_i32_0, %c0_i32_1 : i32, i32, i32
  }
  func.func @transform_13(%arg0: i32) -> (i32, i32, i32) {
    %c0_i32 = arith.constant 0 : i32
    %c0_i32_0 = arith.constant 0 : i32
    %c0_i32_1 = arith.constant 0 : i32
    %c0_i32_2 = arith.constant 0 : i32
    return %c0_i32, %c0_i32_0, %c0_i32_1 : i32, i32, i32
  }
  func.func @transform_14(%arg0: i32) -> (i32, i32, i32) {
    %c0_i32 = arith.constant 0 : i32
    %c0_i32_0 = arith.constant 0 : i32
    %c0_i32_1 = arith.constant 0 : i32
    %c0_i32_2 = arith.constant 0 : i32
    return %c0_i32, %c0_i32_0, %c0_i32_1 : i32, i32, i32
  }
  func.func @transform_15(%arg0: i32) -> (i32, i32, i32) {
    %c0_i32 = arith.constant 0 : i32
    %c0_i32_0 = arith.constant 0 : i32
    %c0_i32_1 = arith.constant 0 : i32
    %c0_i32_2 = arith.constant 0 : i32
    return %c0_i32, %c0_i32_0, %c0_i32_1 : i32, i32, i32
  }
  func.func @transform_16(%arg0: i32) -> (i32, i32, i32) {
    %c0_i32 = arith.constant 0 : i32
    %c0_i32_0 = arith.constant 0 : i32
    %c0_i32_1 = arith.constant 0 : i32
    %c0_i32_2 = arith.constant 0 : i32
    return %c0_i32, %c0_i32_0, %c0_i32_1 : i32, i32, i32
  }
  func.func @transform_17(%arg0: i32) -> (i32, i32, i32) {
    %c0_i32 = arith.constant 0 : i32
    %c0_i32_0 = arith.constant 0 : i32
    %c0_i32_1 = arith.constant 0 : i32
    %c0_i32_2 = arith.constant 0 : i32
    return %c0_i32, %c0_i32_0, %c0_i32_1 : i32, i32, i32
  }
  func.func @transform_18(%arg0: i32) -> (i32, i32, i32) {
    %c0_i32 = arith.constant 0 : i32
    %c0_i32_0 = arith.constant 0 : i32
    %c0_i32_1 = arith.constant 0 : i32
    %c0_i32_2 = arith.constant 0 : i32
    return %c0_i32, %c0_i32_0, %c0_i32_1 : i32, i32, i32
  }
  func.func @transform_19(%arg0: i32) -> (i32, i32) {
    %c0_i32 = arith.constant 0 : i32
    %c0_i32_0 = arith.constant 0 : i32
    %c0_i32_1 = arith.constant 0 : i32
    return %c0_i32, %c0_i32_0 : i32, i32
  }
  func.func @transform_20(%arg0: i32) -> (i32, i32) {
    %c0_i32 = arith.constant 0 : i32
    %c0_i32_0 = arith.constant 0 : i32
    %c0_i32_1 = arith.constant 0 : i32
    return %c0_i32, %c0_i32_0 : i32, i32
  }
  func.func @transform_21(%arg0: i32) -> (i32, i32) {
    %c0_i32 = arith.constant 0 : i32
    %c0_i32_0 = arith.constant 0 : i32
    %c0_i32_1 = arith.constant 0 : i32
    return %c0_i32, %c0_i32_0 : i32, i32
  }
  func.func @transform_22(%arg0: i32) -> (i32, i32, i32) {
    %c0_i32 = arith.constant 0 : i32
    %c0_i32_0 = arith.constant 0 : i32
    %c0_i32_1 = arith.constant 0 : i32
    return %arg0, %c0_i32, %c0_i32_0 : i32, i32, i32
  }
}

module attributes {stable_mosaic.version = 11 : i64} {
  func.func @_text_logits_kernel(%arg0: i32, %arg1: memref<1x10x32xf32, #tpu.memory_space<vmem>>, %arg2: memref<2x10x32xf32, #tpu.memory_space<vmem>>, %arg3: memref<10x1xf32, #tpu.memory_space<vmem>>, %arg4: memref<1x10x1xf32, #tpu.memory_space<vmem>>, %arg5: memref<2x1x32xf32, #tpu.memory_space<vmem>>, %arg6: memref<2x1x32xf32, #tpu.memory_space<vmem>>, %arg7: memref<2x1x32xf32, #tpu.memory_space<vmem>>, %arg8: memref<2x1x32xf32, #tpu.memory_space<vmem>>, %arg9: memref<2x32x96xf32, #tpu.memory_space<vmem>>, %arg10: memref<2x1x96xf32, #tpu.memory_space<vmem>>, %arg11: memref<2x32x32xf32, #tpu.memory_space<vmem>>, %arg12: memref<2x1x32xf32, #tpu.memory_space<vmem>>, %arg13: memref<2x32x128xf32, #tpu.memory_space<vmem>>, %arg14: memref<2x1x128xf32, #tpu.memory_space<vmem>>, %arg15: memref<2x128x32xf32, #tpu.memory_space<vmem>>, %arg16: memref<2x1x32xf32, #tpu.memory_space<vmem>>, %arg17: memref<1x32xf32, #tpu.memory_space<vmem>>, %arg18: memref<1x32xf32, #tpu.memory_space<vmem>>, %arg19: memref<32x32xf32, #tpu.memory_space<vmem>>, %arg20: memref<2x32xf32, #tpu.memory_space<vmem>>, %arg21: memref<1x1xf32, #tpu.memory_space<vmem>>, %arg22: memref<1x1x2xf32, #tpu.memory_space<vmem>>) attributes {dimension_semantics = [#tpu.dimension_semantics<parallel>], iteration_bounds = array<i64: 4>, scalar_prefetch = 0 : i64, scratch_operands = 0 : i64, tpu.core_type = #tpu.core_type<tc>, window_params = [{transform_indices = @transform_0, window_bounds = array<i64: 1, 10, 32>}, {pipeline_mode = #tpu.pipeline_mode<synchronous>, transform_indices = @transform_1, window_bounds = array<i64: 2, 10, 32>}, {pipeline_mode = #tpu.pipeline_mode<synchronous>, transform_indices = @transform_2, window_bounds = array<i64: 10, 1>}, {transform_indices = @transform_3, window_bounds = array<i64: 1, 10, 1>}, {pipeline_mode = #tpu.pipeline_mode<synchronous>, transform_indices = @transform_4, window_bounds = array<i64: 2, 1, 32>}, {pipeline_mode = #tpu.pipeline_mode<synchronous>, transform_indices = @transform_5, window_bounds = array<i64: 2, 1, 32>}, {pipeline_mode = #tpu.pipeline_mode<synchronous>, transform_indices = @transform_6, window_bounds = array<i64: 2, 1, 32>}, {pipeline_mode = #tpu.pipeline_mode<synchronous>, transform_indices = @transform_7, window_bounds = array<i64: 2, 1, 32>}, {pipeline_mode = #tpu.pipeline_mode<synchronous>, transform_indices = @transform_8, window_bounds = array<i64: 2, 32, 96>}, {pipeline_mode = #tpu.pipeline_mode<synchronous>, transform_indices = @transform_9, window_bounds = array<i64: 2, 1, 96>}, {pipeline_mode = #tpu.pipeline_mode<synchronous>, transform_indices = @transform_10, window_bounds = array<i64: 2, 32, 32>}, {pipeline_mode = #tpu.pipeline_mode<synchronous>, transform_indices = @transform_11, window_bounds = array<i64: 2, 1, 32>}, {pipeline_mode = #tpu.pipeline_mode<synchronous>, transform_indices = @transform_12, window_bounds = array<i64: 2, 32, 128>}, {pipeline_mode = #tpu.pipeline_mode<synchronous>, transform_indices = @transform_13, window_bounds = array<i64: 2, 1, 128>}, {pipeline_mode = #tpu.pipeline_mode<synchronous>, transform_indices = @transform_14, window_bounds = array<i64: 2, 128, 32>}, {pipeline_mode = #tpu.pipeline_mode<synchronous>, transform_indices = @transform_15, window_bounds = array<i64: 2, 1, 32>}, {pipeline_mode = #tpu.pipeline_mode<synchronous>, transform_indices = @transform_16, window_bounds = array<i64: 1, 32>}, {pipeline_mode = #tpu.pipeline_mode<synchronous>, transform_indices = @transform_17, window_bounds = array<i64: 1, 32>}, {pipeline_mode = #tpu.pipeline_mode<synchronous>, transform_indices = @transform_18, window_bounds = array<i64: 32, 32>}, {pipeline_mode = #tpu.pipeline_mode<synchronous>, transform_indices = @transform_19, window_bounds = array<i64: 2, 32>}, {pipeline_mode = #tpu.pipeline_mode<synchronous>, transform_indices = @transform_20, window_bounds = array<i64: 1, 1>}, {transform_indices = @transform_21, window_bounds = array<i64: 1, 1, 2>}]} {
    %c0 = arith.constant 0 : index
    %c0_0 = arith.constant 0 : index
    %c0_1 = arith.constant 0 : index
    %0 = vector.load %arg1[%c0, %c0_0, %c0_1] : memref<1x10x32xf32, #tpu.memory_space<vmem>>, vector<1x10x32xf32>
    %1 = vector.shape_cast %0 : vector<1x10x32xf32> to vector<10x32xf32>
    %2 = tpu.iota {dimensions = array<i32: 0>} : vector<10x10xi32>
    %3 = tpu.iota {dimensions = array<i32: 1>} : vector<10x10xi32>
    %4 = arith.cmpi sge, %2, %3 : vector<10x10xi32>
    %cst = arith.constant 0.000000e+00 : f32
    %cst_2 = arith.constant -1.000000e+09 : f32
    %5 = vector.broadcast %cst : f32 to vector<10x10xf32>
    %6 = vector.broadcast %cst_2 : f32 to vector<10x10xf32>
    %7 = arith.select %4, %5, %6 : vector<10x10xi1>, vector<10x10xf32>
    %c0_3 = arith.constant 0 : index
    %c0_4 = arith.constant 0 : index
    %c0_5 = arith.constant 0 : index
    %8 = vector.load %arg5[%c0_3, %c0_4, %c0_5] : memref<2x1x32xf32, #tpu.memory_space<vmem>>, vector<1x1x32xf32>
    %9 = vector.shape_cast %8 : vector<1x1x32xf32> to vector<1x32xf32>
    %c0_6 = arith.constant 0 : index
    %c0_7 = arith.constant 0 : index
    %c0_8 = arith.constant 0 : index
    %10 = vector.load %arg6[%c0_6, %c0_7, %c0_8] : memref<2x1x32xf32, #tpu.memory_space<vmem>>, vector<1x1x32xf32>
    %11 = vector.shape_cast %10 : vector<1x1x32xf32> to vector<1x32xf32>
    %cst_9 = arith.constant dense<0.000000e+00> : vector<10xf32>
    %12 = vector.multi_reduction <add>, %1, %cst_9 [1] : vector<10x32xf32> to vector<10xf32>
    %13 = vector.shape_cast %12 : vector<10xf32> to vector<10x1xf32>
    %cst_10 = arith.constant 3.200000e+01 : f32
    %14 = vector.broadcast %cst_10 : f32 to vector<10x1xf32>
    %15 = arith.divf %13, %14 : vector<10x1xf32>
    %16 = vector.broadcast %15 : vector<10x1xf32> to vector<10x32xf32>
    %17 = arith.subf %1, %16 : vector<10x32xf32>
    %18 = arith.mulf %17, %17 : vector<10x32xf32>
    %cst_11 = arith.constant dense<0.000000e+00> : vector<10xf32>
    %19 = vector.multi_reduction <add>, %18, %cst_11 [1] : vector<10x32xf32> to vector<10xf32>
    %20 = vector.shape_cast %19 : vector<10xf32> to vector<10x1xf32>
    %cst_12 = arith.constant 3.200000e+01 : f32
    %21 = vector.broadcast %cst_12 : f32 to vector<10x1xf32>
    %22 = arith.divf %20, %21 : vector<10x1xf32>
    %23 = vector.broadcast %15 : vector<10x1xf32> to vector<10x32xf32>
    %24 = arith.subf %1, %23 : vector<10x32xf32>
    %cst_13 = arith.constant 9.99999974E-6 : f32
    %25 = vector.broadcast %cst_13 : f32 to vector<10x1xf32>
    %26 = arith.addf %22, %25 : vector<10x1xf32>
    %27 = math.rsqrt %26 : vector<10x1xf32>
    %28 = vector.broadcast %27 : vector<10x1xf32> to vector<10x32xf32>
    %29 = arith.mulf %24, %28 : vector<10x32xf32>
    %30 = vector.broadcast %9 : vector<1x32xf32> to vector<10x32xf32>
    %31 = arith.mulf %29, %30 : vector<10x32xf32>
    %32 = vector.broadcast %11 : vector<1x32xf32> to vector<10x32xf32>
    %33 = arith.addf %31, %32 : vector<10x32xf32>
    %c0_14 = arith.constant 0 : index
    %c0_15 = arith.constant 0 : index
    %c0_16 = arith.constant 0 : index
    %34 = vector.load %arg9[%c0_14, %c0_15, %c0_16] : memref<2x32x96xf32, #tpu.memory_space<vmem>>, vector<1x32x96xf32>
    %35 = vector.shape_cast %34 : vector<1x32x96xf32> to vector<32x96xf32>
    %36 = arith.truncf %33 : vector<10x32xf32> to vector<10x32xbf16>
    %37 = arith.truncf %35 : vector<32x96xf32> to vector<32x96xbf16>
    %cst_17 = arith.constant dense<0.000000e+00> : vector<10x96xf32>
    %38 = tpu.matmul %36, %37, %cst_17 {dimension_numbers = #tpu.dot_dimension_numbers<[1], [0], [0], [1], [0, 0, 1, 1], [], []>} : vector<10x32xbf16>, vector<32x96xbf16>, vector<10x96xf32> -> vector<10x96xf32>
    %c0_18 = arith.constant 0 : index
    %c0_19 = arith.constant 0 : index
    %c0_20 = arith.constant 0 : index
    %39 = vector.load %arg10[%c0_18, %c0_19, %c0_20] : memref<2x1x96xf32, #tpu.memory_space<vmem>>, vector<1x1x96xf32>
    %40 = vector.shape_cast %39 : vector<1x1x96xf32> to vector<1x96xf32>
    %41 = vector.broadcast %40 : vector<1x96xf32> to vector<10x96xf32>
    %42 = arith.addf %38, %41 : vector<10x96xf32>
    %43 = vector.extract_strided_slice %42 {offsets = [0, 0], sizes = [10, 16], strides = [1, 1]} : vector<10x96xf32> to vector<10x16xf32>
    %44 = vector.extract_strided_slice %42 {offsets = [0, 32], sizes = [10, 16], strides = [1, 1]} : vector<10x96xf32> to vector<10x16xf32>
    %45 = vector.extract_strided_slice %42 {offsets = [0, 64], sizes = [10, 16], strides = [1, 1]} : vector<10x96xf32> to vector<10x16xf32>
    %46 = arith.truncf %43 : vector<10x16xf32> to vector<10x16xbf16>
    %47 = arith.truncf %44 : vector<10x16xf32> to vector<10x16xbf16>
    %cst_21 = arith.constant dense<0.000000e+00> : vector<10x10xf32>
    %48 = tpu.matmul %46, %47, %cst_21 {dimension_numbers = #tpu.dot_dimension_numbers<[1], [1], [0], [0], [0, 0, 1, 0], [], []>} : vector<10x16xbf16>, vector<10x16xbf16>, vector<10x10xf32> -> vector<10x10xf32>
    %cst_22 = arith.constant 2.500000e-01 : f32
    %49 = vector.broadcast %cst_22 : f32 to vector<10x10xf32>
    %50 = arith.mulf %48, %49 : vector<10x10xf32>
    %51 = arith.addf %50, %7 : vector<10x10xf32>
    %cst_23 = arith.constant dense<0xFF800000> : vector<10xf32>
    %52 = vector.multi_reduction <maximumf>, %51, %cst_23 [1] : vector<10x10xf32> to vector<10xf32>
    %53 = vector.shape_cast %52 : vector<10xf32> to vector<10x1xf32>
    %54 = vector.broadcast %53 : vector<10x1xf32> to vector<10x10xf32>
    %55 = arith.subf %51, %54 : vector<10x10xf32>
    %56 = math.exp %55 : vector<10x10xf32>
    %cst_24 = arith.constant dense<0.000000e+00> : vector<10xf32>
    %57 = vector.multi_reduction <add>, %56, %cst_24 [1] : vector<10x10xf32> to vector<10xf32>
    %58 = vector.shape_cast %57 : vector<10xf32> to vector<10x1xf32>
    %59 = tpu.reciprocal %58 {approx = true} : vector<10x1xf32> -> vector<10x1xf32>
    %60 = vector.broadcast %59 : vector<10x1xf32> to vector<10x10xf32>
    %61 = arith.mulf %56, %60 : vector<10x10xf32>
    %62 = arith.truncf %61 : vector<10x10xf32> to vector<10x10xbf16>
    %63 = arith.truncf %45 : vector<10x16xf32> to vector<10x16xbf16>
    %cst_25 = arith.constant dense<0.000000e+00> : vector<10x16xf32>
    %64 = tpu.matmul %62, %63, %cst_25 {dimension_numbers = #tpu.dot_dimension_numbers<[1], [0], [0], [1], [0, 0, 1, 1], [], []>} : vector<10x10xbf16>, vector<10x16xbf16>, vector<10x16xf32> -> vector<10x16xf32>
    %65 = vector.extract_strided_slice %42 {offsets = [0, 16], sizes = [10, 16], strides = [1, 1]} : vector<10x96xf32> to vector<10x16xf32>
    %66 = vector.extract_strided_slice %42 {offsets = [0, 48], sizes = [10, 16], strides = [1, 1]} : vector<10x96xf32> to vector<10x16xf32>
    %67 = vector.extract_strided_slice %42 {offsets = [0, 80], sizes = [10, 16], strides = [1, 1]} : vector<10x96xf32> to vector<10x16xf32>
    %68 = arith.truncf %65 : vector<10x16xf32> to vector<10x16xbf16>
    %69 = arith.truncf %66 : vector<10x16xf32> to vector<10x16xbf16>
    %cst_26 = arith.constant dense<0.000000e+00> : vector<10x10xf32>
    %70 = tpu.matmul %68, %69, %cst_26 {dimension_numbers = #tpu.dot_dimension_numbers<[1], [1], [0], [0], [0, 0, 1, 0], [], []>} : vector<10x16xbf16>, vector<10x16xbf16>, vector<10x10xf32> -> vector<10x10xf32>
    %cst_27 = arith.constant 2.500000e-01 : f32
    %71 = vector.broadcast %cst_27 : f32 to vector<10x10xf32>
    %72 = arith.mulf %70, %71 : vector<10x10xf32>
    %73 = arith.addf %72, %7 : vector<10x10xf32>
    %cst_28 = arith.constant dense<0xFF800000> : vector<10xf32>
    %74 = vector.multi_reduction <maximumf>, %73, %cst_28 [1] : vector<10x10xf32> to vector<10xf32>
    %75 = vector.shape_cast %74 : vector<10xf32> to vector<10x1xf32>
    %76 = vector.broadcast %75 : vector<10x1xf32> to vector<10x10xf32>
    %77 = arith.subf %73, %76 : vector<10x10xf32>
    %78 = math.exp %77 : vector<10x10xf32>
    %cst_29 = arith.constant dense<0.000000e+00> : vector<10xf32>
    %79 = vector.multi_reduction <add>, %78, %cst_29 [1] : vector<10x10xf32> to vector<10xf32>
    %80 = vector.shape_cast %79 : vector<10xf32> to vector<10x1xf32>
    %81 = tpu.reciprocal %80 {approx = true} : vector<10x1xf32> -> vector<10x1xf32>
    %82 = vector.broadcast %81 : vector<10x1xf32> to vector<10x10xf32>
    %83 = arith.mulf %78, %82 : vector<10x10xf32>
    %84 = arith.truncf %83 : vector<10x10xf32> to vector<10x10xbf16>
    %85 = arith.truncf %67 : vector<10x16xf32> to vector<10x16xbf16>
    %cst_30 = arith.constant dense<0.000000e+00> : vector<10x16xf32>
    %86 = tpu.matmul %84, %85, %cst_30 {dimension_numbers = #tpu.dot_dimension_numbers<[1], [0], [0], [1], [0, 0, 1, 1], [], []>} : vector<10x10xbf16>, vector<10x16xbf16>, vector<10x16xf32> -> vector<10x16xf32>
    %87 = tpu.concatenate %64, %86 in 1 : vector<10x16xf32>, vector<10x16xf32> -> vector<10x32xf32>
    %c0_31 = arith.constant 0 : index
    %c0_32 = arith.constant 0 : index
    %c0_33 = arith.constant 0 : index
    %88 = vector.load %arg11[%c0_31, %c0_32, %c0_33] : memref<2x32x32xf32, #tpu.memory_space<vmem>>, vector<1x32x32xf32>
    %89 = vector.shape_cast %88 : vector<1x32x32xf32> to vector<32x32xf32>
    %90 = arith.truncf %87 : vector<10x32xf32> to vector<10x32xbf16>
    %91 = arith.truncf %89 : vector<32x32xf32> to vector<32x32xbf16>
    %cst_34 = arith.constant dense<0.000000e+00> : vector<10x32xf32>
    %92 = tpu.matmul %90, %91, %cst_34 {dimension_numbers = #tpu.dot_dimension_numbers<[1], [0], [0], [1], [0, 0, 1, 1], [], []>} : vector<10x32xbf16>, vector<32x32xbf16>, vector<10x32xf32> -> vector<10x32xf32>
    %93 = arith.addf %1, %92 : vector<10x32xf32>
    %c0_35 = arith.constant 0 : index
    %c0_36 = arith.constant 0 : index
    %c0_37 = arith.constant 0 : index
    %94 = vector.load %arg12[%c0_35, %c0_36, %c0_37] : memref<2x1x32xf32, #tpu.memory_space<vmem>>, vector<1x1x32xf32>
    %95 = vector.shape_cast %94 : vector<1x1x32xf32> to vector<1x32xf32>
    %96 = vector.broadcast %95 : vector<1x32xf32> to vector<10x32xf32>
    %97 = arith.addf %93, %96 : vector<10x32xf32>
    %c0_38 = arith.constant 0 : index
    %c0_39 = arith.constant 0 : index
    %c0_40 = arith.constant 0 : index
    %98 = vector.load %arg7[%c0_38, %c0_39, %c0_40] : memref<2x1x32xf32, #tpu.memory_space<vmem>>, vector<1x1x32xf32>
    %99 = vector.shape_cast %98 : vector<1x1x32xf32> to vector<1x32xf32>
    %c0_41 = arith.constant 0 : index
    %c0_42 = arith.constant 0 : index
    %c0_43 = arith.constant 0 : index
    %100 = vector.load %arg8[%c0_41, %c0_42, %c0_43] : memref<2x1x32xf32, #tpu.memory_space<vmem>>, vector<1x1x32xf32>
    %101 = vector.shape_cast %100 : vector<1x1x32xf32> to vector<1x32xf32>
    %cst_44 = arith.constant dense<0.000000e+00> : vector<10xf32>
    %102 = vector.multi_reduction <add>, %97, %cst_44 [1] : vector<10x32xf32> to vector<10xf32>
    %103 = vector.shape_cast %102 : vector<10xf32> to vector<10x1xf32>
    %cst_45 = arith.constant 3.200000e+01 : f32
    %104 = vector.broadcast %cst_45 : f32 to vector<10x1xf32>
    %105 = arith.divf %103, %104 : vector<10x1xf32>
    %106 = vector.broadcast %105 : vector<10x1xf32> to vector<10x32xf32>
    %107 = arith.subf %97, %106 : vector<10x32xf32>
    %108 = arith.mulf %107, %107 : vector<10x32xf32>
    %cst_46 = arith.constant dense<0.000000e+00> : vector<10xf32>
    %109 = vector.multi_reduction <add>, %108, %cst_46 [1] : vector<10x32xf32> to vector<10xf32>
    %110 = vector.shape_cast %109 : vector<10xf32> to vector<10x1xf32>
    %cst_47 = arith.constant 3.200000e+01 : f32
    %111 = vector.broadcast %cst_47 : f32 to vector<10x1xf32>
    %112 = arith.divf %110, %111 : vector<10x1xf32>
    %113 = vector.broadcast %105 : vector<10x1xf32> to vector<10x32xf32>
    %114 = arith.subf %97, %113 : vector<10x32xf32>
    %cst_48 = arith.constant 9.99999974E-6 : f32
    %115 = vector.broadcast %cst_48 : f32 to vector<10x1xf32>
    %116 = arith.addf %112, %115 : vector<10x1xf32>
    %117 = math.rsqrt %116 : vector<10x1xf32>
    %118 = vector.broadcast %117 : vector<10x1xf32> to vector<10x32xf32>
    %119 = arith.mulf %114, %118 : vector<10x32xf32>
    %120 = vector.broadcast %99 : vector<1x32xf32> to vector<10x32xf32>
    %121 = arith.mulf %119, %120 : vector<10x32xf32>
    %122 = vector.broadcast %101 : vector<1x32xf32> to vector<10x32xf32>
    %123 = arith.addf %121, %122 : vector<10x32xf32>
    %c0_49 = arith.constant 0 : index
    %c0_50 = arith.constant 0 : index
    %c0_51 = arith.constant 0 : index
    %124 = vector.load %arg13[%c0_49, %c0_50, %c0_51] : memref<2x32x128xf32, #tpu.memory_space<vmem>>, vector<1x32x128xf32>
    %125 = vector.shape_cast %124 : vector<1x32x128xf32> to vector<32x128xf32>
    %126 = arith.truncf %123 : vector<10x32xf32> to vector<10x32xbf16>
    %127 = arith.truncf %125 : vector<32x128xf32> to vector<32x128xbf16>
    %cst_52 = arith.constant dense<0.000000e+00> : vector<10x128xf32>
    %128 = tpu.matmul %126, %127, %cst_52 {dimension_numbers = #tpu.dot_dimension_numbers<[1], [0], [0], [1], [0, 0, 1, 1], [], []>} : vector<10x32xbf16>, vector<32x128xbf16>, vector<10x128xf32> -> vector<10x128xf32>
    %c0_53 = arith.constant 0 : index
    %c0_54 = arith.constant 0 : index
    %c0_55 = arith.constant 0 : index
    %129 = vector.load %arg14[%c0_53, %c0_54, %c0_55] : memref<2x1x128xf32, #tpu.memory_space<vmem>>, vector<1x1x128xf32>
    %130 = vector.shape_cast %129 : vector<1x1x128xf32> to vector<1x128xf32>
    %131 = vector.broadcast %130 : vector<1x128xf32> to vector<10x128xf32>
    %132 = arith.addf %128, %131 : vector<10x128xf32>
    %cst_56 = arith.constant 1.702000e+00 : f32
    %133 = vector.broadcast %cst_56 : f32 to vector<10x128xf32>
    %134 = arith.mulf %133, %132 : vector<10x128xf32>
    %135 = arith.negf %134 : vector<10x128xf32>
    %136 = math.exp %135 : vector<10x128xf32>
    %cst_57 = arith.constant 1.000000e+00 : f32
    %137 = vector.broadcast %cst_57 : f32 to vector<10x128xf32>
    %138 = arith.addf %137, %136 : vector<10x128xf32>
    %139 = arith.divf %137, %138 : vector<10x128xf32>
    %140 = arith.mulf %132, %139 : vector<10x128xf32>
    %c0_58 = arith.constant 0 : index
    %c0_59 = arith.constant 0 : index
    %c0_60 = arith.constant 0 : index
    %141 = vector.load %arg15[%c0_58, %c0_59, %c0_60] : memref<2x128x32xf32, #tpu.memory_space<vmem>>, vector<1x128x32xf32>
    %142 = vector.shape_cast %141 : vector<1x128x32xf32> to vector<128x32xf32>
    %143 = arith.truncf %140 : vector<10x128xf32> to vector<10x128xbf16>
    %144 = arith.truncf %142 : vector<128x32xf32> to vector<128x32xbf16>
    %cst_61 = arith.constant dense<0.000000e+00> : vector<10x32xf32>
    %145 = tpu.matmul %143, %144, %cst_61 {dimension_numbers = #tpu.dot_dimension_numbers<[1], [0], [0], [1], [0, 0, 1, 1], [], []>} : vector<10x128xbf16>, vector<128x32xbf16>, vector<10x32xf32> -> vector<10x32xf32>
    %146 = arith.addf %97, %145 : vector<10x32xf32>
    %c0_62 = arith.constant 0 : index
    %c0_63 = arith.constant 0 : index
    %c0_64 = arith.constant 0 : index
    %147 = vector.load %arg16[%c0_62, %c0_63, %c0_64] : memref<2x1x32xf32, #tpu.memory_space<vmem>>, vector<1x1x32xf32>
    %148 = vector.shape_cast %147 : vector<1x1x32xf32> to vector<1x32xf32>
    %149 = vector.broadcast %148 : vector<1x32xf32> to vector<10x32xf32>
    %150 = arith.addf %146, %149 : vector<10x32xf32>
    %c0_65 = arith.constant 0 : index
    %c0_66 = arith.constant 0 : index
    %151 = vector.load %arg3[%c0_65, %c0_66] : memref<10x1xf32, #tpu.memory_space<vmem>>, vector<10x1xf32>
    %152 = vector.broadcast %151 : vector<10x1xf32> to vector<10x32xf32>
    %153 = arith.mulf %150, %152 : vector<10x32xf32>
    %c1 = arith.constant 1 : index
    %c0_67 = arith.constant 0 : index
    %c0_68 = arith.constant 0 : index
    %154 = vector.load %arg2[%c1, %c0_67, %c0_68] : memref<2x10x32xf32, #tpu.memory_space<vmem>>, vector<1x10x32xf32>
    %155 = vector.shape_cast %154 : vector<1x10x32xf32> to vector<10x32xf32>
    %156 = arith.addf %153, %155 : vector<10x32xf32>
    %c1_69 = arith.constant 1 : index
    %c0_70 = arith.constant 0 : index
    %c0_71 = arith.constant 0 : index
    %157 = vector.load %arg5[%c1_69, %c0_70, %c0_71] : memref<2x1x32xf32, #tpu.memory_space<vmem>>, vector<1x1x32xf32>
    %158 = vector.shape_cast %157 : vector<1x1x32xf32> to vector<1x32xf32>
    %c1_72 = arith.constant 1 : index
    %c0_73 = arith.constant 0 : index
    %c0_74 = arith.constant 0 : index
    %159 = vector.load %arg6[%c1_72, %c0_73, %c0_74] : memref<2x1x32xf32, #tpu.memory_space<vmem>>, vector<1x1x32xf32>
    %160 = vector.shape_cast %159 : vector<1x1x32xf32> to vector<1x32xf32>
    %cst_75 = arith.constant dense<0.000000e+00> : vector<10xf32>
    %161 = vector.multi_reduction <add>, %156, %cst_75 [1] : vector<10x32xf32> to vector<10xf32>
    %162 = vector.shape_cast %161 : vector<10xf32> to vector<10x1xf32>
    %cst_76 = arith.constant 3.200000e+01 : f32
    %163 = vector.broadcast %cst_76 : f32 to vector<10x1xf32>
    %164 = arith.divf %162, %163 : vector<10x1xf32>
    %165 = vector.broadcast %164 : vector<10x1xf32> to vector<10x32xf32>
    %166 = arith.subf %156, %165 : vector<10x32xf32>
    %167 = arith.mulf %166, %166 : vector<10x32xf32>
    %cst_77 = arith.constant dense<0.000000e+00> : vector<10xf32>
    %168 = vector.multi_reduction <add>, %167, %cst_77 [1] : vector<10x32xf32> to vector<10xf32>
    %169 = vector.shape_cast %168 : vector<10xf32> to vector<10x1xf32>
    %cst_78 = arith.constant 3.200000e+01 : f32
    %170 = vector.broadcast %cst_78 : f32 to vector<10x1xf32>
    %171 = arith.divf %169, %170 : vector<10x1xf32>
    %172 = vector.broadcast %164 : vector<10x1xf32> to vector<10x32xf32>
    %173 = arith.subf %156, %172 : vector<10x32xf32>
    %cst_79 = arith.constant 9.99999974E-6 : f32
    %174 = vector.broadcast %cst_79 : f32 to vector<10x1xf32>
    %175 = arith.addf %171, %174 : vector<10x1xf32>
    %176 = math.rsqrt %175 : vector<10x1xf32>
    %177 = vector.broadcast %176 : vector<10x1xf32> to vector<10x32xf32>
    %178 = arith.mulf %173, %177 : vector<10x32xf32>
    %179 = vector.broadcast %158 : vector<1x32xf32> to vector<10x32xf32>
    %180 = arith.mulf %178, %179 : vector<10x32xf32>
    %181 = vector.broadcast %160 : vector<1x32xf32> to vector<10x32xf32>
    %182 = arith.addf %180, %181 : vector<10x32xf32>
    %c1_80 = arith.constant 1 : index
    %c0_81 = arith.constant 0 : index
    %c0_82 = arith.constant 0 : index
    %183 = vector.load %arg9[%c1_80, %c0_81, %c0_82] : memref<2x32x96xf32, #tpu.memory_space<vmem>>, vector<1x32x96xf32>
    %184 = vector.shape_cast %183 : vector<1x32x96xf32> to vector<32x96xf32>
    %185 = arith.truncf %182 : vector<10x32xf32> to vector<10x32xbf16>
    %186 = arith.truncf %184 : vector<32x96xf32> to vector<32x96xbf16>
    %cst_83 = arith.constant dense<0.000000e+00> : vector<10x96xf32>
    %187 = tpu.matmul %185, %186, %cst_83 {dimension_numbers = #tpu.dot_dimension_numbers<[1], [0], [0], [1], [0, 0, 1, 1], [], []>} : vector<10x32xbf16>, vector<32x96xbf16>, vector<10x96xf32> -> vector<10x96xf32>
    %c1_84 = arith.constant 1 : index
    %c0_85 = arith.constant 0 : index
    %c0_86 = arith.constant 0 : index
    %188 = vector.load %arg10[%c1_84, %c0_85, %c0_86] : memref<2x1x96xf32, #tpu.memory_space<vmem>>, vector<1x1x96xf32>
    %189 = vector.shape_cast %188 : vector<1x1x96xf32> to vector<1x96xf32>
    %190 = vector.broadcast %189 : vector<1x96xf32> to vector<10x96xf32>
    %191 = arith.addf %187, %190 : vector<10x96xf32>
    %192 = vector.extract_strided_slice %191 {offsets = [0, 0], sizes = [10, 16], strides = [1, 1]} : vector<10x96xf32> to vector<10x16xf32>
    %193 = vector.extract_strided_slice %191 {offsets = [0, 32], sizes = [10, 16], strides = [1, 1]} : vector<10x96xf32> to vector<10x16xf32>
    %194 = vector.extract_strided_slice %191 {offsets = [0, 64], sizes = [10, 16], strides = [1, 1]} : vector<10x96xf32> to vector<10x16xf32>
    %195 = arith.truncf %192 : vector<10x16xf32> to vector<10x16xbf16>
    %196 = arith.truncf %193 : vector<10x16xf32> to vector<10x16xbf16>
    %cst_87 = arith.constant dense<0.000000e+00> : vector<10x10xf32>
    %197 = tpu.matmul %195, %196, %cst_87 {dimension_numbers = #tpu.dot_dimension_numbers<[1], [1], [0], [0], [0, 0, 1, 0], [], []>} : vector<10x16xbf16>, vector<10x16xbf16>, vector<10x10xf32> -> vector<10x10xf32>
    %cst_88 = arith.constant 2.500000e-01 : f32
    %198 = vector.broadcast %cst_88 : f32 to vector<10x10xf32>
    %199 = arith.mulf %197, %198 : vector<10x10xf32>
    %200 = arith.addf %199, %7 : vector<10x10xf32>
    %cst_89 = arith.constant dense<0xFF800000> : vector<10xf32>
    %201 = vector.multi_reduction <maximumf>, %200, %cst_89 [1] : vector<10x10xf32> to vector<10xf32>
    %202 = vector.shape_cast %201 : vector<10xf32> to vector<10x1xf32>
    %203 = vector.broadcast %202 : vector<10x1xf32> to vector<10x10xf32>
    %204 = arith.subf %200, %203 : vector<10x10xf32>
    %205 = math.exp %204 : vector<10x10xf32>
    %cst_90 = arith.constant dense<0.000000e+00> : vector<10xf32>
    %206 = vector.multi_reduction <add>, %205, %cst_90 [1] : vector<10x10xf32> to vector<10xf32>
    %207 = vector.shape_cast %206 : vector<10xf32> to vector<10x1xf32>
    %208 = tpu.reciprocal %207 {approx = true} : vector<10x1xf32> -> vector<10x1xf32>
    %209 = vector.broadcast %208 : vector<10x1xf32> to vector<10x10xf32>
    %210 = arith.mulf %205, %209 : vector<10x10xf32>
    %211 = arith.truncf %210 : vector<10x10xf32> to vector<10x10xbf16>
    %212 = arith.truncf %194 : vector<10x16xf32> to vector<10x16xbf16>
    %cst_91 = arith.constant dense<0.000000e+00> : vector<10x16xf32>
    %213 = tpu.matmul %211, %212, %cst_91 {dimension_numbers = #tpu.dot_dimension_numbers<[1], [0], [0], [1], [0, 0, 1, 1], [], []>} : vector<10x10xbf16>, vector<10x16xbf16>, vector<10x16xf32> -> vector<10x16xf32>
    %214 = vector.extract_strided_slice %191 {offsets = [0, 16], sizes = [10, 16], strides = [1, 1]} : vector<10x96xf32> to vector<10x16xf32>
    %215 = vector.extract_strided_slice %191 {offsets = [0, 48], sizes = [10, 16], strides = [1, 1]} : vector<10x96xf32> to vector<10x16xf32>
    %216 = vector.extract_strided_slice %191 {offsets = [0, 80], sizes = [10, 16], strides = [1, 1]} : vector<10x96xf32> to vector<10x16xf32>
    %217 = arith.truncf %214 : vector<10x16xf32> to vector<10x16xbf16>
    %218 = arith.truncf %215 : vector<10x16xf32> to vector<10x16xbf16>
    %cst_92 = arith.constant dense<0.000000e+00> : vector<10x10xf32>
    %219 = tpu.matmul %217, %218, %cst_92 {dimension_numbers = #tpu.dot_dimension_numbers<[1], [1], [0], [0], [0, 0, 1, 0], [], []>} : vector<10x16xbf16>, vector<10x16xbf16>, vector<10x10xf32> -> vector<10x10xf32>
    %cst_93 = arith.constant 2.500000e-01 : f32
    %220 = vector.broadcast %cst_93 : f32 to vector<10x10xf32>
    %221 = arith.mulf %219, %220 : vector<10x10xf32>
    %222 = arith.addf %221, %7 : vector<10x10xf32>
    %cst_94 = arith.constant dense<0xFF800000> : vector<10xf32>
    %223 = vector.multi_reduction <maximumf>, %222, %cst_94 [1] : vector<10x10xf32> to vector<10xf32>
    %224 = vector.shape_cast %223 : vector<10xf32> to vector<10x1xf32>
    %225 = vector.broadcast %224 : vector<10x1xf32> to vector<10x10xf32>
    %226 = arith.subf %222, %225 : vector<10x10xf32>
    %227 = math.exp %226 : vector<10x10xf32>
    %cst_95 = arith.constant dense<0.000000e+00> : vector<10xf32>
    %228 = vector.multi_reduction <add>, %227, %cst_95 [1] : vector<10x10xf32> to vector<10xf32>
    %229 = vector.shape_cast %228 : vector<10xf32> to vector<10x1xf32>
    %230 = tpu.reciprocal %229 {approx = true} : vector<10x1xf32> -> vector<10x1xf32>
    %231 = vector.broadcast %230 : vector<10x1xf32> to vector<10x10xf32>
    %232 = arith.mulf %227, %231 : vector<10x10xf32>
    %233 = arith.truncf %232 : vector<10x10xf32> to vector<10x10xbf16>
    %234 = arith.truncf %216 : vector<10x16xf32> to vector<10x16xbf16>
    %cst_96 = arith.constant dense<0.000000e+00> : vector<10x16xf32>
    %235 = tpu.matmul %233, %234, %cst_96 {dimension_numbers = #tpu.dot_dimension_numbers<[1], [0], [0], [1], [0, 0, 1, 1], [], []>} : vector<10x10xbf16>, vector<10x16xbf16>, vector<10x16xf32> -> vector<10x16xf32>
    %236 = tpu.concatenate %213, %235 in 1 : vector<10x16xf32>, vector<10x16xf32> -> vector<10x32xf32>
    %c1_97 = arith.constant 1 : index
    %c0_98 = arith.constant 0 : index
    %c0_99 = arith.constant 0 : index
    %237 = vector.load %arg11[%c1_97, %c0_98, %c0_99] : memref<2x32x32xf32, #tpu.memory_space<vmem>>, vector<1x32x32xf32>
    %238 = vector.shape_cast %237 : vector<1x32x32xf32> to vector<32x32xf32>
    %239 = arith.truncf %236 : vector<10x32xf32> to vector<10x32xbf16>
    %240 = arith.truncf %238 : vector<32x32xf32> to vector<32x32xbf16>
    %cst_100 = arith.constant dense<0.000000e+00> : vector<10x32xf32>
    %241 = tpu.matmul %239, %240, %cst_100 {dimension_numbers = #tpu.dot_dimension_numbers<[1], [0], [0], [1], [0, 0, 1, 1], [], []>} : vector<10x32xbf16>, vector<32x32xbf16>, vector<10x32xf32> -> vector<10x32xf32>
    %242 = arith.addf %156, %241 : vector<10x32xf32>
    %c1_101 = arith.constant 1 : index
    %c0_102 = arith.constant 0 : index
    %c0_103 = arith.constant 0 : index
    %243 = vector.load %arg12[%c1_101, %c0_102, %c0_103] : memref<2x1x32xf32, #tpu.memory_space<vmem>>, vector<1x1x32xf32>
    %244 = vector.shape_cast %243 : vector<1x1x32xf32> to vector<1x32xf32>
    %245 = vector.broadcast %244 : vector<1x32xf32> to vector<10x32xf32>
    %246 = arith.addf %242, %245 : vector<10x32xf32>
    %c1_104 = arith.constant 1 : index
    %c0_105 = arith.constant 0 : index
    %c0_106 = arith.constant 0 : index
    %247 = vector.load %arg7[%c1_104, %c0_105, %c0_106] : memref<2x1x32xf32, #tpu.memory_space<vmem>>, vector<1x1x32xf32>
    %248 = vector.shape_cast %247 : vector<1x1x32xf32> to vector<1x32xf32>
    %c1_107 = arith.constant 1 : index
    %c0_108 = arith.constant 0 : index
    %c0_109 = arith.constant 0 : index
    %249 = vector.load %arg8[%c1_107, %c0_108, %c0_109] : memref<2x1x32xf32, #tpu.memory_space<vmem>>, vector<1x1x32xf32>
    %250 = vector.shape_cast %249 : vector<1x1x32xf32> to vector<1x32xf32>
    %cst_110 = arith.constant dense<0.000000e+00> : vector<10xf32>
    %251 = vector.multi_reduction <add>, %246, %cst_110 [1] : vector<10x32xf32> to vector<10xf32>
    %252 = vector.shape_cast %251 : vector<10xf32> to vector<10x1xf32>
    %cst_111 = arith.constant 3.200000e+01 : f32
    %253 = vector.broadcast %cst_111 : f32 to vector<10x1xf32>
    %254 = arith.divf %252, %253 : vector<10x1xf32>
    %255 = vector.broadcast %254 : vector<10x1xf32> to vector<10x32xf32>
    %256 = arith.subf %246, %255 : vector<10x32xf32>
    %257 = arith.mulf %256, %256 : vector<10x32xf32>
    %cst_112 = arith.constant dense<0.000000e+00> : vector<10xf32>
    %258 = vector.multi_reduction <add>, %257, %cst_112 [1] : vector<10x32xf32> to vector<10xf32>
    %259 = vector.shape_cast %258 : vector<10xf32> to vector<10x1xf32>
    %cst_113 = arith.constant 3.200000e+01 : f32
    %260 = vector.broadcast %cst_113 : f32 to vector<10x1xf32>
    %261 = arith.divf %259, %260 : vector<10x1xf32>
    %262 = vector.broadcast %254 : vector<10x1xf32> to vector<10x32xf32>
    %263 = arith.subf %246, %262 : vector<10x32xf32>
    %cst_114 = arith.constant 9.99999974E-6 : f32
    %264 = vector.broadcast %cst_114 : f32 to vector<10x1xf32>
    %265 = arith.addf %261, %264 : vector<10x1xf32>
    %266 = math.rsqrt %265 : vector<10x1xf32>
    %267 = vector.broadcast %266 : vector<10x1xf32> to vector<10x32xf32>
    %268 = arith.mulf %263, %267 : vector<10x32xf32>
    %269 = vector.broadcast %248 : vector<1x32xf32> to vector<10x32xf32>
    %270 = arith.mulf %268, %269 : vector<10x32xf32>
    %271 = vector.broadcast %250 : vector<1x32xf32> to vector<10x32xf32>
    %272 = arith.addf %270, %271 : vector<10x32xf32>
    %c1_115 = arith.constant 1 : index
    %c0_116 = arith.constant 0 : index
    %c0_117 = arith.constant 0 : index
    %273 = vector.load %arg13[%c1_115, %c0_116, %c0_117] : memref<2x32x128xf32, #tpu.memory_space<vmem>>, vector<1x32x128xf32>
    %274 = vector.shape_cast %273 : vector<1x32x128xf32> to vector<32x128xf32>
    %275 = arith.truncf %272 : vector<10x32xf32> to vector<10x32xbf16>
    %276 = arith.truncf %274 : vector<32x128xf32> to vector<32x128xbf16>
    %cst_118 = arith.constant dense<0.000000e+00> : vector<10x128xf32>
    %277 = tpu.matmul %275, %276, %cst_118 {dimension_numbers = #tpu.dot_dimension_numbers<[1], [0], [0], [1], [0, 0, 1, 1], [], []>} : vector<10x32xbf16>, vector<32x128xbf16>, vector<10x128xf32> -> vector<10x128xf32>
    %c1_119 = arith.constant 1 : index
    %c0_120 = arith.constant 0 : index
    %c0_121 = arith.constant 0 : index
    %278 = vector.load %arg14[%c1_119, %c0_120, %c0_121] : memref<2x1x128xf32, #tpu.memory_space<vmem>>, vector<1x1x128xf32>
    %279 = vector.shape_cast %278 : vector<1x1x128xf32> to vector<1x128xf32>
    %280 = vector.broadcast %279 : vector<1x128xf32> to vector<10x128xf32>
    %281 = arith.addf %277, %280 : vector<10x128xf32>
    %cst_122 = arith.constant 1.702000e+00 : f32
    %282 = vector.broadcast %cst_122 : f32 to vector<10x128xf32>
    %283 = arith.mulf %282, %281 : vector<10x128xf32>
    %284 = arith.negf %283 : vector<10x128xf32>
    %285 = math.exp %284 : vector<10x128xf32>
    %cst_123 = arith.constant 1.000000e+00 : f32
    %286 = vector.broadcast %cst_123 : f32 to vector<10x128xf32>
    %287 = arith.addf %286, %285 : vector<10x128xf32>
    %288 = arith.divf %286, %287 : vector<10x128xf32>
    %289 = arith.mulf %281, %288 : vector<10x128xf32>
    %c1_124 = arith.constant 1 : index
    %c0_125 = arith.constant 0 : index
    %c0_126 = arith.constant 0 : index
    %290 = vector.load %arg15[%c1_124, %c0_125, %c0_126] : memref<2x128x32xf32, #tpu.memory_space<vmem>>, vector<1x128x32xf32>
    %291 = vector.shape_cast %290 : vector<1x128x32xf32> to vector<128x32xf32>
    %292 = arith.truncf %289 : vector<10x128xf32> to vector<10x128xbf16>
    %293 = arith.truncf %291 : vector<128x32xf32> to vector<128x32xbf16>
    %cst_127 = arith.constant dense<0.000000e+00> : vector<10x32xf32>
    %294 = tpu.matmul %292, %293, %cst_127 {dimension_numbers = #tpu.dot_dimension_numbers<[1], [0], [0], [1], [0, 0, 1, 1], [], []>} : vector<10x128xbf16>, vector<128x32xbf16>, vector<10x32xf32> -> vector<10x32xf32>
    %295 = arith.addf %246, %294 : vector<10x32xf32>
    %c1_128 = arith.constant 1 : index
    %c0_129 = arith.constant 0 : index
    %c0_130 = arith.constant 0 : index
    %296 = vector.load %arg16[%c1_128, %c0_129, %c0_130] : memref<2x1x32xf32, #tpu.memory_space<vmem>>, vector<1x1x32xf32>
    %297 = vector.shape_cast %296 : vector<1x1x32xf32> to vector<1x32xf32>
    %298 = vector.broadcast %297 : vector<1x32xf32> to vector<10x32xf32>
    %299 = arith.addf %295, %298 : vector<10x32xf32>
    %c0_131 = arith.constant 0 : index
    %c0_132 = arith.constant 0 : index
    %c0_133 = arith.constant 0 : index
    %300 = vector.load %arg4[%c0_131, %c0_132, %c0_133] : memref<1x10x1xf32, #tpu.memory_space<vmem>>, vector<1x10x1xf32>
    %301 = vector.shape_cast %300 : vector<1x10x1xf32> to vector<10x1xf32>
    %302 = vector.broadcast %301 : vector<10x1xf32> to vector<10x32xf32>
    %303 = arith.mulf %299, %302 : vector<10x32xf32>
    %cst_134 = arith.constant dense<0.000000e+00> : vector<32xf32>
    %304 = vector.multi_reduction <add>, %303, %cst_134 [0] : vector<10x32xf32> to vector<32xf32>
    %305 = vector.shape_cast %304 : vector<32xf32> to vector<1x32xf32>
    %c0_135 = arith.constant 0 : index
    %c0_136 = arith.constant 0 : index
    %306 = vector.load %arg17[%c0_135, %c0_136] : memref<1x32xf32, #tpu.memory_space<vmem>>, vector<1x32xf32>
    %c0_137 = arith.constant 0 : index
    %c0_138 = arith.constant 0 : index
    %307 = vector.load %arg18[%c0_137, %c0_138] : memref<1x32xf32, #tpu.memory_space<vmem>>, vector<1x32xf32>
    %cst_139 = arith.constant dense<0.000000e+00> : vector<1xf32>
    %308 = vector.multi_reduction <add>, %305, %cst_139 [1] : vector<1x32xf32> to vector<1xf32>
    %309 = vector.shape_cast %308 : vector<1xf32> to vector<1x1xf32>
    %cst_140 = arith.constant 3.200000e+01 : f32
    %310 = vector.broadcast %cst_140 : f32 to vector<1x1xf32>
    %311 = arith.divf %309, %310 : vector<1x1xf32>
    %312 = vector.broadcast %311 : vector<1x1xf32> to vector<1x32xf32>
    %313 = arith.subf %305, %312 : vector<1x32xf32>
    %314 = arith.mulf %313, %313 : vector<1x32xf32>
    %cst_141 = arith.constant dense<0.000000e+00> : vector<1xf32>
    %315 = vector.multi_reduction <add>, %314, %cst_141 [1] : vector<1x32xf32> to vector<1xf32>
    %316 = vector.shape_cast %315 : vector<1xf32> to vector<1x1xf32>
    %cst_142 = arith.constant 3.200000e+01 : f32
    %317 = vector.broadcast %cst_142 : f32 to vector<1x1xf32>
    %318 = arith.divf %316, %317 : vector<1x1xf32>
    %319 = vector.broadcast %311 : vector<1x1xf32> to vector<1x32xf32>
    %320 = arith.subf %305, %319 : vector<1x32xf32>
    %cst_143 = arith.constant 9.99999974E-6 : f32
    %321 = vector.broadcast %cst_143 : f32 to vector<1x1xf32>
    %322 = arith.addf %318, %321 : vector<1x1xf32>
    %323 = math.rsqrt %322 : vector<1x1xf32>
    %324 = vector.broadcast %323 : vector<1x1xf32> to vector<1x32xf32>
    %325 = arith.mulf %320, %324 : vector<1x32xf32>
    %326 = arith.mulf %325, %306 : vector<1x32xf32>
    %327 = arith.addf %326, %307 : vector<1x32xf32>
    %c0_144 = arith.constant 0 : index
    %c0_145 = arith.constant 0 : index
    %328 = vector.load %arg19[%c0_144, %c0_145] : memref<32x32xf32, #tpu.memory_space<vmem>>, vector<32x32xf32>
    %329 = arith.truncf %327 : vector<1x32xf32> to vector<1x32xbf16>
    %330 = arith.truncf %328 : vector<32x32xf32> to vector<32x32xbf16>
    %cst_146 = arith.constant dense<0.000000e+00> : vector<1x32xf32>
    %331 = tpu.matmul %329, %330, %cst_146 {dimension_numbers = #tpu.dot_dimension_numbers<[1], [0], [0], [1], [0, 0, 1, 1], [], []>} : vector<1x32xbf16>, vector<32x32xbf16>, vector<1x32xf32> -> vector<1x32xf32>
    %332 = arith.mulf %331, %331 : vector<1x32xf32>
    %cst_147 = arith.constant dense<0.000000e+00> : vector<1xf32>
    %333 = vector.multi_reduction <add>, %332, %cst_147 [1] : vector<1x32xf32> to vector<1xf32>
    %334 = vector.shape_cast %333 : vector<1xf32> to vector<1x1xf32>
    %cst_148 = arith.constant 9.99999996E-13 : f32
    %335 = vector.broadcast %cst_148 : f32 to vector<1x1xf32>
    %336 = arith.addf %334, %335 : vector<1x1xf32>
    %337 = math.rsqrt %336 : vector<1x1xf32>
    %338 = vector.broadcast %337 : vector<1x1xf32> to vector<1x32xf32>
    %339 = arith.mulf %331, %338 : vector<1x32xf32>
    %c0_149 = arith.constant 0 : index
    %c0_150 = arith.constant 0 : index
    %340 = vector.load %arg20[%c0_149, %c0_150] : memref<2x32xf32, #tpu.memory_space<vmem>>, vector<2x32xf32>
    %c0_151 = arith.constant 0 : index
    %c0_152 = arith.constant 0 : index
    %341 = vector.load %arg21[%c0_151, %c0_152] : memref<1x1xf32, #tpu.memory_space<vmem>>, vector<1x1xf32>
    %cst_153 = arith.constant dense<0.000000e+00> : vector<1x2xf32>
    %342 = tpu.matmul %339, %340, %cst_153 {dimension_numbers = #tpu.dot_dimension_numbers<[1], [1], [0], [0], [0, 0, 1, 0], [], []>} : vector<1x32xf32>, vector<2x32xf32>, vector<1x2xf32> -> vector<1x2xf32>
    %343 = vector.broadcast %341 : vector<1x1xf32> to vector<1x2xf32>
    %344 = arith.mulf %343, %342 : vector<1x2xf32>
    %c0_154 = arith.constant 0 : index
    %c0_155 = arith.constant 0 : index
    %c0_156 = arith.constant 0 : index
    %345 = vector.load %arg22[%c0_154, %c0_155, %c0_156] : memref<1x1x2xf32, #tpu.memory_space<vmem>>, vector<1x1x2xf32>
    %346 = vector.shape_cast %345 : vector<1x1x2xf32> to vector<1x2xf32>
    %347 = vector.shape_cast %344 : vector<1x2xf32> to vector<1x1x2xf32>
    tpu.vector_store %arg22[%c0_154, %c0_155, %c0_156], %347 {strides = array<i32>} : memref<1x1x2xf32, #tpu.memory_space<vmem>>, vector<1x1x2xf32>,
    return
  }
  func.func @transform_0(%arg0: i32) -> (i32, i32, i32) {
    %c0_i32 = arith.constant 0 : i32
    %c0_i32_0 = arith.constant 0 : i32
    %c0_i32_1 = arith.constant 0 : i32
    return %arg0, %c0_i32, %c0_i32_0 : i32, i32, i32
  }
  func.func @transform_1(%arg0: i32) -> (i32, i32, i32) {
    %c0_i32 = arith.constant 0 : i32
    %c0_i32_0 = arith.constant 0 : i32
    %c0_i32_1 = arith.constant 0 : i32
    %c0_i32_2 = arith.constant 0 : i32
    return %c0_i32, %c0_i32_0, %c0_i32_1 : i32, i32, i32
  }
  func.func @transform_2(%arg0: i32) -> (i32, i32) {
    %c0_i32 = arith.constant 0 : i32
    %c0_i32_0 = arith.constant 0 : i32
    %c0_i32_1 = arith.constant 0 : i32
    return %c0_i32, %c0_i32_0 : i32, i32
  }
  func.func @transform_3(%arg0: i32) -> (i32, i32, i32) {
    %c0_i32 = arith.constant 0 : i32
    %c0_i32_0 = arith.constant 0 : i32
    %c0_i32_1 = arith.constant 0 : i32
    return %arg0, %c0_i32, %c0_i32_0 : i32, i32, i32
  }
  func.func @transform_4(%arg0: i32) -> (i32, i32, i32) {
    %c0_i32 = arith.constant 0 : i32
    %c0_i32_0 = arith.constant 0 : i32
    %c0_i32_1 = arith.constant 0 : i32
    %c0_i32_2 = arith.constant 0 : i32
    return %c0_i32, %c0_i32_0, %c0_i32_1 : i32, i32, i32
  }
  func.func @transform_5(%arg0: i32) -> (i32, i32, i32) {
    %c0_i32 = arith.constant 0 : i32
    %c0_i32_0 = arith.constant 0 : i32
    %c0_i32_1 = arith.constant 0 : i32
    %c0_i32_2 = arith.constant 0 : i32
    return %c0_i32, %c0_i32_0, %c0_i32_1 : i32, i32, i32
  }
  func.func @transform_6(%arg0: i32) -> (i32, i32, i32) {
    %c0_i32 = arith.constant 0 : i32
    %c0_i32_0 = arith.constant 0 : i32
    %c0_i32_1 = arith.constant 0 : i32
    %c0_i32_2 = arith.constant 0 : i32
    return %c0_i32, %c0_i32_0, %c0_i32_1 : i32, i32, i32
  }
  func.func @transform_7(%arg0: i32) -> (i32, i32, i32) {
    %c0_i32 = arith.constant 0 : i32
    %c0_i32_0 = arith.constant 0 : i32
    %c0_i32_1 = arith.constant 0 : i32
    %c0_i32_2 = arith.constant 0 : i32
    return %c0_i32, %c0_i32_0, %c0_i32_1 : i32, i32, i32
  }
  func.func @transform_8(%arg0: i32) -> (i32, i32, i32) {
    %c0_i32 = arith.constant 0 : i32
    %c0_i32_0 = arith.constant 0 : i32
    %c0_i32_1 = arith.constant 0 : i32
    %c0_i32_2 = arith.constant 0 : i32
    return %c0_i32, %c0_i32_0, %c0_i32_1 : i32, i32, i32
  }
  func.func @transform_9(%arg0: i32) -> (i32, i32, i32) {
    %c0_i32 = arith.constant 0 : i32
    %c0_i32_0 = arith.constant 0 : i32
    %c0_i32_1 = arith.constant 0 : i32
    %c0_i32_2 = arith.constant 0 : i32
    return %c0_i32, %c0_i32_0, %c0_i32_1 : i32, i32, i32
  }
  func.func @transform_10(%arg0: i32) -> (i32, i32, i32) {
    %c0_i32 = arith.constant 0 : i32
    %c0_i32_0 = arith.constant 0 : i32
    %c0_i32_1 = arith.constant 0 : i32
    %c0_i32_2 = arith.constant 0 : i32
    return %c0_i32, %c0_i32_0, %c0_i32_1 : i32, i32, i32
  }
  func.func @transform_11(%arg0: i32) -> (i32, i32, i32) {
    %c0_i32 = arith.constant 0 : i32
    %c0_i32_0 = arith.constant 0 : i32
    %c0_i32_1 = arith.constant 0 : i32
    %c0_i32_2 = arith.constant 0 : i32
    return %c0_i32, %c0_i32_0, %c0_i32_1 : i32, i32, i32
  }
  func.func @transform_12(%arg0: i32) -> (i32, i32, i32) {
    %c0_i32 = arith.constant 0 : i32
    %c0_i32_0 = arith.constant 0 : i32
    %c0_i32_1 = arith.constant 0 : i32
    %c0_i32_2 = arith.constant 0 : i32
    return %c0_i32, %c0_i32_0, %c0_i32_1 : i32, i32, i32
  }
  func.func @transform_13(%arg0: i32) -> (i32, i32, i32) {
    %c0_i32 = arith.constant 0 : i32
    %c0_i32_0 = arith.constant 0 : i32
    %c0_i32_1 = arith.constant 0 : i32
    %c0_i32_2 = arith.constant 0 : i32
    return %c0_i32, %c0_i32_0, %c0_i32_1 : i32, i32, i32
  }
  func.func @transform_14(%arg0: i32) -> (i32, i32, i32) {
    %c0_i32 = arith.constant 0 : i32
    %c0_i32_0 = arith.constant 0 : i32
    %c0_i32_1 = arith.constant 0 : i32
    %c0_i32_2 = arith.constant 0 : i32
    return %c0_i32, %c0_i32_0, %c0_i32_1 : i32, i32, i32
  }
  func.func @transform_15(%arg0: i32) -> (i32, i32, i32) {
    %c0_i32 = arith.constant 0 : i32
    %c0_i32_0 = arith.constant 0 : i32
    %c0_i32_1 = arith.constant 0 : i32
    %c0_i32_2 = arith.constant 0 : i32
    return %c0_i32, %c0_i32_0, %c0_i32_1 : i32, i32, i32
  }
  func.func @transform_16(%arg0: i32) -> (i32, i32) {
    %c0_i32 = arith.constant 0 : i32
    %c0_i32_0 = arith.constant 0 : i32
    %c0_i32_1 = arith.constant 0 : i32
    return %c0_i32, %c0_i32_0 : i32, i32
  }
  func.func @transform_17(%arg0: i32) -> (i32, i32) {
    %c0_i32 = arith.constant 0 : i32
    %c0_i32_0 = arith.constant 0 : i32
    %c0_i32_1 = arith.constant 0 : i32
    return %c0_i32, %c0_i32_0 : i32, i32
  }
  func.func @transform_18(%arg0: i32) -> (i32, i32) {
    %c0_i32 = arith.constant 0 : i32
    %c0_i32_0 = arith.constant 0 : i32
    %c0_i32_1 = arith.constant 0 : i32
    return %c0_i32, %c0_i32_0 : i32, i32
  }
  func.func @transform_19(%arg0: i32) -> (i32, i32) {
    %c0_i32 = arith.constant 0 : i32
    %c0_i32_0 = arith.constant 0 : i32
    %c0_i32_1 = arith.constant 0 : i32
    return %c0_i32, %c0_i32_0 : i32, i32
  }
  func.func @transform_20(%arg0: i32) -> (i32, i32) {
    %c0_i32 = arith.constant 0 : i32
    %c0_i32_0 = arith.constant 0 : i32
    %c0_i32_1 = arith.constant 0 : i32
    return %c0_i32, %c0_i32_0 : i32, i32
  }
  func.func @transform_21(%arg0: i32) -> (i32, i32, i32) {
    %c0_i32 = arith.constant 0 : i32
    %c0_i32_0 = arith.constant 0 : i32
    %c0_i32_1 = arith.constant 0 : i32
    return %arg0, %c0_i32, %c0_i32_0 : i32, i32, i32
  }
}

</mosaic_0001>

<llo_original>
// kernel: _lambda_.3
$region0: #{_lambda_.3}
  #allocation0 [shape = 'u32[]', space=smem, size = 0x4, offset = 0x4, fixed_abs, tag = 'smem constant byte address 0x4 - core index']
  #allocation1 [shape = 'u32[72,128]{1,0:T(1,128)}', space=vmem, size = 0x9000, scoped, tag = 'internal scratch']
  #allocation2 [shape = 'f32[1,1]{1,0:T(1,128)S(1)}', space=vmem, size = 0x200, scoped, tag = 'scoped memory for _lambda_.3']
  %s0 = inlined_call_operand.vmem [shape: f32[4,10,32], index: 0, kind: input, shape index: {}]
  %s1 = inlined_call_operand.vmem [shape: f32[2,10,32], index: 1, kind: input, shape index: {}]
  %s2 = inlined_call_operand.vmem [shape: f32[10,1], index: 2, kind: input, shape index: {}]
  %s3 = inlined_call_operand.vmem [shape: f32[4,10,1], index: 3, kind: input, shape index: {}]
  %s4 = inlined_call_operand.vmem [shape: f32[2,1,32], index: 4, kind: input, shape index: {}]
  %s5 = inlined_call_operand.vmem [shape: f32[2,1,32], index: 5, kind: input, shape index: {}]
  %s6 = inlined_call_operand.vmem [shape: f32[2,1,32], index: 6, kind: input, shape index: {}]
  %s7 = inlined_call_operand.vmem [shape: f32[2,1,32], index: 7, kind: input, shape index: {}]
  %s8 = inlined_call_operand.vmem [shape: f32[2,32,96], index: 8, kind: input, shape index: {}]
  %s9 = inlined_call_operand.vmem [shape: f32[2,1,96], index: 9, kind: input, shape index: {}]
  %s10 = inlined_call_operand.vmem [shape: f32[2,32,32], index: 10, kind: input, shape index: {}]
  %s11 = inlined_call_operand.vmem [shape: f32[2,1,32], index: 11, kind: input, shape index: {}]
  %s12 = inlined_call_operand.vmem [shape: f32[2,32,128], index: 12, kind: input, shape index: {}]
  %s13 = inlined_call_operand.vmem [shape: f32[2,1,128], index: 13, kind: input, shape index: {}]
  %s14 = inlined_call_operand.vmem [shape: f32[2,128,32], index: 14, kind: input, shape index: {}]
  %s15 = inlined_call_operand.vmem [shape: f32[2,1,32], index: 15, kind: input, shape index: {}]
  %s16 = inlined_call_operand.vmem [shape: f32[1,32], index: 16, kind: input, shape index: {}]
  %s17 = inlined_call_operand.vmem [shape: f32[1,32], index: 17, kind: input, shape index: {}]
  %s18 = inlined_call_operand.vmem [shape: f32[32,32], index: 18, kind: input, shape index: {}]
  %s19 = inlined_call_operand.vmem [shape: f32[2,32], index: 19, kind: input, shape index: {}]
  %s20 = inlined_call_operand.<no memory space> [shape: f32[1,1], index: 20, kind: input, shape index: {}]
  %s21 = inlined_call_operand.vmem [shape: f32[4,1,2], index: 21, kind: output, shape index: {}]
  %s22 = sld [smem:[#allocation0]]
  $region117: #{_lambda_.3} parent=0
    _
  %s24 = ssub.s32 1, %s22
  %s25 = scalar_select 0, %s24, %s22
  %v26 = vstv %s20
  %27 = vst [vmem:[#allocation2] sm:$0x1] %v26
  loop: start=0, step=1, limit=6
  $region2: #{_lambda_.3} parent=0 // loop_pre_header
    _
  $region3: #{_lambda_.3} parent=0 // loop_header
    %s29 = sphi 0, %s33
    %p30 = scmp.ge.s32.totalorder %s29, 6
    %s39 = sphi 0, %s41
    %s42 = sphi 0, %s39
    %s43 = sphi 0, %s42
    %s59 = sphi 0, %s43
    %s63 = sphi 0, %s63
    %s65 = sphi 0, %s63
    %s66 = sphi 0, %s65
    %s80 = sphi 0, %s66
    %s84 = sphi 0, %s84
    %s86 = sphi 0, %s84
    %s87 = sphi 0, %s86
    %s101 = sphi 0, %s87
    %s107 = sphi 0, %s109
    %s110 = sphi 0, %s107
    %s111 = sphi 0, %s110
    %s127 = sphi 0, %s111
    %s131 = sphi 0, %s131
    %s133 = sphi 0, %s131
    %s134 = sphi 0, %s133
    %s148 = sphi 0, %s134
    %s152 = sphi 0, %s152
    %s154 = sphi 0, %s152
    %s155 = sphi 0, %s154
    %s169 = sphi 0, %s155
    %s173 = sphi 0, %s173
    %s175 = sphi 0, %s173
    %s176 = sphi 0, %s175
    %s190 = sphi 0, %s176
    %s194 = sphi 0, %s194
    %s196 = sphi 0, %s194
    %s197 = sphi 0, %s196
    %s211 = sphi 0, %s197
    %s215 = sphi 0, %s215
    %s217 = sphi 0, %s215
    %s218 = sphi 0, %s217
    %s232 = sphi 0, %s218
    %s236 = sphi 0, %s236
    %s238 = sphi 0, %s236
    %s239 = sphi 0, %s238
    %s253 = sphi 0, %s239
    %s257 = sphi 0, %s257
    %s259 = sphi 0, %s257
    %s260 = sphi 0, %s259
    %s274 = sphi 0, %s260
    %s278 = sphi 0, %s278
    %s280 = sphi 0, %s278
    %s281 = sphi 0, %s280
    %s295 = sphi 0, %s281
    %s299 = sphi 0, %s299
    %s301 = sphi 0, %s299
    %s302 = sphi 0, %s301
    %s316 = sphi 0, %s302
    %s320 = sphi 0, %s320
    %s322 = sphi 0, %s320
    %s323 = sphi 0, %s322
    %s337 = sphi 0, %s323
    %s341 = sphi 0, %s341
    %s343 = sphi 0, %s341
    %s344 = sphi 0, %s343
    %s358 = sphi 0, %s344
    %s362 = sphi 0, %s362
    %s364 = sphi 0, %s362
    %s365 = sphi 0, %s364
    %s379 = sphi 0, %s365
    %s383 = sphi 0, %s383
    %s385 = sphi 0, %s383
    %s386 = sphi 0, %s385
    %s400 = sphi 0, %s386
    %s404 = sphi 0, %s404
    %s406 = sphi 0, %s404
    %s407 = sphi 0, %s406
    %s421 = sphi 0, %s407
    %s425 = sphi 0, %s425
    %s427 = sphi 0, %s425
    %s428 = sphi 0, %s427
    %s442 = sphi 0, %s428
    %s446 = sphi 0, %s446
    %s448 = sphi 0, %s446
    %s449 = sphi 0, %s448
    %s463 = sphi 0, %s449
    %s467 = sphi 0, %s467
    %s469 = sphi 0, %s467
    %s470 = sphi 0, %s469
    %s484 = sphi 0, %s470
    %s490 = sphi 0, %s492
    %s493 = sphi 0, %s490
    %s494 = sphi 0, %s493
    %s510 = sphi 0, %s494
  $region4: #{_lambda_.3} parent=0 // loop_header_branch
    %32 = sbr.rel (%p30) target = $region8
  $region5: #{_lambda_.3} parent=0 // loop_body
    %s34 = ssub.s32 %s29, 1
    %s35 = ssub.s32 %s29, 2
    %s36 = sadd.s32 %s29, 1
    %s37 = ssub.s32 %s29, %s36
    %p38 = scmp.eq.s32.totalorder %s37, 0
    %s40 = sadd.s32 %s39, 1
    %s41 = scalar_select %p38, %s39, %s40
    %p44 = pneg %p38
    %p45 = scmp.eq.s32.totalorder %s29, 3
    %p46 = por %p44, %p45
    %p47 = scmp.ne.s32.totalorder %s39, %s42
    %p48 = scmp.eq.s32.totalorder %s29, 0
    %p49 = por %p47, %p48
    %p50 = scmp.ne.s32.totalorder %s39, %s42
    %p51 = scmp.eq.s32.totalorder %s34, 3
    %p52 = por %p50, %p51
    %p53 = scmp.ne.s32.totalorder %s42, %s43
    %p54 = scmp.eq.s32.totalorder %s34, 0
    %p55 = por %p53, %p54
    %p56 = scmp.ne.s32.totalorder %s42, %s43
    %p57 = scmp.eq.s32.totalorder %s35, 3
    %p58 = por %p56, %p57
    %p60 = scmp.ne.s32.totalorder %s43, %s59
    %p61 = scmp.eq.s32.totalorder %s35, 0
    %p62 = por %p60, %p61
    %s64 = sadd.s32 %s63, 1
    %p67 = scmp.eq.s32.totalorder %s29, 3
    %p68 = scmp.ne.s32.totalorder %s63, %s65
    %p69 = scmp.eq.s32.totalorder %s29, 0
    %p70 = por %p68, %p69
    %p71 = scmp.ne.s32.totalorder %s63, %s65
    %p72 = scmp.eq.s32.totalorder %s34, 3
    %p73 = por %p71, %p72
    %p74 = scmp.ne.s32.totalorder %s65, %s66
    %p75 = scmp.eq.s32.totalorder %s34, 0
    %p76 = por %p74, %p75
    %p77 = scmp.ne.s32.totalorder %s65, %s66
    %p78 = scmp.eq.s32.totalorder %s35, 3
    %p79 = por %p77, %p78
    %p81 = scmp.ne.s32.totalorder %s66, %s80
    %p82 = scmp.eq.s32.totalorder %s35, 0
    %p83 = por %p81, %p82
    %s85 = sadd.s32 %s84, 1
    %p88 = scmp.eq.s32.totalorder %s29, 3
    %p89 = scmp.ne.s32.totalorder %s84, %s86
    %p90 = scmp.eq.s32.totalorder %s29, 0
    %p91 = por %p89, %p90
    %p92 = scmp.ne.s32.totalorder %s84, %s86
    %p93 = scmp.eq.s32.totalorder %s34, 3
    %p94 = por %p92, %p93
    %p95 = scmp.ne.s32.totalorder %s86, %s87
    %p96 = scmp.eq.s32.totalorder %s34, 0
    %p97 = por %p95, %p96
    %p98 = scmp.ne.s32.totalorder %s86, %s87
    %p99 = scmp.eq.s32.totalorder %s35, 3
    %p100 = por %p98, %p99
    %p102 = scmp.ne.s32.totalorder %s87, %s101
    %p103 = scmp.eq.s32.totalorder %s35, 0
    %p104 = por %p102, %p103
    %s105 = ssub.s32 %s29, %s36
    %p106 = scmp.eq.s32.totalorder %s105, 0
    %s108 = sadd.s32 %s107, 1
    %s109 = scalar_select %p106, %s107, %s108
    %p112 = pneg %p106
    %p113 = scmp.eq.s32.totalorder %s29, 3
    %p114 = por %p112, %p113
    %p115 = scmp.ne.s32.totalorder %s107, %s110
    %p116 = scmp.eq.s32.totalorder %s29, 0
    %p117 = por %p115, %p116
    %p118 = scmp.ne.s32.totalorder %s107, %s110
    %p119 = scmp.eq.s32.totalorder %s34, 3
    %p120 = por %p118, %p119
    %p121 = scmp.ne.s32.totalorder %s110, %s111
    %p122 = scmp.eq.s32.totalorder %s34, 0
    %p123 = por %p121, %p122
    %p124 = scmp.ne.s32.totalorder %s110, %s111
    %p125 = scmp.eq.s32.totalorder %s35, 3
    %p126 = por %p124, %p125
    %p128 = scmp.ne.s32.totalorder %s111, %s127
    %p129 = scmp.eq.s32.totalorder %s35, 0
    %p130 = por %p128, %p129
    %s132 = sadd.s32 %s131, 1
    %p135 = scmp.eq.s32.totalorder %s29, 3
    %p136 = scmp.ne.s32.totalorder %s131, %s133
    %p137 = scmp.eq.s32.totalorder %s29, 0
    %p138 = por %p136, %p137
    %p139 = scmp.ne.s32.totalorder %s131, %s133
    %p140 = scmp.eq.s32.totalorder %s34, 3
    %p141 = por %p139, %p140
    %p142 = scmp.ne.s32.totalorder %s133, %s134
    %p143 = scmp.eq.s32.totalorder %s34, 0
    %p144 = por %p142, %p143
    %p145 = scmp.ne.s32.totalorder %s133, %s134
    %p146 = scmp.eq.s32.totalorder %s35, 3
    %p147 = por %p145, %p146
    %p149 = scmp.ne.s32.totalorder %s134, %s148
    %p150 = scmp.eq.s32.totalorder %s35, 0
    %p151 = por %p149, %p150
    %s153 = sadd.s32 %s152, 1
    %p156 = scmp.eq.s32.totalorder %s29, 3
    %p157 = scmp.ne.s32.totalorder %s152, %s154
    %p158 = scmp.eq.s32.totalorder %s29, 0
    %p159 = por %p157, %p158
    %p160 = scmp.ne.s32.totalorder %s152, %s154
    %p161 = scmp.eq.s32.totalorder %s34, 3
    %p162 = por %p160, %p161
    %p163 = scmp.ne.s32.totalorder %s154, %s155
    %p164 = scmp.eq.s32.totalorder %s34, 0
    %p165 = por %p163, %p164
    %p166 = scmp.ne.s32.totalorder %s154, %s155
    %p167 = scmp.eq.s32.totalorder %s35, 3
    %p168 = por %p166, %p167
    %p170 = scmp.ne.s32.totalorder %s155, %s169
    %p171 = scmp.eq.s32.totalorder %s35, 0
    %p172 = por %p170, %p171
    %s174 = sadd.s32 %s173, 1
    %p177 = scmp.eq.s32.totalorder %s29, 3
    %p178 = scmp.ne.s32.totalorder %s173, %s175
    %p179 = scmp.eq.s32.totalorder %s29, 0
    %p180 = por %p178, %p179
    %p181 = scmp.ne.s32.totalorder %s173, %s175
    %p182 = scmp.eq.s32.totalorder %s34, 3
    %p183 = por %p181, %p182
    %p184 = scmp.ne.s32.totalorder %s175, %s176
    %p185 = scmp.eq.s32.totalorder %s34, 0
    %p186 = por %p184, %p185
    %p187 = scmp.ne.s32.totalorder %s175, %s176
    %p188 = scmp.eq.s32.totalorder %s35, 3
    %p189 = por %p187, %p188
    %p191 = scmp.ne.s32.totalorder %s176, %s190
    %p192 = scmp.eq.s32.totalorder %s35, 0
    %p193 = por %p191, %p192
    %s195 = sadd.s32 %s194, 1
    %p198 = scmp.eq.s32.totalorder %s29, 3
    %p199 = scmp.ne.s32.totalorder %s194, %s196
    %p200 = scmp.eq.s32.totalorder %s29, 0
    %p201 = por %p199, %p200
    %p202 = scmp.ne.s32.totalorder %s194, %s196
    %p203 = scmp.eq.s32.totalorder %s34, 3
    %p204 = por %p202, %p203
    %p205 = scmp.ne.s32.totalorder %s196, %s197
    %p206 = scmp.eq.s32.totalorder %s34, 0
    %p207 = por %p205, %p206
    %p208 = scmp.ne.s32.totalorder %s196, %s197
    %p209 = scmp.eq.s32.totalorder %s35, 3
    %p210 = por %p208, %p209
    %p212 = scmp.ne.s32.totalorder %s197, %s211
    %p213 = scmp.eq.s32.totalorder %s35, 0
    %p214 = por %p212, %p213
    %s216 = sadd.s32 %s215, 1
    %p219 = scmp.eq.s32.totalorder %s29, 3
    %p220 = scmp.ne.s32.totalorder %s215, %s217
    %p221 = scmp.eq.s32.totalorder %s29, 0
    %p222 = por %p220, %p221
    %p223 = scmp.ne.s32.totalorder %s215, %s217
    %p224 = scmp.eq.s32.totalorder %s34, 3
    %p225 = por %p223, %p224
    %p226 = scmp.ne.s32.totalorder %s217, %s218
    %p227 = scmp.eq.s32.totalorder %s34, 0
    %p228 = por %p226, %p227
    %p229 = scmp.ne.s32.totalorder %s217, %s218
    %p230 = scmp.eq.s32.totalorder %s35, 3
    %p231 = por %p229, %p230
    %p233 = scmp.ne.s32.totalorder %s218, %s232
    %p234 = scmp.eq.s32.totalorder %s35, 0
    %p235 = por %p233, %p234
    %s237 = sadd.s32 %s236, 1
    %p240 = scmp.eq.s32.totalorder %s29, 3
    %p241 = scmp.ne.s32.totalorder %s236, %s238
    %p242 = scmp.eq.s32.totalorder %s29, 0
    %p243 = por %p241, %p242
    %p244 = scmp.ne.s32.totalorder %s236, %s238
    %p245 = scmp.eq.s32.totalorder %s34, 3
    %p246 = por %p244, %p245
    %p247 = scmp.ne.s32.totalorder %s238, %s239
    %p248 = scmp.eq.s32.totalorder %s34, 0
    %p249 = por %p247, %p248
    %p250 = scmp.ne.s32.totalorder %s238, %s239
    %p251 = scmp.eq.s32.totalorder %s35, 3
    %p252 = por %p250, %p251
    %p254 = scmp.ne.s32.totalorder %s239, %s253
    %p255 = scmp.eq.s32.totalorder %s35, 0
    %p256 = por %p254, %p255
    %s258 = sadd.s32 %s257, 1
    %p261 = scmp.eq.s32.totalorder %s29, 3
    %p262 = scmp.ne.s32.totalorder %s257, %s259
    %p263 = scmp.eq.s32.totalorder %s29, 0
    %p264 = por %p262, %p263
    %p265 = scmp.ne.s32.totalorder %s257, %s259
    %p266 = scmp.eq.s32.totalorder %s34, 3
    %p267 = por %p265, %p266
    %p268 = scmp.ne.s32.totalorder %s259, %s260
    %p269 = scmp.eq.s32.totalorder %s34, 0
    %p270 = por %p268, %p269
    %p271 = scmp.ne.s32.totalorder %s259, %s260
    %p272 = scmp.eq.s32.totalorder %s35, 3
    %p273 = por %p271, %p272
    %p275 = scmp.ne.s32.totalorder %s260, %s274
    %p276 = scmp.eq.s32.totalorder %s35, 0
    %p277 = por %p275, %p276
    %s279 = sadd.s32 %s278, 1
    %p282 = scmp.eq.s32.totalorder %s29, 3
    %p283 = scmp.ne.s32.totalorder %s278, %s280
    %p284 = scmp.eq.s32.totalorder %s29, 0
    %p285 = por %p283, %p284
    %p286 = scmp.ne.s32.totalorder %s278, %s280
    %p287 = scmp.eq.s32.totalorder %s34, 3
    %p288 = por %p286, %p287
    %p289 = scmp.ne.s32.totalorder %s280, %s281
    %p290 = scmp.eq.s32.totalorder %s34, 0
    %p291 = por %p289, %p290
    %p292 = scmp.ne.s32.totalorder %s280, %s281
    %p293 = scmp.eq.s32.totalorder %s35, 3
    %p294 = por %p292, %p293
    %p296 = scmp.ne.s32.totalorder %s281, %s295
    %p297 = scmp.eq.s32.totalorder %s35, 0
    %p298 = por %p296, %p297
    %s300 = sadd.s32 %s299, 1
    %p303 = scmp.eq.s32.totalorder %s29, 3
    %p304 = scmp.ne.s32.totalorder %s299, %s301
    %p305 = scmp.eq.s32.totalorder %s29, 0
    %p306 = por %p304, %p305
    %p307 = scmp.ne.s32.totalorder %s299, %s301
    %p308 = scmp.eq.s32.totalorder %s34, 3
    %p309 = por %p307, %p308
    %p310 = scmp.ne.s32.totalorder %s301, %s302
    %p311 = scmp.eq.s32.totalorder %s34, 0
    %p312 = por %p310, %p311
    %p313 = scmp.ne.s32.totalorder %s301, %s302
    %p314 = scmp.eq.s32.totalorder %s35, 3
    %p315 = por %p313, %p314
    %p317 = scmp.ne.s32.totalorder %s302, %s316
    %p318 = scmp.eq.s32.totalorder %s35, 0
    %p319 = por %p317, %p318
    %s321 = sadd.s32 %s320, 1
    %p324 = scmp.eq.s32.totalorder %s29, 3
    %p325 = scmp.ne.s32.totalorder %s320, %s322
    %p326 = scmp.eq.s32.totalorder %s29, 0
    %p327 = por %p325, %p326
    %p328 = scmp.ne.s32.totalorder %s320, %s322
    %p329 = scmp.eq.s32.totalorder %s34, 3
    %p330 = por %p328, %p329
    %p331 = scmp.ne.s32.totalorder %s322, %s323
    %p332 = scmp.eq.s32.totalorder %s34, 0
    %p333 = por %p331, %p332
    %p334 = scmp.ne.s32.totalorder %s322, %s323
    %p335 = scmp.eq.s32.totalorder %s35, 3
    %p336 = por %p334, %p335
    %p338 = scmp.ne.s32.totalorder %s323, %s337
    %p339 = scmp.eq.s32.totalorder %s35, 0
    %p340 = por %p338, %p339
    %s342 = sadd.s32 %s341, 1
    %p345 = scmp.eq.s32.totalorder %s29, 3
    %p346 = scmp.ne.s32.totalorder %s341, %s343
    %p347 = scmp.eq.s32.totalorder %s29, 0
    %p348 = por %p346, %p347
    %p349 = scmp.ne.s32.totalorder %s341, %s343
    %p350 = scmp.eq.s32.totalorder %s34, 3
    %p351 = por %p349, %p350
    %p352 = scmp.ne.s32.totalorder %s343, %s344
    %p353 = scmp.eq.s32.totalorder %s34, 0
    %p354 = por %p352, %p353
    %p355 = scmp.ne.s32.totalorder %s343, %s344
    %p356 = scmp.eq.s32.totalorder %s35, 3
    %p357 = por %p355, %p356
    %p359 = scmp.ne.s32.totalorder %s344, %s358
    %p360 = scmp.eq.s32.totalorder %s35, 0
    %p361 = por %p359, %p360
    %s363 = sadd.s32 %s362, 1
    %p366 = scmp.eq.s32.totalorder %s29, 3
    %p367 = scmp.ne.s32.totalorder %s362, %s364
    %p368 = scmp.eq.s32.totalorder %s29, 0
    %p369 = por %p367, %p368
    %p370 = scmp.ne.s32.totalorder %s362, %s364
    %p371 = scmp.eq.s32.totalorder %s34, 3
    %p372 = por %p370, %p371
    %p373 = scmp.ne.s32.totalorder %s364, %s365
    %p374 = scmp.eq.s32.totalorder %s34, 0
    %p375 = por %p373, %p374
    %p376 = scmp.ne.s32.totalorder %s364, %s365
    %p377 = scmp.eq.s32.totalorder %s35, 3
    %p378 = por %p376, %p377
    %p380 = scmp.ne.s32.totalorder %s365, %s379
    %p381 = scmp.eq.s32.totalorder %s35, 0
    %p382 = por %p380, %p381
    %s384 = sadd.s32 %s383, 1
    %p387 = scmp.eq.s32.totalorder %s29, 3
    %p388 = scmp.ne.s32.totalorder %s383, %s385
    %p389 = scmp.eq.s32.totalorder %s29, 0
    %p390 = por %p388, %p389
    %p391 = scmp.ne.s32.totalorder %s383, %s385
    %p392 = scmp.eq.s32.totalorder %s34, 3
    %p393 = por %p391, %p392
    %p394 = scmp.ne.s32.totalorder %s385, %s386
    %p395 = scmp.eq.s32.totalorder %s34, 0
    %p396 = por %p394, %p395
    %p397 = scmp.ne.s32.totalorder %s385, %s386
    %p398 = scmp.eq.s32.totalorder %s35, 3
    %p399 = por %p397, %p398
    %p401 = scmp.ne.s32.totalorder %s386, %s400
    %p402 = scmp.eq.s32.totalorder %s35, 0
    %p403 = por %p401, %p402
    %s405 = sadd.s32 %s404, 1
    %p408 = scmp.eq.s32.totalorder %s29, 3
    %p409 = scmp.ne.s32.totalorder %s404, %s406
    %p410 = scmp.eq.s32.totalorder %s29, 0
    %p411 = por %p409, %p410
    %p412 = scmp.ne.s32.totalorder %s404, %s406
    %p413 = scmp.eq.s32.totalorder %s34, 3
    %p414 = por %p412, %p413
    %p415 = scmp.ne.s32.totalorder %s406, %s407
    %p416 = scmp.eq.s32.totalorder %s34, 0
    %p417 = por %p415, %p416
    %p418 = scmp.ne.s32.totalorder %s406, %s407
    %p419 = scmp.eq.s32.totalorder %s35, 3
    %p420 = por %p418, %p419
    %p422 = scmp.ne.s32.totalorder %s407, %s421
    %p423 = scmp.eq.s32.totalorder %s35, 0
    %p424 = por %p422, %p423
    %s426 = sadd.s32 %s425, 1
    %p429 = scmp.eq.s32.totalorder %s29, 3
    %p430 = scmp.ne.s32.totalorder %s425, %s427
    %p431 = scmp.eq.s32.totalorder %s29, 0
    %p432 = por %p430, %p431
    %p433 = scmp.ne.s32.totalorder %s425, %s427
    %p434 = scmp.eq.s32.totalorder %s34, 3
    %p435 = por %p433, %p434
    %p436 = scmp.ne.s32.totalorder %s427, %s428
    %p437 = scmp.eq.s32.totalorder %s34, 0
    %p438 = por %p436, %p437
    %p439 = scmp.ne.s32.totalorder %s427, %s428
    %p440 = scmp.eq.s32.totalorder %s35, 3
    %p441 = por %p439, %p440
    %p443 = scmp.ne.s32.totalorder %s428, %s442
    %p444 = scmp.eq.s32.totalorder %s35, 0
    %p445 = por %p443, %p444
    %s447 = sadd.s32 %s446, 1
    %p450 = scmp.eq.s32.totalorder %s29, 3
    %p451 = scmp.ne.s32.totalorder %s446, %s448
    %p452 = scmp.eq.s32.totalorder %s29, 0
    %p453 = por %p451, %p452
    %p454 = scmp.ne.s32.totalorder %s446, %s448
    %p455 = scmp.eq.s32.totalorder %s34, 3
    %p456 = por %p454, %p455
    %p457 = scmp.ne.s32.totalorder %s448, %s449
    %p458 = scmp.eq.s32.totalorder %s34, 0
    %p459 = por %p457, %p458
    %p460 = scmp.ne.s32.totalorder %s448, %s449
    %p461 = scmp.eq.s32.totalorder %s35, 3
    %p462 = por %p460, %p461
    %p464 = scmp.ne.s32.totalorder %s449, %s463
    %p465 = scmp.eq.s32.totalorder %s35, 0
    %p466 = por %p464, %p465
    %s468 = sadd.s32 %s467, 1
    %p471 = scmp.eq.s32.totalorder %s29, 3
    %p472 = scmp.ne.s32.totalorder %s467, %s469
    %p473 = scmp.eq.s32.totalorder %s29, 0
    %p474 = por %p472, %p473
    %p475 = scmp.ne.s32.totalorder %s467, %s469
    %p476 = scmp.eq.s32.totalorder %s34, 3
    %p477 = por %p475, %p476
    %p478 = scmp.ne.s32.totalorder %s469, %s470
    %p479 = scmp.eq.s32.totalorder %s34, 0
    %p480 = por %p478, %p479
    %p481 = scmp.ne.s32.totalorder %s469, %s470
    %p482 = scmp.eq.s32.totalorder %s35, 3
    %p483 = por %p481, %p482
    %p485 = scmp.ne.s32.totalorder %s470, %s484
    %p486 = scmp.eq.s32.totalorder %s35, 0
    %p487 = por %p485, %p486
    %s488 = ssub.s32 %s29, %s36
    %p489 = scmp.eq.s32.totalorder %s488, 0
    %s491 = sadd.s32 %s490, 1
    %s492 = scalar_select %p489, %s490, %s491
    %p495 = pneg %p489
    %p496 = scmp.eq.s32.totalorder %s29, 3
    %p497 = por %p495, %p496
    %p498 = scmp.ne.s32.totalorder %s490, %s493
    %p499 = scmp.eq.s32.totalorder %s29, 0
    %p500 = por %p498, %p499
    %p501 = scmp.ne.s32.totalorder %s490, %s493
    %p502 = scmp.eq.s32.totalorder %s34, 3
    %p503 = por %p501, %p502
    %p504 = scmp.ne.s32.totalorder %s493, %s494
    %p505 = scmp.eq.s32.totalorder %s34, 0
    %p506 = por %p504, %p505
    %p507 = scmp.ne.s32.totalorder %s493, %s494
    %p508 = scmp.eq.s32.totalorder %s35, 3
    %p509 = por %p507, %p508
    %p511 = scmp.ne.s32.totalorder %s494, %s510
    %p512 = scmp.eq.s32.totalorder %s35, 0
    %p513 = por %p511, %p512
    %p514 = scmp.le.s32.totalorder 1, %s29
    %p515 = scmp.lt.s32.totalorder %s29, 5
    %p516 = pnand %p514, %p515
    %p517 = pneg %p516
    // Predicated region
    $region9: #{_lambda_.3} parent=5 // pred_check
      _
    $region10: #{_lambda_.3} parent=5 // pred_check_branch
      %519 = sbr.rel (%p516) target = $region12
    $region11: #{_lambda_.3} parent=5 // pred_region
      %s520 = ssub.s32 %s29, 1
      // Predicated region
      $region13: #{_lambda_.3} parent=11 // pred_check
        %p521 = pneg %p76
      $region14: #{_lambda_.3} parent=11 // pred_check_branch
        %523 = sbr.rel (%p521) target = $region16
      $region15: #{_lambda_.3} parent=11 // pred_region
        _
      $region16: #{_lambda_.3} parent=11 // pred_fallthru
        _
      // Predicated region
      $region17: #{_lambda_.3} parent=11 // pred_check
        %p524 = pneg %p97
      $region18: #{_lambda_.3} parent=11 // pred_check_branch
        %526 = sbr.rel (%p524) target = $region20
      $region19: #{_lambda_.3} parent=11 // pred_region
        _
      $region20: #{_lambda_.3} parent=11 // pred_fallthru
        _
      // Predicated region
      $region21: #{_lambda_.3} parent=11 // pred_check
        %p527 = pneg %p144
      $region22: #{_lambda_.3} parent=11 // pred_check_branch
        %529 = sbr.rel (%p527) target = $region24
      $region23: #{_lambda_.3} parent=11 // pred_region
        _
      $region24: #{_lambda_.3} parent=11 // pred_fallthru
        _
      // Predicated region
      $region25: #{_lambda_.3} parent=11 // pred_check
        %p530 = pneg %p165
      $region26: #{_lambda_.3} parent=11 // pred_check_branch
        %532 = sbr.rel (%p530) target = $region28
      $region27: #{_lambda_.3} parent=11 // pred_region
        _
      $region28: #{_lambda_.3} parent=11 // pred_fallthru
        _
      // Predicated region
      $region29: #{_lambda_.3} parent=11 // pred_check
        %p533 = pneg %p186
      $region30: #{_lambda_.3} parent=11 // pred_check_branch
        %535 = sbr.rel (%p533) target = $region32
      $region31: #{_lambda_.3} parent=11 // pred_region
        _
      $region32: #{_lambda_.3} parent=11 // pred_fallthru
        _
      // Predicated region
      $region33: #{_lambda_.3} parent=11 // pred_check
        %p536 = pneg %p207
      $region34: #{_lambda_.3} parent=11 // pred_check_branch
        %538 = sbr.rel (%p536) target = $region36
      $region35: #{_lambda_.3} parent=11 // pred_region
        _
      $region36: #{_lambda_.3} parent=11 // pred_fallthru
        _
      // Predicated region
      $region37: #{_lambda_.3} parent=11 // pred_check
        %p539 = pneg %p228
      $region38: #{_lambda_.3} parent=11 // pred_check_branch
        %541 = sbr.rel (%p539) target = $region40
      $region39: #{_lambda_.3} parent=11 // pred_region
        _
      $region40: #{_lambda_.3} parent=11 // pred_fallthru
        _
      // Predicated region
      $region41: #{_lambda_.3} parent=11 // pred_check
        %p542 = pneg %p249
      $region42: #{_lambda_.3} parent=11 // pred_check_branch
        %544 = sbr.rel (%p542) target = $region44
      $region43: #{_lambda_.3} parent=11 // pred_region
        _
      $region44: #{_lambda_.3} parent=11 // pred_fallthru
        _
      // Predicated region
      $region45: #{_lambda_.3} parent=11 // pred_check
        %p545 = pneg %p270
      $region46: #{_lambda_.3} parent=11 // pred_check_branch
        %547 = sbr.rel (%p545) target = $region48
      $region47: #{_lambda_.3} parent=11 // pred_region
        _
      $region48: #{_lambda_.3} parent=11 // pred_fallthru
        _
      // Predicated region
      $region49: #{_lambda_.3} parent=11 // pred_check
        %p548 = pneg %p291
      $region50: #{_lambda_.3} parent=11 // pred_check_branch
        %550 = sbr.rel (%p548) target = $region52
      $region51: #{_lambda_.3} parent=11 // pred_region
        _
      $region52: #{_lambda_.3} parent=11 // pred_fallthru
        _
      // Predicated region
      $region53: #{_lambda_.3} parent=11 // pred_check
        %p551 = pneg %p312
      $region54: #{_lambda_.3} parent=11 // pred_check_branch
        %553 = sbr.rel (%p551) target = $region56
      $region55: #{_lambda_.3} parent=11 // pred_region
        _
      $region56: #{_lambda_.3} parent=11 // pred_fallthru
        _
      // Predicated region
      $region57: #{_lambda_.3} parent=11 // pred_check
        %p554 = pneg %p333
      $region58: #{_lambda_.3} parent=11 // pred_check_branch
        %556 = sbr.rel (%p554) target = $region60
      $region59: #{_lambda_.3} parent=11 // pred_region
        _
      $region60: #{_lambda_.3} parent=11 // pred_fallthru
        _
      // Predicated region
      $region61: #{_lambda_.3} parent=11 // pred_check
        %p557 = pneg %p354
      $region62: #{_lambda_.3} parent=11 // pred_check_branch
        %559 = sbr.rel (%p557) target = $region64
      $region63: #{_lambda_.3} parent=11 // pred_region
        _
      $region64: #{_lambda_.3} parent=11 // pred_fallthru
        _
      // Predicated region
      $region65: #{_lambda_.3} parent=11 // pred_check
        %p560 = pneg %p375
      $region66: #{_lambda_.3} parent=11 // pred_check_branch
        %562 = sbr.rel (%p560) target = $region68
      $region67: #{_lambda_.3} parent=11 // pred_region
        _
      $region68: #{_lambda_.3} parent=11 // pred_fallthru
        _
      // Predicated region
      $region69: #{_lambda_.3} parent=11 // pred_check
        %p563 = pneg %p396
      $region70: #{_lambda_.3} parent=11 // pred_check_branch
        %565 = sbr.rel (%p563) target = $region72
      $region71: #{_lambda_.3} parent=11 // pred_region
        _
      $region72: #{_lambda_.3} parent=11 // pred_fallthru
        _
      // Predicated region
      $region73: #{_lambda_.3} parent=11 // pred_check
        %p566 = pneg %p417
      $region74: #{_lambda_.3} parent=11 // pred_check_branch
        %568 = sbr.rel (%p566) target = $region76
      $region75: #{_lambda_.3} parent=11 // pred_region
        _
      $region76: #{_lambda_.3} parent=11 // pred_fallthru
        _
      // Predicated region
      $region77: #{_lambda_.3} parent=11 // pred_check
        %p569 = pneg %p438
      $region78: #{_lambda_.3} parent=11 // pred_check_branch
        %571 = sbr.rel (%p569) target = $region80
      $region79: #{_lambda_.3} parent=11 // pred_region
        _
      $region80: #{_lambda_.3} parent=11 // pred_fallthru
        _
      // Predicated region
      $region81: #{_lambda_.3} parent=11 // pred_check
        %p572 = pneg %p459
      $region82: #{_lambda_.3} parent=11 // pred_check_branch
        %574 = sbr.rel (%p572) target = $region84
      $region83: #{_lambda_.3} parent=11 // pred_region
        _
      $region84: #{_lambda_.3} parent=11 // pred_fallthru
        _
      // Predicated region
      $region85: #{_lambda_.3} parent=11 // pred_check
        %p575 = pneg %p480
      $region86: #{_lambda_.3} parent=11 // pred_check_branch
        %577 = sbr.rel (%p575) target = $region88
      $region87: #{_lambda_.3} parent=11 // pred_region
        _
      $region88: #{_lambda_.3} parent=11 // pred_fallthru
        _
    $region12: #{_lambda_.3} parent=5 // pred_fallthru
      _
    %p578 = scmp.lt.s32.totalorder %s29, 4
    // Predicated region
    $region89: #{_lambda_.3} parent=5 // pred_check
      %p579 = pneg %p578
    $region90: #{_lambda_.3} parent=5 // pred_check_branch
      %581 = sbr.rel (%p579) target = $region92
    $region91: #{_lambda_.3} parent=5 // pred_region
      // Predicated region
      $region93: #{_lambda_.3} parent=91 // pred_check
        %p582 = pneg %p49
      $region94: #{_lambda_.3} parent=91 // pred_check_branch
        %584 = sbr.rel (%p582) target = $region96
      $region95: #{_lambda_.3} parent=91 // pred_region
        %p585 = scmp.lt.s32.totalorder %s29, 3
        %s586 = scalar_select %p585, %s29, 3
        %s587 = smul.addr %s586, 2
        %s588 = smul.addr %s587, 8
        %s589 = scalar_lea.vmem %s0, %s588
      $region96: #{_lambda_.3} parent=91 // pred_fallthru
        _
      // Predicated region
      $region97: #{_lambda_.3} parent=91 // pred_check
        %p590 = pneg %p117
      $region98: #{_lambda_.3} parent=91 // pred_check_branch
        %592 = sbr.rel (%p590) target = $region100
      $region99: #{_lambda_.3} parent=91 // pred_region
        %p593 = scmp.lt.s32.totalorder %s29, 3
        %s594 = scalar_select %p593, %s29, 3
        %s595 = smul.addr %s594, 2
        %s596 = smul.addr %s595, 8
        %s597 = scalar_lea.vmem %s3, %s596
      $region100: #{_lambda_.3} parent=91 // pred_fallthru
        _
    $region92: #{_lambda_.3} parent=5 // pred_fallthru
      _
    %p598 = scmp.le.s32.totalorder 1, %s29
    %p599 = scmp.lt.s32.totalorder %s29, 5
    %p600 = pnand %p598, %p599
    %p601 = pneg %p600
    // Predicated region
    $region101: #{_lambda_.3} parent=5 // pred_check
      _
    $region102: #{_lambda_.3} parent=5 // pred_check_branch
      %603 = sbr.rel (%p600) target = $region104
    $region103: #{_lambda_.3} parent=5 // pred_region
      %s604 = ssub.s32 %s29, 1
      %p605 = scmp.lt.s32.totalorder %s34, 3
      %s606 = scalar_select %p605, %s34, 3
      %s607 = smul.addr %s606, 2
      %s608 = smul.addr %s607, 8
      %s609 = scalar_lea.vmem %s0, %s608
      %p610 = pneg %p55
      %p611 = pneg %p52
      %p612 = pneg %p76
      %p613 = pneg %p73
      %p614 = pneg %p97
      %p615 = pneg %p94
      %p616 = scmp.lt.s32.totalorder %s34, 3
      %s617 = scalar_select %p616, %s34, 3
      %s618 = smul.addr %s617, 2
      %s619 = smul.addr %s618, 8
      %s620 = scalar_lea.vmem %s3, %s619
      %p621 = pneg %p123
      %p622 = pneg %p120
      %p623 = pneg %p144
      %p624 = pneg %p141
      %p625 = pneg %p165
      %p626 = pneg %p162
      %p627 = pneg %p186
      %p628 = pneg %p183
      %p629 = pneg %p207
      %p630 = pneg %p204
      %p631 = pneg %p228
      %p632 = pneg %p225
      %p633 = pneg %p249
      %p634 = pneg %p246
      %p635 = pneg %p270
      %p636 = pneg %p267
      %p637 = pneg %p291
      %p638 = pneg %p288
      %p639 = pneg %p312
      %p640 = pneg %p309
      %p641 = pneg %p333
      %p642 = pneg %p330
      %p643 = pneg %p354
      %p644 = pneg %p351
      %p645 = pneg %p375
      %p646 = pneg %p372
      %p647 = pneg %p396
      %p648 = pneg %p393
      %p649 = pneg %p417
      %p650 = pneg %p414
      %p651 = pneg %p438
      %p652 = pneg %p435
      %p653 = pneg %p459
      %p654 = pneg %p456
      %p655 = pneg %p480
      %p656 = pneg %p477
      %p657 = pneg %p506
      %p658 = pneg %p503
      %p659 = scmp.lt.s32.totalorder %s34, 3
      %s660 = scalar_select %p659, %s34, 3
      %s661 = scalar_lea.vmem %s21, %s660
      %p662 = scmp.lt.s32.totalorder %s34, 3
      %s663 = scalar_select %p662, %s34, 3
      %s664 = smul.addr %s663, 2
      %s665 = smul.addr %s664, 8
      %s666 = scalar_lea.vmem %s0, %s665
      %p667 = scmp.lt.s32.totalorder %s34, 3
      %s668 = scalar_select %p667, %s34, 3
      %s669 = smul.addr %s668, 2
      %s670 = smul.addr %s669, 8
      %s671 = scalar_lea.vmem %s3, %s670
      %p672 = scmp.lt.s32.totalorder %s34, 3
      %s673 = scalar_select %p672, %s34, 3
      %s674 = scalar_lea.vmem %s21, %s673
      %v676 = vld [vmem:[%s666] sm:$0xff]
      %v677 = vld [vmem:[%s666 + $0x8] sm:$0x3]
      %v678 = vlaneseq
      %v679 = vshrl.u32 %v678, 7
      %v680 = vadd.s32 %v679, 8
      %v681 = vlaneseq
      %v682 = vand.u32 %v681, 127
      %vm683 = vcmp.ge.s32.totalorder %v679, %v682
      %vm684 = vcmp.ge.s32.totalorder %v680, %v682
      %v685 = vsel %vm683, 0.0, -1e+09
      %v686 = vsel %vm684, 0.0, -1e+09
      %v687 = vld [vmem:[%s4] sm:$0x1]
      %v688 = vld [vmem:[%s5] sm:$0x1]
      %vm689 = vcmask 261120
      %v690 = vsel %vm689, %v676, 0.0
      %691 = vadd.xlane.f32.xlu0 %v690
      %v692 = vpop.xlane.xlu0 %691
      %vm693 = vcmask 254976
      %v694 = vsel %vm693, %v677, 0.0
      %695 = vadd.xlane.f32.xlu0 %v694
      %v696 = vpop.xlane.xlu0 %695
      %v697 = vrcp.pop 32.0
      %v698 = vmul.f32 32.0, %v697
      %v699 = vsub.f32 1.0, %v698
      %v700 = vmul.f32 %v697, %v699
      %v701 = vadd.f32 %v697, %v700
      %vm702 = vweird.f32 %v697
      %v703 = vsel %vm702, %v697, %v701
      %v704 = vmul.f32 %v692, %v703
      %v705 = vmul.f32 %v696, %v703
      %v706 = vsub.f32 %v676, %v704
      %v707 = vsub.f32 %v677, %v705
      %v708 = vmul.f32 %v706, %v706
      %v709 = vmul.f32 %v707, %v707
      %v710 = vsel %vm689, %v708, 0.0
      %711 = vadd.xlane.f32.xlu0 %v710
      %v712 = vpop.xlane.xlu0 %711
      %v713 = vsel %vm693, %v709, 0.0
      %714 = vadd.xlane.f32.xlu0 %v713
      %v715 = vpop.xlane.xlu0 %714
      %v716 = vmul.f32 %v712, %v703
      %v717 = vmul.f32 %v715, %v703
      %v718 = vadd.f32 %v716, 1e-05
      %v719 = vadd.f32 %v717, 1e-05
      %v720 = vrsqrt.pop %v718
      %v721 = vmul.f32 %v720, %v718
      %v722 = vmul.f32 %v721, %v720
      %v723 = vmul.f32 0.5, %v722
      %v724 = vsub.f32 1.5, %v723
      %v725 = vmul.f32 %v720, %v724
      %vm726 = vweird.f32 %v718
      %vm727 = vweird.f32 %v720
      %vm728 = vmor %vm726, %vm727
      %v729 = vsel %vm728, %v720, %v725
      %v730 = vrsqrt.pop %v719
      %v731 = vmul.f32 %v730, %v719
      %v732 = vmul.f32 %v731, %v730
      %v733 = vmul.f32 0.5, %v732
      %v734 = vsub.f32 1.5, %v733
      %v735 = vmul.f32 %v730, %v734
      %vm736 = vweird.f32 %v719
      %vm737 = vweird.f32 %v730
      %vm738 = vmor %vm736, %vm737
      %v739 = vsel %vm738, %v730, %v735
      %v740 = vmul.f32 %v706, %v729
      %v741 = vmul.f32 %v707, %v739
      %v743 = vperm.slane %v687, 0
      %v745 = vmul.f32 %v740, %v743
      %v746 = vmul.f32 %v741, %v743
      %v748 = vperm.slane %v688, 0
      %v750 = vadd.f32 %v745, %v748
      %v751 = vadd.f32 %v746, %v748
      %v752 = vld [vmem:[%s8] sm:$0xff]
      %v753 = vld [vmem:[%s8 + $0x8] sm:$0xff]
      %v754 = vld [vmem:[%s8 + $0x10] sm:$0xff]
      %v755 = vld [vmem:[%s8 + $0x18] sm:$0xff]
      %v756 = vpack.c.bf16 %v751, %v750
      %v757 = vpack.c.bf16 %v753, %v752
      %v758 = vpack.c.bf16 %v755, %v754
      %v759 = vld [vmem:[%s9] sm:$0x1]
      %v761 = vperm.slane %v759, 0
      %v764 = vsel %vm689, %v756, 0
      %766 = vmatpush.bf16.msra.mxu0 0
      %767 = vmatpush.bf16.msra.mxu0 0
      %768 = vmatpush.bf16.msra.mxu0 0
      %769 = vmatpush.bf16.msra.mxu0 0
      %770 = vmatpush.bf16.msra.mxu0 0
      %771 = vmatpush.bf16.msra.mxu0 0
      %772 = vmatpush.bf16.msra.mxu0 %v758
      %773 = vmatpush.bf16.msra.mxu0 %v757
      %774 = vmatmul.bf16.gmra.mxu0 %v764
      %v775 = vpop.f32.mrf.mxu0
      %v776 = vadd.f32 %v761, %v775
      %v777 = vpop.f32.mrf.mxu0
      %v778 = vadd.f32 %v761, %v777
      %779 = vdwg.mxu0
      %v780 = vpack.c.bf16 %v778, %v776
      %782 = vrot.lane.b32.xlu0 %v780, 96
      %v783 = vpop.permute.xlu0 %782
      %vm784 = vcmask 130048
      %v786 = vsel %vm784, %v780, 0
      %v789 = vsel %vm784, %v783, 0
      %791 = vmatpush.bf16.xpose.msra.mxu0 0
      %792 = vmatpush.bf16.xpose.msra.mxu0 0
      %793 = vmatpush.bf16.xpose.msra.mxu0 0
      %794 = vmatpush.bf16.xpose.msra.mxu0 0
      %795 = vmatpush.bf16.xpose.msra.mxu0 0
      %796 = vmatpush.bf16.xpose.msra.mxu0 0
      %797 = vmatpush.bf16.xpose.msra.mxu0 0
      %798 = vmatpush.bf16.xpose.msra.mxu0 %v789
      %799 = vmatmul.bf16.gmra.mxu0 %v786
      %v800 = vpop.f32.mrf.mxu0
      %v801 = vadd.f32 0.0, %v800
      %v802 = vpop.f32.mrf.mxu0
      %v803 = vadd.f32 0.0, %v802
      %804 = vdwg.mxu0
      %v805 = vmul.f32 %v801, 0.25
      %v806 = vmul.f32 %v803, 0.25
      %v807 = vadd.f32 %v805, %v685
      %v808 = vadd.f32 %v806, %v686
      %vm809 = vcmask 80896
      %v810 = vsel %vm809, %v807, -inf
      %811 = vmax.xlane.f32.xlu0 %v810
      %v812 = vpop.xlane.xlu0 %811
      %vm813 = vcmask 74752
      %v814 = vsel %vm813, %v808, -inf
      %815 = vmax.xlane.f32.xlu0 %v814
      %v816 = vpop.xlane.xlu0 %815
      %v817 = vsub.f32 %v807, %v812
      %v818 = vsub.f32 %v808, %v816
      %v819 = vmul.f32 %v817, 1.442695
      %v820 = vpow.pop %v819
      %v821 = vmul.f32 %v818, 1.442695
      %v822 = vpow.pop %v821
      %v823 = vsel %vm809, %v820, 0.0
      %824 = vadd.xlane.f32.xlu0 %v823
      %v825 = vpop.xlane.xlu0 %824
      %v826 = vsel %vm813, %v822, 0.0
      %827 = vadd.xlane.f32.xlu0 %v826
      %v828 = vpop.xlane.xlu0 %827
      %v829 = vrcp.pop %v825
      %v830 = vrcp.pop %v828
      %v831 = vmul.f32 %v820, %v829
      %v832 = vmul.f32 %v822, %v830
      %v833 = vpack.c.bf16 %v832, %v831
      %834 = vrot.lane.b32.xlu0 %v780, 64
      %v835 = vpop.permute.xlu0 %834
      %v837 = vsel %vm809, %v833, 0
      %vm839 = vcmask 1044480
      %v841 = vsel %vm839, %v835, 0
      %843 = vmatpush.bf16.msra.mxu0 0
      %844 = vmatpush.bf16.msra.mxu0 0
      %845 = vmatpush.bf16.msra.mxu0 0
      %846 = vmatpush.bf16.msra.mxu0 0
      %847 = vmatpush.bf16.msra.mxu0 0
      %848 = vmatpush.bf16.msra.mxu0 0
      %849 = vmatpush.bf16.msra.mxu0 0
      %850 = vmatpush.bf16.msra.mxu0 %v841
      %851 = vmatmul.bf16.gmra.mxu0 %v837
      %v852 = vpop.f32.mrf.mxu0
      %v853 = vadd.f32 0.0, %v852
      %v854 = vpop.f32.mrf.mxu0
      %v855 = vadd.f32 0.0, %v854
      %856 = vdwg.mxu0
      %857 = vrot.lane.b32.xlu0 %v780, 112
      %v858 = vpop.permute.xlu0 %857
      %859 = vrot.lane.b32.xlu0 %v780, 80
      %v860 = vpop.permute.xlu0 %859
      %v862 = vsel %vm784, %v858, 0
      %v865 = vsel %vm784, %v860, 0
      %867 = vmatpush.bf16.xpose.msra.mxu0 0
      %868 = vmatpush.bf16.xpose.msra.mxu0 0
      %869 = vmatpush.bf16.xpose.msra.mxu0 0
      %870 = vmatpush.bf16.xpose.msra.mxu0 0
      %871 = vmatpush.bf16.xpose.msra.mxu0 0
      %872 = vmatpush.bf16.xpose.msra.mxu0 0
      %873 = vmatpush.bf16.xpose.msra.mxu0 0
      %874 = vmatpush.bf16.xpose.msra.mxu0 %v865
      %875 = vmatmul.bf16.gmra.mxu0 %v862
      %v876 = vpop.f32.mrf.mxu0
      %v877 = vadd.f32 0.0, %v876
      %v878 = vpop.f32.mrf.mxu0
      %v879 = vadd.f32 0.0, %v878
      %880 = vdwg.mxu0
      %v881 = vmul.f32 %v877, 0.25
      %v882 = vmul.f32 %v879, 0.25
      %v883 = vadd.f32 %v881, %v685
      %v884 = vadd.f32 %v882, %v686
      %v885 = vsel %vm809, %v883, -inf
      %886 = vmax.xlane.f32.xlu0 %v885
      %v887 = vpop.xlane.xlu0 %886
      %v888 = vsel %vm813, %v884, -inf
      %889 = vmax.xlane.f32.xlu0 %v888
      %v890 = vpop.xlane.xlu0 %889
      %v891 = vsub.f32 %v883, %v887
      %v892 = vsub.f32 %v884, %v890
      %v893 = vmul.f32 %v891, 1.442695
      %v894 = vpow.pop %v893
      %v895 = vmul.f32 %v892, 1.442695
      %v896 = vpow.pop %v895
      %v897 = vsel %vm809, %v894, 0.0
      %898 = vadd.xlane.f32.xlu0 %v897
      %v899 = vpop.xlane.xlu0 %898
      %v900 = vsel %vm813, %v896, 0.0
      %901 = vadd.xlane.f32.xlu0 %v900
      %v902 = vpop.xlane.xlu0 %901
      %v903 = vrcp.pop %v899
      %v904 = vrcp.pop %v902
      %v905 = vmul.f32 %v894, %v903
      %v906 = vmul.f32 %v896, %v904
      %v907 = vpack.c.bf16 %v906, %v905
      %908 = vrot.lane.b32.xlu0 %v780, 48
      %v909 = vpop.permute.xlu0 %908
      %v911 = vsel %vm809, %v907, 0
      %v914 = vsel %vm839, %v909, 0
      %916 = vmatpush.bf16.msra.mxu0 0
      %917 = vmatpush.bf16.msra.mxu0 0
      %918 = vmatpush.bf16.msra.mxu0 0
      %919 = vmatpush.bf16.msra.mxu0 0
      %920 = vmatpush.bf16.msra.mxu0 0
      %921 = vmatpush.bf16.msra.mxu0 0
      %922 = vmatpush.bf16.msra.mxu0 0
      %923 = vmatpush.bf16.msra.mxu0 %v914
      %924 = vmatmul.bf16.gmra.mxu0 %v911
      %v925 = vpop.f32.mrf.mxu0
      %v926 = vadd.f32 0.0, %v925
      %v927 = vpop.f32.mrf.mxu0
      %v928 = vadd.f32 0.0, %v927
      %929 = vdwg.mxu0
      %932 = vrot.lane.b32.xlu0 %v926, 16
      %v933 = vpop.permute.xlu0 %932
      %934 = vrot.lane.b32.xlu0 %v928, 16
      %v935 = vpop.permute.xlu0 %934
      %v938 = vsel %vm784, %v853, %v933
      %v939 = vsel %vm784, %v855, %v935
      %v940 = vld [vmem:[%s10] sm:$0xff]
      %v941 = vld [vmem:[%s10 + $0x8] sm:$0xff]
      %v942 = vld [vmem:[%s10 + $0x10] sm:$0xff]
      %v943 = vld [vmem:[%s10 + $0x18] sm:$0xff]
      %v944 = vpack.c.bf16 %v939, %v938
      %v945 = vpack.c.bf16 %v941, %v940
      %v946 = vpack.c.bf16 %v943, %v942
      %v948 = vsel %vm689, %v944, 0
      %950 = vmatpush.bf16.msra.mxu0 0
      %951 = vmatpush.bf16.msra.mxu0 0
      %952 = vmatpush.bf16.msra.mxu0 0
      %953 = vmatpush.bf16.msra.mxu0 0
      %954 = vmatpush.bf16.msra.mxu0 0
      %955 = vmatpush.bf16.msra.mxu0 0
      %956 = vmatpush.bf16.msra.mxu0 %v946
      %957 = vmatpush.bf16.msra.mxu0 %v945
      %958 = vmatmul.bf16.gmra.mxu0 %v948
      %v959 = vpop.f32.mrf.mxu0
      %v960 = vadd.f32 0.0, %v959
      %v961 = vpop.f32.mrf.mxu0
      %v962 = vadd.f32 0.0, %v961
      %963 = vdwg.mxu0
      %v964 = vadd.f32 %v676, %v960
      %v965 = vadd.f32 %v677, %v962
      %v966 = vld [vmem:[%s11] sm:$0x1]
      %v968 = vperm.slane %v966, 0
      %v970 = vadd.f32 %v964, %v968
      %v971 = vadd.f32 %v965, %v968
      %v972 = vld [vmem:[%s6] sm:$0x1]
      %v973 = vld [vmem:[%s7] sm:$0x1]
      %v974 = vsel %vm689, %v970, 0.0
      %975 = vadd.xlane.f32.xlu0 %v974
      %v976 = vpop.xlane.xlu0 %975
      %v977 = vsel %vm693, %v971, 0.0
      %978 = vadd.xlane.f32.xlu0 %v977
      %v979 = vpop.xlane.xlu0 %978
      %v980 = vmul.f32 %v976, %v703
      %v981 = vmul.f32 %v979, %v703
      %v982 = vsub.f32 %v970, %v980
      %v983 = vsub.f32 %v971, %v981
      %v984 = vmul.f32 %v982, %v982
      %v985 = vmul.f32 %v983, %v983
      %v986 = vsel %vm689, %v984, 0.0
      %987 = vadd.xlane.f32.xlu0 %v986
      %v988 = vpop.xlane.xlu0 %987
      %v989 = vsel %vm693, %v985, 0.0
      %990 = vadd.xlane.f32.xlu0 %v989
      %v991 = vpop.xlane.xlu0 %990
      %v992 = vmul.f32 %v988, %v703
      %v993 = vmul.f32 %v991, %v703
      %v994 = vadd.f32 %v992, 1e-05
      %v995 = vadd.f32 %v993, 1e-05
      %v996 = vrsqrt.pop %v994
      %v997 = vmul.f32 %v996, %v994
      %v998 = vmul.f32 %v997, %v996
      %v999 = vmul.f32 0.5, %v998
      %v1000 = vsub.f32 1.5, %v999
      %v1001 = vmul.f32 %v996, %v1000
      %vm1002 = vweird.f32 %v994
      %vm1003 = vweird.f32 %v996
      %vm1004 = vmor %vm1002, %vm1003
      %v1005 = vsel %vm1004, %v996, %v1001
      %v1006 = vrsqrt.pop %v995
      %v1007 = vmul.f32 %v1006, %v995
      %v1008 = vmul.f32 %v1007, %v1006
      %v1009 = vmul.f32 0.5, %v1008
      %v1010 = vsub.f32 1.5, %v1009
      %v1011 = vmul.f32 %v1006, %v1010
      %vm1012 = vweird.f32 %v995
      %vm1013 = vweird.f32 %v1006
      %vm1014 = vmor %vm1012, %vm1013
      %v1015 = vsel %vm1014, %v1006, %v1011
      %v1016 = vmul.f32 %v982, %v1005
      %v1017 = vmul.f32 %v983, %v1015
      %v1019 = vperm.slane %v972, 0
      %v1021 = vmul.f32 %v1016, %v1019
      %v1022 = vmul.f32 %v1017, %v1019
      %v1024 = vperm.slane %v973, 0
      %v1026 = vadd.f32 %v1021, %v1024
      %v1027 = vadd.f32 %v1022, %v1024
      %v1028 = vld [vmem:[%s12] sm:$0xff]
      %v1029 = vld [vmem:[%s12 + $0x8] sm:$0xff]
      %v1030 = vld [vmem:[%s12 + $0x10] sm:$0xff]
      %v1031 = vld [vmem:[%s12 + $0x18] sm:$0xff]
      %v1032 = vpack.c.bf16 %v1027, %v1026
      %v1033 = vpack.c.bf16 %v1029, %v1028
      %v1034 = vpack.c.bf16 %v1031, %v1030
      %v1035 = vld [vmem:[%s13] sm:$0x1]
      %v1037 = vperm.slane %v1035, 0
      %v1040 = vsel %vm689, %v1032, 0
      %1042 = vmatpush.bf16.msra.mxu0 0
      %1043 = vmatpush.bf16.msra.mxu0 0
      %1044 = vmatpush.bf16.msra.mxu0 0
      %1045 = vmatpush.bf16.msra.mxu0 0
      %1046 = vmatpush.bf16.msra.mxu0 0
      %1047 = vmatpush.bf16.msra.mxu0 0
      %1048 = vmatpush.bf16.msra.mxu0 %v1034
      %1049 = vmatpush.bf16.msra.mxu0 %v1033
      %1050 = vmatmul.bf16.gmra.mxu0 %v1040
      %v1051 = vpop.f32.mrf.mxu0
      %v1052 = vadd.f32 %v1037, %v1051
      %v1053 = vpop.f32.mrf.mxu0
      %v1054 = vadd.f32 %v1037, %v1053
      %1055 = vdwg.mxu0
      %v1056 = vmul.f32 %v1052, 1.702
      %v1057 = vmul.f32 %v1054, 1.702
      %v1058 = vxor.u32 %v1056, 2147483648
      %v1059 = vxor.u32 %v1057, 2147483648
      %v1060 = vmul.f32 %v1058, 1.442695
      %v1061 = vpow.pop %v1060
      %v1062 = vmul.f32 %v1059, 1.442695
      %v1063 = vpow.pop %v1062
      %v1064 = vadd.f32 %v1061, 1.0
      %v1065 = vadd.f32 %v1063, 1.0
      %v1066 = vrcp.pop %v1064
      %v1067 = vmul.f32 %v1064, %v1066
      %v1068 = vsub.f32 1.0, %v1067
      %v1069 = vmul.f32 %v1066, %v1068
      %v1070 = vadd.f32 %v1066, %v1069
      %vm1071 = vweird.f32 %v1064
      %vm1072 = vweird.f32 %v1066
      %vm1073 = vmor %vm1071, %vm1072
      %v1074 = vsel %vm1073, %v1066, %v1070
      %v1075 = vand.u32 2147483647, %v1064
      %vm1076 = vcmp.eq.f32.partialorder %v1075, 8.507059e+37
      %v1077 = vand.u32 %v1064, 2147483648
      %v1078 = vor.u32 1.1754944e-38, %v1077
      %v1079 = vsel %vm1076, %v1078, %v1074
      %v1080 = vmul.f32 1.0, %v1079
      %v1081 = vrcp.pop %v1065
      %v1082 = vmul.f32 %v1065, %v1081
      %v1083 = vsub.f32 1.0, %v1082
      %v1084 = vmul.f32 %v1081, %v1083
      %v1085 = vadd.f32 %v1081, %v1084
      %vm1086 = vweird.f32 %v1065
      %vm1087 = vweird.f32 %v1081
      %vm1088 = vmor %vm1086, %vm1087
      %v1089 = vsel %vm1088, %v1081, %v1085
      %v1090 = vand.u32 2147483647, %v1065
      %vm1091 = vcmp.eq.f32.partialorder %v1090, 8.507059e+37
      %v1092 = vand.u32 %v1065, 2147483648
      %v1093 = vor.u32 1.1754944e-38, %v1092
      %v1094 = vsel %vm1091, %v1093, %v1089
      %v1095 = vmul.f32 1.0, %v1094
      %v1096 = vmul.f32 %v1052, %v1080
      %v1097 = vmul.f32 %v1054, %v1095
      %v1098 = vld [vmem:[%s14] sm:$0xff]
      %v1099 = vld [vmem:[%s14 + $0x8] sm:$0xff]
      %v1100 = vld [vmem:[%s14 + $0x10] sm:$0xff]
      %v1101 = vld [vmem:[%s14 + $0x18] sm:$0xff]
      %v1102 = vld [vmem:[%s14 + $0x20] sm:$0xff]
      %v1103 = vld [vmem:[%s14 + $0x28] sm:$0xff]
      %v1104 = vld [vmem:[%s14 + $0x30] sm:$0xff]
      %v1105 = vld [vmem:[%s14 + $0x38] sm:$0xff]
      %v1106 = vld [vmem:[%s14 + $0x40] sm:$0xff]
      %v1107 = vld [vmem:[%s14 + $0x48] sm:$0xff]
      %v1108 = vld [vmem:[%s14 + $0x50] sm:$0xff]
      %v1109 = vld [vmem:[%s14 + $0x58] sm:$0xff]
      %v1110 = vld [vmem:[%s14 + $0x60] sm:$0xff]
      %v1111 = vld [vmem:[%s14 + $0x68] sm:$0xff]
      %v1112 = vld [vmem:[%s14 + $0x70] sm:$0xff]
      %v1113 = vld [vmem:[%s14 + $0x78] sm:$0xff]
      %v1114 = vpack.c.bf16 %v1097, %v1096
      %v1115 = vpack.c.bf16 %v1099, %v1098
      %v1116 = vpack.c.bf16 %v1101, %v1100
      %v1117 = vpack.c.bf16 %v1103, %v1102
      %v1118 = vpack.c.bf16 %v1105, %v1104
      %v1119 = vpack.c.bf16 %v1107, %v1106
      %v1120 = vpack.c.bf16 %v1109, %v1108
      %v1121 = vpack.c.bf16 %v1111, %v1110
      %v1122 = vpack.c.bf16 %v1113, %v1112
      %1123 = vmatpush.bf16.msra.mxu0 %v1122
      %1124 = vmatpush.bf16.msra.mxu0 %v1121
      %1125 = vmatpush.bf16.msra.mxu0 %v1120
      %1126 = vmatpush.bf16.msra.mxu0 %v1119
      %1127 = vmatpush.bf16.msra.mxu0 %v1118
      %1128 = vmatpush.bf16.msra.mxu0 %v1117
      %1129 = vmatpush.bf16.msra.mxu0 %v1116
      %1130 = vmatpush.bf16.msra.mxu0 %v1115
      %1131 = vmatmul.bf16.gmra.mxu0 %v1114
      %v1132 = vpop.f32.mrf.mxu0
      %v1133 = vadd.f32 0.0, %v1132
      %v1134 = vpop.f32.mrf.mxu0
      %v1135 = vadd.f32 0.0, %v1134
      %1136 = vdwg.mxu0
      %v1137 = vadd.f32 %v970, %v1133
      %v1138 = vadd.f32 %v971, %v1135
      %v1139 = vld [vmem:[%s15] sm:$0x1]
      %v1141 = vperm.slane %v1139, 0
      %v1143 = vadd.f32 %v1137, %v1141
      %v1144 = vadd.f32 %v1138, %v1141
      %v1145 = vld [vmem:[%s2] sm:$0xff]
      %v1146 = vld [vmem:[%s2 + $0x8] sm:$0x3]
      %1148 = vset.pattern.permute.xlu0 0
      %1149 = vperm.xlu0 %1148, %v1145
      %v1150 = vpop.permute.xlu0 %1149
      %1153 = vset.pattern.permute.xlu0 0
      %1154 = vperm.xlu0 %1153, %v1146
      %v1155 = vpop.permute.xlu0 %1154
      %v1157 = vmul.f32 %v1143, %v1150
      %v1158 = vmul.f32 %v1144, %v1155
      %s1159 = scalar_lea.vmem %s1, 16
      %v1160 = vld [vmem:[%s1159] sm:$0xff]
      %v1161 = vld [vmem:[%s1159 + $0x8] sm:$0x3]
      %v1162 = vadd.f32 %v1157, %v1160
      %v1163 = vadd.f32 %v1158, %v1161
      %s1164 = scalar_lea.vmem %s4, 1
      %v1165 = vld [vmem:[%s1164] sm:$0x1]
      %s1166 = scalar_lea.vmem %s5, 1
      %v1167 = vld [vmem:[%s1166] sm:$0x1]
      %v1168 = vsel %vm689, %v1162, 0.0
      %1169 = vadd.xlane.f32.xlu0 %v1168
      %v1170 = vpop.xlane.xlu0 %1169
      %v1171 = vsel %vm693, %v1163, 0.0
      %1172 = vadd.xlane.f32.xlu0 %v1171
      %v1173 = vpop.xlane.xlu0 %1172
      %v1174 = vmul.f32 %v1170, %v703
      %v1175 = vmul.f32 %v1173, %v703
      %v1176 = vsub.f32 %v1162, %v1174
      %v1177 = vsub.f32 %v1163, %v1175
      %v1178 = vmul.f32 %v1176, %v1176
      %v1179 = vmul.f32 %v1177, %v1177
      %v1180 = vsel %vm689, %v1178, 0.0
      %1181 = vadd.xlane.f32.xlu0 %v1180
      %v1182 = vpop.xlane.xlu0 %1181
      %v1183 = vsel %vm693, %v1179, 0.0
      %1184 = vadd.xlane.f32.xlu0 %v1183
      %v1185 = vpop.xlane.xlu0 %1184
      %v1186 = vmul.f32 %v1182, %v703
      %v1187 = vmul.f32 %v1185, %v703
      %v1188 = vadd.f32 %v1186, 1e-05
      %v1189 = vadd.f32 %v1187, 1e-05
      %v1190 = vrsqrt.pop %v1188
      %v1191 = vmul.f32 %v1190, %v1188
      %v1192 = vmul.f32 %v1191, %v1190
      %v1193 = vmul.f32 0.5, %v1192
      %v1194 = vsub.f32 1.5, %v1193
      %v1195 = vmul.f32 %v1190, %v1194
      %vm1196 = vweird.f32 %v1188
      %vm1197 = vweird.f32 %v1190
      %vm1198 = vmor %vm1196, %vm1197
      %v1199 = vsel %vm1198, %v1190, %v1195
      %v1200 = vrsqrt.pop %v1189
      %v1201 = vmul.f32 %v1200, %v1189
      %v1202 = vmul.f32 %v1201, %v1200
      %v1203 = vmul.f32 0.5, %v1202
      %v1204 = vsub.f32 1.5, %v1203
      %v1205 = vmul.f32 %v1200, %v1204
      %vm1206 = vweird.f32 %v1189
      %vm1207 = vweird.f32 %v1200
      %vm1208 = vmor %vm1206, %vm1207
      %v1209 = vsel %vm1208, %v1200, %v1205
      %v1210 = vmul.f32 %v1176, %v1199
      %v1211 = vmul.f32 %v1177, %v1209
      %v1213 = vperm.slane %v1165, 0
      %v1215 = vmul.f32 %v1210, %v1213
      %v1216 = vmul.f32 %v1211, %v1213
      %v1218 = vperm.slane %v1167, 0
      %v1220 = vadd.f32 %v1215, %v1218
      %v1221 = vadd.f32 %v1216, %v1218
      %s1222 = scalar_lea.vmem %s8, 32
      %v1223 = vld [vmem:[%s1222] sm:$0xff]
      %v1224 = vld [vmem:[%s1222 + $0x8] sm:$0xff]
      %v1225 = vld [vmem:[%s1222 + $0x10] sm:$0xff]
      %v1226 = vld [vmem:[%s1222 + $0x18] sm:$0xff]
      %v1227 = vpack.c.bf16 %v1221, %v1220
      %v1228 = vpack.c.bf16 %v1224, %v1223
      %v1229 = vpack.c.bf16 %v1226, %v1225
      %s1230 = scalar_lea.vmem %s9, 1
      %v1231 = vld [vmem:[%s1230] sm:$0x1]
      %v1233 = vperm.slane %v1231, 0
      %v1236 = vsel %vm689, %v1227, 0
      %1238 = vmatpush.bf16.msra.mxu0 0
      %1239 = vmatpush.bf16.msra.mxu0 0
      %1240 = vmatpush.bf16.msra.mxu0 0
      %1241 = vmatpush.bf16.msra.mxu0 0
      %1242 = vmatpush.bf16.msra.mxu0 0
      %1243 = vmatpush.bf16.msra.mxu0 0
      %1244 = vmatpush.bf16.msra.mxu0 %v1229
      %1245 = vmatpush.bf16.msra.mxu0 %v1228
      %1246 = vmatmul.bf16.gmra.mxu0 %v1236
      %v1247 = vpop.f32.mrf.mxu0
      %v1248 = vadd.f32 %v1233, %v1247
      %v1249 = vpop.f32.mrf.mxu0
      %v1250 = vadd.f32 %v1233, %v1249
      %1251 = vdwg.mxu0
      %v1252 = vpack.c.bf16 %v1250, %v1248
      %1254 = vrot.lane.b32.xlu0 %v1252, 96
      %v1255 = vpop.permute.xlu0 %1254
      %v1257 = vsel %vm784, %v1252, 0
      %v1260 = vsel %vm784, %v1255, 0
      %1262 = vmatpush.bf16.xpose.msra.mxu0 0
      %1263 = vmatpush.bf16.xpose.msra.mxu0 0
      %1264 = vmatpush.bf16.xpose.msra.mxu0 0
      %1265 = vmatpush.bf16.xpose.msra.mxu0 0
      %1266 = vmatpush.bf16.xpose.msra.mxu0 0
      %1267 = vmatpush.bf16.xpose.msra.mxu0 0
      %1268 = vmatpush.bf16.xpose.msra.mxu0 0
      %1269 = vmatpush.bf16.xpose.msra.mxu0 %v1260
      %1270 = vmatmul.bf16.gmra.mxu0 %v1257
      %v1271 = vpop.f32.mrf.mxu0
      %v1272 = vadd.f32 0.0, %v1271
      %v1273 = vpop.f32.mrf.mxu0
      %v1274 = vadd.f32 0.0, %v1273
      %1275 = vdwg.mxu0
      %v1276 = vmul.f32 %v1272, 0.25
      %v1277 = vmul.f32 %v1274, 0.25
      %v1278 = vadd.f32 %v1276, %v685
      %v1279 = vadd.f32 %v1277, %v686
      %v1280 = vsel %vm809, %v1278, -inf
      %1281 = vmax.xlane.f32.xlu0 %v1280
      %v1282 = vpop.xlane.xlu0 %1281
      %v1283 = vsel %vm813, %v1279, -inf
      %1284 = vmax.xlane.f32.xlu0 %v1283
      %v1285 = vpop.xlane.xlu0 %1284
      %v1286 = vsub.f32 %v1278, %v1282
      %v1287 = vsub.f32 %v1279, %v1285
      %v1288 = vmul.f32 %v1286, 1.442695
      %v1289 = vpow.pop %v1288
      %v1290 = vmul.f32 %v1287, 1.442695
      %v1291 = vpow.pop %v1290
      %v1292 = vsel %vm809, %v1289, 0.0
      %1293 = vadd.xlane.f32.xlu0 %v1292
      %v1294 = vpop.xlane.xlu0 %1293
      %v1295 = vsel %vm813, %v1291, 0.0
      %1296 = vadd.xlane.f32.xlu0 %v1295
      %v1297 = vpop.xlane.xlu0 %1296
      %v1298 = vrcp.pop %v1294
      %v1299 = vrcp.pop %v1297
      %v1300 = vmul.f32 %v1289, %v1298
      %v1301 = vmul.f32 %v1291, %v1299
      %v1302 = vpack.c.bf16 %v1301, %v1300
      %1303 = vrot.lane.b32.xlu0 %v1252, 64
      %v1304 = vpop.permute.xlu0 %1303
      %v1306 = vsel %vm809, %v1302, 0
      %v1309 = vsel %vm839, %v1304, 0
      %1311 = vmatpush.bf16.msra.mxu0 0
      %1312 = vmatpush.bf16.msra.mxu0 0
      %1313 = vmatpush.bf16.msra.mxu0 0
      %1314 = vmatpush.bf16.msra.mxu0 0
      %1315 = vmatpush.bf16.msra.mxu0 0
      %1316 = vmatpush.bf16.msra.mxu0 0
      %1317 = vmatpush.bf16.msra.mxu0 0
      %1318 = vmatpush.bf16.msra.mxu0 %v1309
      %1319 = vmatmul.bf16.gmra.mxu0 %v1306
      %v1320 = vpop.f32.mrf.mxu0
      %v1321 = vadd.f32 0.0, %v1320
      %v1322 = vpop.f32.mrf.mxu0
      %v1323 = vadd.f32 0.0, %v1322
      %1324 = vdwg.mxu0
      %1325 = vrot.lane.b32.xlu0 %v1252, 112
      %v1326 = vpop.permute.xlu0 %1325
      %1327 = vrot.lane.b32.xlu0 %v1252, 80
      %v1328 = vpop.permute.xlu0 %1327
      %v1330 = vsel %vm784, %v1326, 0
      %v1333 = vsel %vm784, %v1328, 0
      %1335 = vmatpush.bf16.xpose.msra.mxu0 0
      %1336 = vmatpush.bf16.xpose.msra.mxu0 0
      %1337 = vmatpush.bf16.xpose.msra.mxu0 0
      %1338 = vmatpush.bf16.xpose.msra.mxu0 0
      %1339 = vmatpush.bf16.xpose.msra.mxu0 0
      %1340 = vmatpush.bf16.xpose.msra.mxu0 0
      %1341 = vmatpush.bf16.xpose.msra.mxu0 0
      %1342 = vmatpush.bf16.xpose.msra.mxu0 %v1333
      %1343 = vmatmul.bf16.gmra.mxu0 %v1330
      %v1344 = vpop.f32.mrf.mxu0
      %v1345 = vadd.f32 0.0, %v1344
      %v1346 = vpop.f32.mrf.mxu0
      %v1347 = vadd.f32 0.0, %v1346
      %1348 = vdwg.mxu0
      %v1349 = vmul.f32 %v1345, 0.25
      %v1350 = vmul.f32 %v1347, 0.25
      %v1351 = vadd.f32 %v1349, %v685
      %v1352 = vadd.f32 %v1350, %v686
      %v1353 = vsel %vm809, %v1351, -inf
      %1354 = vmax.xlane.f32.xlu0 %v1353
      %v1355 = vpop.xlane.xlu0 %1354
      %v1356 = vsel %vm813, %v1352, -inf
      %1357 = vmax.xlane.f32.xlu0 %v1356
      %v1358 = vpop.xlane.xlu0 %1357
      %v1359 = vsub.f32 %v1351, %v1355
      %v1360 = vsub.f32 %v1352, %v1358
      %v1361 = vmul.f32 %v1359, 1.442695
      %v1362 = vpow.pop %v1361
      %v1363 = vmul.f32 %v1360, 1.442695
      %v1364 = vpow.pop %v1363
      %v1365 = vsel %vm809, %v1362, 0.0
      %1366 = vadd.xlane.f32.xlu0 %v1365
      %v1367 = vpop.xlane.xlu0 %1366
      %v1368 = vsel %vm813, %v1364, 0.0
      %1369 = vadd.xlane.f32.xlu0 %v1368
      %v1370 = vpop.xlane.xlu0 %1369
      %v1371 = vrcp.pop %v1367
      %v1372 = vrcp.pop %v1370
      %v1373 = vmul.f32 %v1362, %v1371
      %v1374 = vmul.f32 %v1364, %v1372
      %v1375 = vpack.c.bf16 %v1374, %v1373
      %1376 = vrot.lane.b32.xlu0 %v1252, 48
      %v1377 = vpop.permute.xlu0 %1376
      %v1379 = vsel %vm809, %v1375, 0
      %v1382 = vsel %vm839, %v1377, 0
      %1384 = vmatpush.bf16.msra.mxu0 0
      %1385 = vmatpush.bf16.msra.mxu0 0
      %1386 = vmatpush.bf16.msra.mxu0 0
      %1387 = vmatpush.bf16.msra.mxu0 0
      %1388 = vmatpush.bf16.msra.mxu0 0
      %1389 = vmatpush.bf16.msra.mxu0 0
      %1390 = vmatpush.bf16.msra.mxu0 0
      %1391 = vmatpush.bf16.msra.mxu0 %v1382
      %1392 = vmatmul.bf16.gmra.mxu0 %v1379
      %v1393 = vpop.f32.mrf.mxu0
      %v1394 = vadd.f32 0.0, %v1393
      %v1395 = vpop.f32.mrf.mxu0
      %v1396 = vadd.f32 0.0, %v1395
      %1397 = vdwg.mxu0
      %1400 = vrot.lane.b32.xlu0 %v1394, 16
      %v1401 = vpop.permute.xlu0 %1400
      %1402 = vrot.lane.b32.xlu0 %v1396, 16
      %v1403 = vpop.permute.xlu0 %1402
      %v1406 = vsel %vm784, %v1321, %v1401
      %v1407 = vsel %vm784, %v1323, %v1403
      %s1408 = scalar_lea.vmem %s10, 32
      %v1409 = vld [vmem:[%s1408] sm:$0xff]
      %v1410 = vld [vmem:[%s1408 + $0x8] sm:$0xff]
      %v1411 = vld [vmem:[%s1408 + $0x10] sm:$0xff]
      %v1412 = vld [vmem:[%s1408 + $0x18] sm:$0xff]
      %v1413 = vpack.c.bf16 %v1407, %v1406
      %v1414 = vpack.c.bf16 %v1410, %v1409
      %v1415 = vpack.c.bf16 %v1412, %v1411
      %v1417 = vsel %vm689, %v1413, 0
      %1419 = vmatpush.bf16.msra.mxu0 0
      %1420 = vmatpush.bf16.msra.mxu0 0
      %1421 = vmatpush.bf16.msra.mxu0 0
      %1422 = vmatpush.bf16.msra.mxu0 0
      %1423 = vmatpush.bf16.msra.mxu0 0
      %1424 = vmatpush.bf16.msra.mxu0 0
      %1425 = vmatpush.bf16.msra.mxu0 %v1415
      %1426 = vmatpush.bf16.msra.mxu0 %v1414
      %1427 = vmatmul.bf16.gmra.mxu0 %v1417
      %v1428 = vpop.f32.mrf.mxu0
      %v1429 = vadd.f32 0.0, %v1428
      %v1430 = vpop.f32.mrf.mxu0
      %v1431 = vadd.f32 0.0, %v1430
      %1432 = vdwg.mxu0
      %v1433 = vadd.f32 %v1162, %v1429
      %v1434 = vadd.f32 %v1163, %v1431
      %s1435 = scalar_lea.vmem %s11, 1
      %v1436 = vld [vmem:[%s1435] sm:$0x1]
      %v1438 = vperm.slane %v1436, 0
      %v1440 = vadd.f32 %v1433, %v1438
      %v1441 = vadd.f32 %v1434, %v1438
      %s1442 = scalar_lea.vmem %s6, 1
      %v1443 = vld [vmem:[%s1442] sm:$0x1]
      %s1444 = scalar_lea.vmem %s7, 1
      %v1445 = vld [vmem:[%s1444] sm:$0x1]
      %v1446 = vsel %vm689, %v1440, 0.0
      %1447 = vadd.xlane.f32.xlu0 %v1446
      %v1448 = vpop.xlane.xlu0 %1447
      %v1449 = vsel %vm693, %v1441, 0.0
      %1450 = vadd.xlane.f32.xlu0 %v1449
      %v1451 = vpop.xlane.xlu0 %1450
      %v1452 = vmul.f32 %v1448, %v703
      %v1453 = vmul.f32 %v1451, %v703
      %v1454 = vsub.f32 %v1440, %v1452
      %v1455 = vsub.f32 %v1441, %v1453
      %v1456 = vmul.f32 %v1454, %v1454
      %v1457 = vmul.f32 %v1455, %v1455
      %v1458 = vsel %vm689, %v1456, 0.0
      %1459 = vadd.xlane.f32.xlu0 %v1458
      %v1460 = vpop.xlane.xlu0 %1459
      %v1461 = vsel %vm693, %v1457, 0.0
      %1462 = vadd.xlane.f32.xlu0 %v1461
      %v1463 = vpop.xlane.xlu0 %1462
      %v1464 = vmul.f32 %v1460, %v703
      %v1465 = vmul.f32 %v1463, %v703
      %v1466 = vadd.f32 %v1464, 1e-05
      %v1467 = vadd.f32 %v1465, 1e-05
      %v1468 = vrsqrt.pop %v1466
      %v1469 = vmul.f32 %v1468, %v1466
      %v1470 = vmul.f32 %v1469, %v1468
      %v1471 = vmul.f32 0.5, %v1470
      %v1472 = vsub.f32 1.5, %v1471
      %v1473 = vmul.f32 %v1468, %v1472
      %vm1474 = vweird.f32 %v1466
      %vm1475 = vweird.f32 %v1468
      %vm1476 = vmor %vm1474, %vm1475
      %v1477 = vsel %vm1476, %v1468, %v1473
      %v1478 = vrsqrt.pop %v1467
      %v1479 = vmul.f32 %v1478, %v1467
      %v1480 = vmul.f32 %v1479, %v1478
      %v1481 = vmul.f32 0.5, %v1480
      %v1482 = vsub.f32 1.5, %v1481
      %v1483 = vmul.f32 %v1478, %v1482
      %vm1484 = vweird.f32 %v1467
      %vm1485 = vweird.f32 %v1478
      %vm1486 = vmor %vm1484, %vm1485
      %v1487 = vsel %vm1486, %v1478, %v1483
      %v1488 = vmul.f32 %v1454, %v1477
      %v1489 = vmul.f32 %v1455, %v1487
      %v1491 = vperm.slane %v1443, 0
      %v1493 = vmul.f32 %v1488, %v1491
      %v1494 = vmul.f32 %v1489, %v1491
      %v1496 = vperm.slane %v1445, 0
      %v1498 = vadd.f32 %v1493, %v1496
      %v1499 = vadd.f32 %v1494, %v1496
      %s1500 = scalar_lea.vmem %s12, 32
      %v1501 = vld [vmem:[%s1500] sm:$0xff]
      %v1502 = vld [vmem:[%s1500 + $0x8] sm:$0xff]
      %v1503 = vld [vmem:[%s1500 + $0x10] sm:$0xff]
      %v1504 = vld [vmem:[%s1500 + $0x18] sm:$0xff]
      %v1505 = vpack.c.bf16 %v1499, %v1498
      %v1506 = vpack.c.bf16 %v1502, %v1501
      %v1507 = vpack.c.bf16 %v1504, %v1503
      %s1508 = scalar_lea.vmem %s13, 1
      %v1509 = vld [vmem:[%s1508] sm:$0x1]
      %v1511 = vperm.slane %v1509, 0
      %v1514 = vsel %vm689, %v1505, 0
      %1516 = vmatpush.bf16.msra.mxu0 0
      %1517 = vmatpush.bf16.msra.mxu0 0
      %1518 = vmatpush.bf16.msra.mxu0 0
      %1519 = vmatpush.bf16.msra.mxu0 0
      %1520 = vmatpush.bf16.msra.mxu0 0
      %1521 = vmatpush.bf16.msra.mxu0 0
      %1522 = vmatpush.bf16.msra.mxu0 %v1507
      %1523 = vmatpush.bf16.msra.mxu0 %v1506
      %1524 = vmatmul.bf16.gmra.mxu0 %v1514
      %v1525 = vpop.f32.mrf.mxu0
      %v1526 = vadd.f32 %v1511, %v1525
      %v1527 = vpop.f32.mrf.mxu0
      %v1528 = vadd.f32 %v1511, %v1527
      %1529 = vdwg.mxu0
      %v1530 = vmul.f32 %v1526, 1.702
      %v1531 = vmul.f32 %v1528, 1.702
      %v1532 = vxor.u32 %v1530, 2147483648
      %v1533 = vxor.u32 %v1531, 2147483648
      %v1534 = vmul.f32 %v1532, 1.442695
      %v1535 = vpow.pop %v1534
      %v1536 = vmul.f32 %v1533, 1.442695
      %v1537 = vpow.pop %v1536
      %v1538 = vadd.f32 %v1535, 1.0
      %v1539 = vadd.f32 %v1537, 1.0
      %v1540 = vrcp.pop %v1538
      %v1541 = vmul.f32 %v1538, %v1540
      %v1542 = vsub.f32 1.0, %v1541
      %v1543 = vmul.f32 %v1540, %v1542
      %v1544 = vadd.f32 %v1540, %v1543
      %vm1545 = vweird.f32 %v1538
      %vm1546 = vweird.f32 %v1540
      %vm1547 = vmor %vm1545, %vm1546
      %v1548 = vsel %vm1547, %v1540, %v1544
      %v1549 = vand.u32 2147483647, %v1538
      %vm1550 = vcmp.eq.f32.partialorder %v1549, 8.507059e+37
      %v1551 = vand.u32 %v1538, 2147483648
      %v1552 = vor.u32 1.1754944e-38, %v1551
      %v1553 = vsel %vm1550, %v1552, %v1548
      %v1554 = vmul.f32 1.0, %v1553
      %v1555 = vrcp.pop %v1539
      %v1556 = vmul.f32 %v1539, %v1555
      %v1557 = vsub.f32 1.0, %v1556
      %v1558 = vmul.f32 %v1555, %v1557
      %v1559 = vadd.f32 %v1555, %v1558
      %vm1560 = vweird.f32 %v1539
      %vm1561 = vweird.f32 %v1555
      %vm1562 = vmor %vm1560, %vm1561
      %v1563 = vsel %vm1562, %v1555, %v1559
      %v1564 = vand.u32 2147483647, %v1539
      %vm1565 = vcmp.eq.f32.partialorder %v1564, 8.507059e+37
      %v1566 = vand.u32 %v1539, 2147483648
      %v1567 = vor.u32 1.1754944e-38, %v1566
      %v1568 = vsel %vm1565, %v1567, %v1563
      %v1569 = vmul.f32 1.0, %v1568
      %v1570 = vmul.f32 %v1526, %v1554
      %v1571 = vmul.f32 %v1528, %v1569
      %s1572 = scalar_lea.vmem %s14, 128
      %v1573 = vld [vmem:[%s1572] sm:$0xff]
      %v1574 = vld [vmem:[%s1572 + $0x8] sm:$0xff]
      %v1575 = vld [vmem:[%s1572 + $0x10] sm:$0xff]
      %v1576 = vld [vmem:[%s1572 + $0x18] sm:$0xff]
      %v1577 = vld [vmem:[%s1572 + $0x20] sm:$0xff]
      %v1578 = vld [vmem:[%s1572 + $0x28] sm:$0xff]
      %v1579 = vld [vmem:[%s1572 + $0x30] sm:$0xff]
      %v1580 = vld [vmem:[%s1572 + $0x38] sm:$0xff]
      %v1581 = vld [vmem:[%s1572 + $0x40] sm:$0xff]
      %v1582 = vld [vmem:[%s1572 + $0x48] sm:$0xff]
      %v1583 = vld [vmem:[%s1572 + $0x50] sm:$0xff]
      %v1584 = vld [vmem:[%s1572 + $0x58] sm:$0xff]
      %v1585 = vld [vmem:[%s1572 + $0x60] sm:$0xff]
      %v1586 = vld [vmem:[%s1572 + $0x68] sm:$0xff]
      %v1587 = vld [vmem:[%s1572 + $0x70] sm:$0xff]
      %v1588 = vld [vmem:[%s1572 + $0x78] sm:$0xff]
      %v1589 = vpack.c.bf16 %v1571, %v1570
      %v1590 = vpack.c.bf16 %v1574, %v1573
      %v1591 = vpack.c.bf16 %v1576, %v1575
      %v1592 = vpack.c.bf16 %v1578, %v1577
      %v1593 = vpack.c.bf16 %v1580, %v1579
      %v1594 = vpack.c.bf16 %v1582, %v1581
      %v1595 = vpack.c.bf16 %v1584, %v1583
      %v1596 = vpack.c.bf16 %v1586, %v1585
      %v1597 = vpack.c.bf16 %v1588, %v1587
      %1598 = vmatpush.bf16.msra.mxu0 %v1597
      %1599 = vmatpush.bf16.msra.mxu0 %v1596
      %1600 = vmatpush.bf16.msra.mxu0 %v1595
      %1601 = vmatpush.bf16.msra.mxu0 %v1594
      %1602 = vmatpush.bf16.msra.mxu0 %v1593
      %1603 = vmatpush.bf16.msra.mxu0 %v1592
      %1604 = vmatpush.bf16.msra.mxu0 %v1591
      %1605 = vmatpush.bf16.msra.mxu0 %v1590
      %1606 = vmatmul.bf16.gmra.mxu0 %v1589
      %v1607 = vpop.f32.mrf.mxu0
      %v1608 = vadd.f32 0.0, %v1607
      %v1609 = vpop.f32.mrf.mxu0
      %v1610 = vadd.f32 0.0, %v1609
      %1611 = vdwg.mxu0
      %v1612 = vadd.f32 %v1440, %v1608
      %v1613 = vadd.f32 %v1441, %v1610
      %s1614 = scalar_lea.vmem %s15, 1
      %v1615 = vld [vmem:[%s1614] sm:$0x1]
      %v1617 = vperm.slane %v1615, 0
      %v1619 = vadd.f32 %v1612, %v1617
      %v1620 = vadd.f32 %v1613, %v1617
      %v1621 = vld [vmem:[%s671] sm:$0xff]
      %v1622 = vld [vmem:[%s671 + $0x8] sm:$0x3]
      %1624 = vset.pattern.permute.xlu0 0
      %1625 = vperm.xlu0 %1624, %v1621
      %v1626 = vpop.permute.xlu0 %1625
      %1629 = vset.pattern.permute.xlu0 0
      %1630 = vperm.xlu0 %1629, %v1622
      %v1631 = vpop.permute.xlu0 %1630
      %v1633 = vmul.f32 %v1619, %v1626
      %v1634 = vmul.f32 %v1620, %v1631
      %v1635 = vsel %vm689, %v1633, 0.0
      %v1636 = vsel %vm693, %v1634, 0.0
      %v1637 = vadd.f32 %v1635, %v1636
      %v1638 = vrot.slane %v1637, 4
      %v1639 = vadd.f32 %v1637, %v1638
      %v1640 = vrot.slane %v1639, 2
      %v1641 = vadd.f32 %v1639, %v1640
      %v1642 = vrot.slane %v1641, 1
      %v1643 = vadd.f32 %v1641, %v1642
      %v1644 = vld [vmem:[%s16] sm:$0x1]
      %v1645 = vld [vmem:[%s17] sm:$0x1]
      %v1646 = vsel %vm689, %v1643, 0.0
      %1647 = vadd.xlane.f32.xlu0 %v1646
      %v1648 = vpop.xlane.xlu0 %1647
      %v1649 = vmul.f32 %v1648, %v703
      %v1650 = vsub.f32 %v1643, %v1649
      %v1651 = vmul.f32 %v1650, %v1650
      %v1652 = vsel %vm689, %v1651, 0.0
      %1653 = vadd.xlane.f32.xlu0 %v1652
      %v1654 = vpop.xlane.xlu0 %1653
      %v1655 = vmul.f32 %v1654, %v703
      %v1656 = vadd.f32 %v1655, 1e-05
      %v1657 = vrsqrt.pop %v1656
      %v1658 = vmul.f32 %v1657, %v1656
      %v1659 = vmul.f32 %v1658, %v1657
      %v1660 = vmul.f32 0.5, %v1659
      %v1661 = vsub.f32 1.5, %v1660
      %v1662 = vmul.f32 %v1657, %v1661
      %vm1663 = vweird.f32 %v1656
      %vm1664 = vweird.f32 %v1657
      %vm1665 = vmor %vm1663, %vm1664
      %v1666 = vsel %vm1665, %v1657, %v1662
      %v1667 = vmul.f32 %v1650, %v1666
      %v1668 = vmul.f32 %v1667, %v1644
      %v1669 = vadd.f32 %v1668, %v1645
      %v1670 = vld [vmem:[%s18] sm:$0xff]
      %v1671 = vld [vmem:[%s18 + $0x8] sm:$0xff]
      %v1672 = vld [vmem:[%s18 + $0x10] sm:$0xff]
      %v1673 = vld [vmem:[%s18 + $0x18] sm:$0xff]
      %v1674 = vpack.c.bf16 %v1669, %v1669
      %v1675 = vpack.c.bf16 %v1671, %v1670
      %v1676 = vpack.c.bf16 %v1673, %v1672
      %v1678 = vsel %vm689, %v1674, 0
      %1680 = vmatpush.bf16.msra.mxu0 0
      %1681 = vmatpush.bf16.msra.mxu0 0
      %1682 = vmatpush.bf16.msra.mxu0 0
      %1683 = vmatpush.bf16.msra.mxu0 0
      %1684 = vmatpush.bf16.msra.mxu0 0
      %1685 = vmatpush.bf16.msra.mxu0 0
      %1686 = vmatpush.bf16.msra.mxu0 %v1676
      %1687 = vmatpush.bf16.msra.mxu0 %v1675
      %1688 = vmatmul.bf16.gmra.mxu0 %v1678
      %v1689 = vpop.f32.mrf.mxu0
      %v1690 = vadd.f32 0.0, %v1689
      %v1691 = vpop.f32.mrf.mxu0
      %1692 = vdwg.mxu0
      %v1693 = vmul.f32 %v1690, %v1690
      %vm1694 = vcmask 253952
      %v1695 = vsel %vm1694, %v1693, 0.0
      %1696 = vadd.xlane.f32.xlu0 %v1695
      %v1697 = vpop.xlane.xlu0 %1696
      %v1698 = vadd.f32 %v1697, 1e-12
      %v1699 = vrsqrt.pop %v1698
      %v1700 = vmul.f32 %v1699, %v1698
      %v1701 = vmul.f32 %v1700, %v1699
      %v1702 = vmul.f32 0.5, %v1701
      %v1703 = vsub.f32 1.5, %v1702
      %v1704 = vmul.f32 %v1699, %v1703
      %vm1705 = vweird.f32 %v1698
      %vm1706 = vweird.f32 %v1699
      %vm1707 = vmor %vm1705, %vm1706
      %v1708 = vsel %vm1707, %v1699, %v1704
      %v1709 = vmul.f32 %v1690, %v1708
      %v1710 = vld [vmem:[%s19] sm:$0x3]
      %v1711 = vld [vmem:[#allocation2] sm:$0x1]
      %v1713 = vsel %vm689, %v1709, 0
      %v1716 = vsel %vm689, %v1710, 0
      %1718 = vmatpush.xpose.msra.mxu0 0.0
      %1719 = vmatpush.xpose.msra.mxu0 0.0
      %1720 = vmatpush.xpose.msra.mxu0 0.0
      %1721 = vmatpush.xpose.msra.mxu0 0.0
      %1722 = vmatpush.xpose.msra.mxu0 0.0
      %1723 = vmatpush.xpose.msra.mxu0 0.0
      %1724 = vmatpush.xpose.msra.mxu0 0.0
      %1725 = vmatpush.xpose.msra.mxu0 0.0
      %1726 = vmatpush.xpose.msra.mxu0 0.0
      %1727 = vmatpush.xpose.msra.mxu0 0.0
      %1728 = vmatpush.xpose.msra.mxu0 0.0
      %1729 = vmatpush.xpose.msra.mxu0 0.0
      %1730 = vmatpush.xpose.msra.mxu0 0.0
      %1731 = vmatpush.xpose.msra.mxu0 0.0
      %1732 = vmatpush.xpose.msra.mxu0 0.0
      %1733 = vmatpush.xpose.msra.mxu0 %v1716
      %1734 = vmatmul.f32.gmra.mxu0 %v1713
      %v1735 = vpop.f32.mrf.mxu0
      %v1736 = vadd.f32 0.0, %v1735
      %1737 = vdwg.mxu0
      %1739 = vset.pattern.permute.xlu0 0
      %1740 = vperm.xlu0 %1739, %v1711
      %v1741 = vpop.permute.xlu0 %1740
      %v1743 = vperm.slane %v1741, 0
      %v1744 = vmul.f32 %v1743, %v1736
      %vm1745 = vcmask 8192
      %1746 = vst.msk [vmem:[%s674] sm:$0x1] %vm1745, %v1744
      %p1747 = scmp.lt.s32.totalorder %s34, 3
      %s1748 = scalar_select %p1747, %s34, 3
      %s1749 = scalar_lea.vmem %s21, %s1748
      // Predicated region
      $region105: #{_lambda_.3} parent=103 // pred_check
        %p1750 = pneg %p503
      $region106: #{_lambda_.3} parent=103 // pred_check_branch
        %1752 = sbr.rel (%p1750) target = $region108
      $region107: #{_lambda_.3} parent=103 // pred_region
        _
      $region108: #{_lambda_.3} parent=103 // pred_fallthru
        _
    $region104: #{_lambda_.3} parent=5 // pred_fallthru
      _
    %p1753 = scmp.le.s32.totalorder 2, %s29
    // Predicated region
    $region109: #{_lambda_.3} parent=5 // pred_check
      %p1754 = pneg %p1753
    $region110: #{_lambda_.3} parent=5 // pred_check_branch
      %1756 = sbr.rel (%p1754) target = $region112
    $region111: #{_lambda_.3} parent=5 // pred_region
      %s1757 = ssub.s32 %s29, 2
      // Predicated region
      $region113: #{_lambda_.3} parent=111 // pred_check
        %p1758 = pneg %p509
      $region114: #{_lambda_.3} parent=111 // pred_check_branch
        %1760 = sbr.rel (%p1758) target = $region116
      $region115: #{_lambda_.3} parent=111 // pred_region
        %p1761 = scmp.lt.s32.totalorder %s35, 3
        %s1762 = scalar_select %p1761, %s35, 3
        %s1763 = scalar_lea.vmem %s21, %s1762
      $region116: #{_lambda_.3} parent=111 // pred_fallthru
        _
    $region112: #{_lambda_.3} parent=5 // pred_fallthru
      _
  $region6: #{_lambda_.3} parent=0 // loop_footer
    %s33 = sadd.s32 1, %s29
  $region7: #{_lambda_.3} parent=0 // loop_footer_branch
    %28 = sbr.rel target = $region3
  $region8: #{_lambda_.3} parent=0 // loop_exit
    _

// kernel: _lambda_.2
$region0: #{_lambda_.2}
  #allocation0 [shape = 'u32[]', space=smem, size = 0x4, offset = 0x4, fixed_abs, tag = 'smem constant byte address 0x4 - core index']
  #allocation1 [shape = 'u32[72,128]{1,0:T(1,128)}', space=vmem, size = 0x9000, scoped, tag = 'internal scratch']
  %s0 = inlined_call_operand.vmem [shape: f32[2,9,192], index: 0, kind: input, shape index: {}]
  %s1 = inlined_call_operand.vmem [shape: f32[192,32], index: 1, kind: input, shape index: {}]
  %s2 = inlined_call_operand.vmem [shape: f32[9,32], index: 2, kind: input, shape index: {}]
  %s3 = inlined_call_operand.vmem [shape: f32[2,9,32], index: 3, kind: input, shape index: {}]
  %s4 = inlined_call_operand.vmem [shape: f32[9,1], index: 4, kind: input, shape index: {}]
  %s5 = inlined_call_operand.vmem [shape: f32[1,32], index: 5, kind: input, shape index: {}]
  %s6 = inlined_call_operand.vmem [shape: f32[1,32], index: 6, kind: input, shape index: {}]
  %s7 = inlined_call_operand.vmem [shape: f32[2,1,32], index: 7, kind: input, shape index: {}]
  %s8 = inlined_call_operand.vmem [shape: f32[2,1,32], index: 8, kind: input, shape index: {}]
  %s9 = inlined_call_operand.vmem [shape: f32[2,1,32], index: 9, kind: input, shape index: {}]
  %s10 = inlined_call_operand.vmem [shape: f32[2,1,32], index: 10, kind: input, shape index: {}]
  %s11 = inlined_call_operand.vmem [shape: f32[2,32,96], index: 11, kind: input, shape index: {}]
  %s12 = inlined_call_operand.vmem [shape: f32[2,1,96], index: 12, kind: input, shape index: {}]
  %s13 = inlined_call_operand.vmem [shape: f32[2,32,32], index: 13, kind: input, shape index: {}]
  %s14 = inlined_call_operand.vmem [shape: f32[2,1,32], index: 14, kind: input, shape index: {}]
  %s15 = inlined_call_operand.vmem [shape: f32[2,32,128], index: 15, kind: input, shape index: {}]
  %s16 = inlined_call_operand.vmem [shape: f32[2,1,128], index: 16, kind: input, shape index: {}]
  %s17 = inlined_call_operand.vmem [shape: f32[2,128,32], index: 17, kind: input, shape index: {}]
  %s18 = inlined_call_operand.vmem [shape: f32[2,1,32], index: 18, kind: input, shape index: {}]
  %s19 = inlined_call_operand.vmem [shape: f32[1,32], index: 19, kind: input, shape index: {}]
  %s20 = inlined_call_operand.vmem [shape: f32[1,32], index: 20, kind: input, shape index: {}]
  %s21 = inlined_call_operand.vmem [shape: f32[32,32], index: 21, kind: input, shape index: {}]
  %s22 = inlined_call_operand.vmem [shape: f32[2,1,32], index: 22, kind: output, shape index: {}]
  %s23 = sld [smem:[#allocation0]]
  $region121: #{_lambda_.2} parent=0
    _
  %s25 = ssub.s32 1, %s23
  %s26 = scalar_select 0, %s25, %s23
  loop: start=0, step=1, limit=4
  $region2: #{_lambda_.2} parent=0 // loop_pre_header
    _
  $region3: #{_lambda_.2} parent=0 // loop_header
    %s28 = sphi 0, %s32
    %p29 = scmp.ge.s32.totalorder %s28, 4
    %s38 = sphi 0, %s40
    %s41 = sphi 0, %s38
    %s42 = sphi 0, %s41
    %s58 = sphi 0, %s42
    %s62 = sphi 0, %s62
    %s64 = sphi 0, %s62
    %s65 = sphi 0, %s64
    %s79 = sphi 0, %s65
    %s83 = sphi 0, %s83
    %s85 = sphi 0, %s83
    %s86 = sphi 0, %s85
    %s100 = sphi 0, %s86
    %s104 = sphi 0, %s104
    %s106 = sphi 0, %s104
    %s107 = sphi 0, %s106
    %s121 = sphi 0, %s107
    %s125 = sphi 0, %s125
    %s127 = sphi 0, %s125
    %s128 = sphi 0, %s127
    %s142 = sphi 0, %s128
    %s146 = sphi 0, %s146
    %s148 = sphi 0, %s146
    %s149 = sphi 0, %s148
    %s163 = sphi 0, %s149
    %s167 = sphi 0, %s167
    %s169 = sphi 0, %s167
    %s170 = sphi 0, %s169
    %s184 = sphi 0, %s170
    %s188 = sphi 0, %s188
    %s190 = sphi 0, %s188
    %s191 = sphi 0, %s190
    %s205 = sphi 0, %s191
    %s209 = sphi 0, %s209
    %s211 = sphi 0, %s209
    %s212 = sphi 0, %s211
    %s226 = sphi 0, %s212
    %s230 = sphi 0, %s230
    %s232 = sphi 0, %s230
    %s233 = sphi 0, %s232
    %s247 = sphi 0, %s233
    %s251 = sphi 0, %s251
    %s253 = sphi 0, %s251
    %s254 = sphi 0, %s253
    %s268 = sphi 0, %s254
    %s272 = sphi 0, %s272
    %s274 = sphi 0, %s272
    %s275 = sphi 0, %s274
    %s289 = sphi 0, %s275
    %s293 = sphi 0, %s293
    %s295 = sphi 0, %s293
    %s296 = sphi 0, %s295
    %s310 = sphi 0, %s296
    %s314 = sphi 0, %s314
    %s316 = sphi 0, %s314
    %s317 = sphi 0, %s316
    %s331 = sphi 0, %s317
    %s335 = sphi 0, %s335
    %s337 = sphi 0, %s335
    %s338 = sphi 0, %s337
    %s352 = sphi 0, %s338
    %s356 = sphi 0, %s356
    %s358 = sphi 0, %s356
    %s359 = sphi 0, %s358
    %s373 = sphi 0, %s359
    %s377 = sphi 0, %s377
    %s379 = sphi 0, %s377
    %s380 = sphi 0, %s379
    %s394 = sphi 0, %s380
    %s398 = sphi 0, %s398
    %s400 = sphi 0, %s398
    %s401 = sphi 0, %s400
    %s415 = sphi 0, %s401
    %s419 = sphi 0, %s419
    %s421 = sphi 0, %s419
    %s422 = sphi 0, %s421
    %s436 = sphi 0, %s422
    %s440 = sphi 0, %s440
    %s442 = sphi 0, %s440
    %s443 = sphi 0, %s442
    %s457 = sphi 0, %s443
    %s461 = sphi 0, %s461
    %s463 = sphi 0, %s461
    %s464 = sphi 0, %s463
    %s478 = sphi 0, %s464
    %s482 = sphi 0, %s482
    %s484 = sphi 0, %s482
    %s485 = sphi 0, %s484
    %s499 = sphi 0, %s485
    %s505 = sphi 0, %s507
    %s508 = sphi 0, %s505
    %s509 = sphi 0, %s508
    %s525 = sphi 0, %s509
  $region4: #{_lambda_.2} parent=0 // loop_header_branch
    %31 = sbr.rel (%p29) target = $region8
  $region5: #{_lambda_.2} parent=0 // loop_body
    %s33 = ssub.s32 %s28, 1
    %s34 = ssub.s32 %s28, 2
    %s35 = sadd.s32 %s28, 1
    %s36 = ssub.s32 %s28, %s35
    %p37 = scmp.eq.s32.totalorder %s36, 0
    %s39 = sadd.s32 %s38, 1
    %s40 = scalar_select %p37, %s38, %s39
    %p43 = pneg %p37
    %p44 = scmp.eq.s32.totalorder %s28, 1
    %p45 = por %p43, %p44
    %p46 = scmp.ne.s32.totalorder %s38, %s41
    %p47 = scmp.eq.s32.totalorder %s28, 0
    %p48 = por %p46, %p47
    %p49 = scmp.ne.s32.totalorder %s38, %s41
    %p50 = scmp.eq.s32.totalorder %s33, 1
    %p51 = por %p49, %p50
    %p52 = scmp.ne.s32.totalorder %s41, %s42
    %p53 = scmp.eq.s32.totalorder %s33, 0
    %p54 = por %p52, %p53
    %p55 = scmp.ne.s32.totalorder %s41, %s42
    %p56 = scmp.eq.s32.totalorder %s34, 1
    %p57 = por %p55, %p56
    %p59 = scmp.ne.s32.totalorder %s42, %s58
    %p60 = scmp.eq.s32.totalorder %s34, 0
    %p61 = por %p59, %p60
    %s63 = sadd.s32 %s62, 1
    %p66 = scmp.eq.s32.totalorder %s28, 1
    %p67 = scmp.ne.s32.totalorder %s62, %s64
    %p68 = scmp.eq.s32.totalorder %s28, 0
    %p69 = por %p67, %p68
    %p70 = scmp.ne.s32.totalorder %s62, %s64
    %p71 = scmp.eq.s32.totalorder %s33, 1
    %p72 = por %p70, %p71
    %p73 = scmp.ne.s32.totalorder %s64, %s65
    %p74 = scmp.eq.s32.totalorder %s33, 0
    %p75 = por %p73, %p74
    %p76 = scmp.ne.s32.totalorder %s64, %s65
    %p77 = scmp.eq.s32.totalorder %s34, 1
    %p78 = por %p76, %p77
    %p80 = scmp.ne.s32.totalorder %s65, %s79
    %p81 = scmp.eq.s32.totalorder %s34, 0
    %p82 = por %p80, %p81
    %s84 = sadd.s32 %s83, 1
    %p87 = scmp.eq.s32.totalorder %s28, 1
    %p88 = scmp.ne.s32.totalorder %s83, %s85
    %p89 = scmp.eq.s32.totalorder %s28, 0
    %p90 = por %p88, %p89
    %p91 = scmp.ne.s32.totalorder %s83, %s85
    %p92 = scmp.eq.s32.totalorder %s33, 1
    %p93 = por %p91, %p92
    %p94 = scmp.ne.s32.totalorder %s85, %s86
    %p95 = scmp.eq.s32.totalorder %s33, 0
    %p96 = por %p94, %p95
    %p97 = scmp.ne.s32.totalorder %s85, %s86
    %p98 = scmp.eq.s32.totalorder %s34, 1
    %p99 = por %p97, %p98
    %p101 = scmp.ne.s32.totalorder %s86, %s100
    %p102 = scmp.eq.s32.totalorder %s34, 0
    %p103 = por %p101, %p102
    %s105 = sadd.s32 %s104, 1
    %p108 = scmp.eq.s32.totalorder %s28, 1
    %p109 = scmp.ne.s32.totalorder %s104, %s106
    %p110 = scmp.eq.s32.totalorder %s28, 0
    %p111 = por %p109, %p110
    %p112 = scmp.ne.s32.totalorder %s104, %s106
    %p113 = scmp.eq.s32.totalorder %s33, 1
    %p114 = por %p112, %p113
    %p115 = scmp.ne.s32.totalorder %s106, %s107
    %p116 = scmp.eq.s32.totalorder %s33, 0
    %p117 = por %p115, %p116
    %p118 = scmp.ne.s32.totalorder %s106, %s107
    %p119 = scmp.eq.s32.totalorder %s34, 1
    %p120 = por %p118, %p119
    %p122 = scmp.ne.s32.totalorder %s107, %s121
    %p123 = scmp.eq.s32.totalorder %s34, 0
    %p124 = por %p122, %p123
    %s126 = sadd.s32 %s125, 1
    %p129 = scmp.eq.s32.totalorder %s28, 1
    %p130 = scmp.ne.s32.totalorder %s125, %s127
    %p131 = scmp.eq.s32.totalorder %s28, 0
    %p132 = por %p130, %p131
    %p133 = scmp.ne.s32.totalorder %s125, %s127
    %p134 = scmp.eq.s32.totalorder %s33, 1
    %p135 = por %p133, %p134
    %p136 = scmp.ne.s32.totalorder %s127, %s128
    %p137 = scmp.eq.s32.totalorder %s33, 0
    %p138 = por %p136, %p137
    %p139 = scmp.ne.s32.totalorder %s127, %s128
    %p140 = scmp.eq.s32.totalorder %s34, 1
    %p141 = por %p139, %p140
    %p143 = scmp.ne.s32.totalorder %s128, %s142
    %p144 = scmp.eq.s32.totalorder %s34, 0
    %p145 = por %p143, %p144
    %s147 = sadd.s32 %s146, 1
    %p150 = scmp.eq.s32.totalorder %s28, 1
    %p151 = scmp.ne.s32.totalorder %s146, %s148
    %p152 = scmp.eq.s32.totalorder %s28, 0
    %p153 = por %p151, %p152
    %p154 = scmp.ne.s32.totalorder %s146, %s148
    %p155 = scmp.eq.s32.totalorder %s33, 1
    %p156 = por %p154, %p155
    %p157 = scmp.ne.s32.totalorder %s148, %s149
    %p158 = scmp.eq.s32.totalorder %s33, 0
    %p159 = por %p157, %p158
    %p160 = scmp.ne.s32.totalorder %s148, %s149
    %p161 = scmp.eq.s32.totalorder %s34, 1
    %p162 = por %p160, %p161
    %p164 = scmp.ne.s32.totalorder %s149, %s163
    %p165 = scmp.eq.s32.totalorder %s34, 0
    %p166 = por %p164, %p165
    %s168 = sadd.s32 %s167, 1
    %p171 = scmp.eq.s32.totalorder %s28, 1
    %p172 = scmp.ne.s32.totalorder %s167, %s169
    %p173 = scmp.eq.s32.totalorder %s28, 0
    %p174 = por %p172, %p173
    %p175 = scmp.ne.s32.totalorder %s167, %s169
    %p176 = scmp.eq.s32.totalorder %s33, 1
    %p177 = por %p175, %p176
    %p178 = scmp.ne.s32.totalorder %s169, %s170
    %p179 = scmp.eq.s32.totalorder %s33, 0
    %p180 = por %p178, %p179
    %p181 = scmp.ne.s32.totalorder %s169, %s170
    %p182 = scmp.eq.s32.totalorder %s34, 1
    %p183 = por %p181, %p182
    %p185 = scmp.ne.s32.totalorder %s170, %s184
    %p186 = scmp.eq.s32.totalorder %s34, 0
    %p187 = por %p185, %p186
    %s189 = sadd.s32 %s188, 1
    %p192 = scmp.eq.s32.totalorder %s28, 1
    %p193 = scmp.ne.s32.totalorder %s188, %s190
    %p194 = scmp.eq.s32.totalorder %s28, 0
    %p195 = por %p193, %p194
    %p196 = scmp.ne.s32.totalorder %s188, %s190
    %p197 = scmp.eq.s32.totalorder %s33, 1
    %p198 = por %p196, %p197
    %p199 = scmp.ne.s32.totalorder %s190, %s191
    %p200 = scmp.eq.s32.totalorder %s33, 0
    %p201 = por %p199, %p200
    %p202 = scmp.ne.s32.totalorder %s190, %s191
    %p203 = scmp.eq.s32.totalorder %s34, 1
    %p204 = por %p202, %p203
    %p206 = scmp.ne.s32.totalorder %s191, %s205
    %p207 = scmp.eq.s32.totalorder %s34, 0
    %p208 = por %p206, %p207
    %s210 = sadd.s32 %s209, 1
    %p213 = scmp.eq.s32.totalorder %s28, 1
    %p214 = scmp.ne.s32.totalorder %s209, %s211
    %p215 = scmp.eq.s32.totalorder %s28, 0
    %p216 = por %p214, %p215
    %p217 = scmp.ne.s32.totalorder %s209, %s211
    %p218 = scmp.eq.s32.totalorder %s33, 1
    %p219 = por %p217, %p218
    %p220 = scmp.ne.s32.totalorder %s211, %s212
    %p221 = scmp.eq.s32.totalorder %s33, 0
    %p222 = por %p220, %p221
    %p223 = scmp.ne.s32.totalorder %s211, %s212
    %p224 = scmp.eq.s32.totalorder %s34, 1
    %p225 = por %p223, %p224
    %p227 = scmp.ne.s32.totalorder %s212, %s226
    %p228 = scmp.eq.s32.totalorder %s34, 0
    %p229 = por %p227, %p228
    %s231 = sadd.s32 %s230, 1
    %p234 = scmp.eq.s32.totalorder %s28, 1
    %p235 = scmp.ne.s32.totalorder %s230, %s232
    %p236 = scmp.eq.s32.totalorder %s28, 0
    %p237 = por %p235, %p236
    %p238 = scmp.ne.s32.totalorder %s230, %s232
    %p239 = scmp.eq.s32.totalorder %s33, 1
    %p240 = por %p238, %p239
    %p241 = scmp.ne.s32.totalorder %s232, %s233
    %p242 = scmp.eq.s32.totalorder %s33, 0
    %p243 = por %p241, %p242
    %p244 = scmp.ne.s32.totalorder %s232, %s233
    %p245 = scmp.eq.s32.totalorder %s34, 1
    %p246 = por %p244, %p245
    %p248 = scmp.ne.s32.totalorder %s233, %s247
    %p249 = scmp.eq.s32.totalorder %s34, 0
    %p250 = por %p248, %p249
    %s252 = sadd.s32 %s251, 1
    %p255 = scmp.eq.s32.totalorder %s28, 1
    %p256 = scmp.ne.s32.totalorder %s251, %s253
    %p257 = scmp.eq.s32.totalorder %s28, 0
    %p258 = por %p256, %p257
    %p259 = scmp.ne.s32.totalorder %s251, %s253
    %p260 = scmp.eq.s32.totalorder %s33, 1
    %p261 = por %p259, %p260
    %p262 = scmp.ne.s32.totalorder %s253, %s254
    %p263 = scmp.eq.s32.totalorder %s33, 0
    %p264 = por %p262, %p263
    %p265 = scmp.ne.s32.totalorder %s253, %s254
    %p266 = scmp.eq.s32.totalorder %s34, 1
    %p267 = por %p265, %p266
    %p269 = scmp.ne.s32.totalorder %s254, %s268
    %p270 = scmp.eq.s32.totalorder %s34, 0
    %p271 = por %p269, %p270
    %s273 = sadd.s32 %s272, 1
    %p276 = scmp.eq.s32.totalorder %s28, 1
    %p277 = scmp.ne.s32.totalorder %s272, %s274
    %p278 = scmp.eq.s32.totalorder %s28, 0
    %p279 = por %p277, %p278
    %p280 = scmp.ne.s32.totalorder %s272, %s274
    %p281 = scmp.eq.s32.totalorder %s33, 1
    %p282 = por %p280, %p281
    %p283 = scmp.ne.s32.totalorder %s274, %s275
    %p284 = scmp.eq.s32.totalorder %s33, 0
    %p285 = por %p283, %p284
    %p286 = scmp.ne.s32.totalorder %s274, %s275
    %p287 = scmp.eq.s32.totalorder %s34, 1
    %p288 = por %p286, %p287
    %p290 = scmp.ne.s32.totalorder %s275, %s289
    %p291 = scmp.eq.s32.totalorder %s34, 0
    %p292 = por %p290, %p291
    %s294 = sadd.s32 %s293, 1
    %p297 = scmp.eq.s32.totalorder %s28, 1
    %p298 = scmp.ne.s32.totalorder %s293, %s295
    %p299 = scmp.eq.s32.totalorder %s28, 0
    %p300 = por %p298, %p299
    %p301 = scmp.ne.s32.totalorder %s293, %s295
    %p302 = scmp.eq.s32.totalorder %s33, 1
    %p303 = por %p301, %p302
    %p304 = scmp.ne.s32.totalorder %s295, %s296
    %p305 = scmp.eq.s32.totalorder %s33, 0
    %p306 = por %p304, %p305
    %p307 = scmp.ne.s32.totalorder %s295, %s296
    %p308 = scmp.eq.s32.totalorder %s34, 1
    %p309 = por %p307, %p308
    %p311 = scmp.ne.s32.totalorder %s296, %s310
    %p312 = scmp.eq.s32.totalorder %s34, 0
    %p313 = por %p311, %p312
    %s315 = sadd.s32 %s314, 1
    %p318 = scmp.eq.s32.totalorder %s28, 1
    %p319 = scmp.ne.s32.totalorder %s314, %s316
    %p320 = scmp.eq.s32.totalorder %s28, 0
    %p321 = por %p319, %p320
    %p322 = scmp.ne.s32.totalorder %s314, %s316
    %p323 = scmp.eq.s32.totalorder %s33, 1
    %p324 = por %p322, %p323
    %p325 = scmp.ne.s32.totalorder %s316, %s317
    %p326 = scmp.eq.s32.totalorder %s33, 0
    %p327 = por %p325, %p326
    %p328 = scmp.ne.s32.totalorder %s316, %s317
    %p329 = scmp.eq.s32.totalorder %s34, 1
    %p330 = por %p328, %p329
    %p332 = scmp.ne.s32.totalorder %s317, %s331
    %p333 = scmp.eq.s32.totalorder %s34, 0
    %p334 = por %p332, %p333
    %s336 = sadd.s32 %s335, 1
    %p339 = scmp.eq.s32.totalorder %s28, 1
    %p340 = scmp.ne.s32.totalorder %s335, %s337
    %p341 = scmp.eq.s32.totalorder %s28, 0
    %p342 = por %p340, %p341
    %p343 = scmp.ne.s32.totalorder %s335, %s337
    %p344 = scmp.eq.s32.totalorder %s33, 1
    %p345 = por %p343, %p344
    %p346 = scmp.ne.s32.totalorder %s337, %s338
    %p347 = scmp.eq.s32.totalorder %s33, 0
    %p348 = por %p346, %p347
    %p349 = scmp.ne.s32.totalorder %s337, %s338
    %p350 = scmp.eq.s32.totalorder %s34, 1
    %p351 = por %p349, %p350
    %p353 = scmp.ne.s32.totalorder %s338, %s352
    %p354 = scmp.eq.s32.totalorder %s34, 0
    %p355 = por %p353, %p354
    %s357 = sadd.s32 %s356, 1
    %p360 = scmp.eq.s32.totalorder %s28, 1
    %p361 = scmp.ne.s32.totalorder %s356, %s358
    %p362 = scmp.eq.s32.totalorder %s28, 0
    %p363 = por %p361, %p362
    %p364 = scmp.ne.s32.totalorder %s356, %s358
    %p365 = scmp.eq.s32.totalorder %s33, 1
    %p366 = por %p364, %p365
    %p367 = scmp.ne.s32.totalorder %s358, %s359
    %p368 = scmp.eq.s32.totalorder %s33, 0
    %p369 = por %p367, %p368
    %p370 = scmp.ne.s32.totalorder %s358, %s359
    %p371 = scmp.eq.s32.totalorder %s34, 1
    %p372 = por %p370, %p371
    %p374 = scmp.ne.s32.totalorder %s359, %s373
    %p375 = scmp.eq.s32.totalorder %s34, 0
    %p376 = por %p374, %p375
    %s378 = sadd.s32 %s377, 1
    %p381 = scmp.eq.s32.totalorder %s28, 1
    %p382 = scmp.ne.s32.totalorder %s377, %s379
    %p383 = scmp.eq.s32.totalorder %s28, 0
    %p384 = por %p382, %p383
    %p385 = scmp.ne.s32.totalorder %s377, %s379
    %p386 = scmp.eq.s32.totalorder %s33, 1
    %p387 = por %p385, %p386
    %p388 = scmp.ne.s32.totalorder %s379, %s380
    %p389 = scmp.eq.s32.totalorder %s33, 0
    %p390 = por %p388, %p389
    %p391 = scmp.ne.s32.totalorder %s379, %s380
    %p392 = scmp.eq.s32.totalorder %s34, 1
    %p393 = por %p391, %p392
    %p395 = scmp.ne.s32.totalorder %s380, %s394
    %p396 = scmp.eq.s32.totalorder %s34, 0
    %p397 = por %p395, %p396
    %s399 = sadd.s32 %s398, 1
    %p402 = scmp.eq.s32.totalorder %s28, 1
    %p403 = scmp.ne.s32.totalorder %s398, %s400
    %p404 = scmp.eq.s32.totalorder %s28, 0
    %p405 = por %p403, %p404
    %p406 = scmp.ne.s32.totalorder %s398, %s400
    %p407 = scmp.eq.s32.totalorder %s33, 1
    %p408 = por %p406, %p407
    %p409 = scmp.ne.s32.totalorder %s400, %s401
    %p410 = scmp.eq.s32.totalorder %s33, 0
    %p411 = por %p409, %p410
    %p412 = scmp.ne.s32.totalorder %s400, %s401
    %p413 = scmp.eq.s32.totalorder %s34, 1
    %p414 = por %p412, %p413
    %p416 = scmp.ne.s32.totalorder %s401, %s415
    %p417 = scmp.eq.s32.totalorder %s34, 0
    %p418 = por %p416, %p417
    %s420 = sadd.s32 %s419, 1
    %p423 = scmp.eq.s32.totalorder %s28, 1
    %p424 = scmp.ne.s32.totalorder %s419, %s421
    %p425 = scmp.eq.s32.totalorder %s28, 0
    %p426 = por %p424, %p425
    %p427 = scmp.ne.s32.totalorder %s419, %s421
    %p428 = scmp.eq.s32.totalorder %s33, 1
    %p429 = por %p427, %p428
    %p430 = scmp.ne.s32.totalorder %s421, %s422
    %p431 = scmp.eq.s32.totalorder %s33, 0
    %p432 = por %p430, %p431
    %p433 = scmp.ne.s32.totalorder %s421, %s422
    %p434 = scmp.eq.s32.totalorder %s34, 1
    %p435 = por %p433, %p434
    %p437 = scmp.ne.s32.totalorder %s422, %s436
    %p438 = scmp.eq.s32.totalorder %s34, 0
    %p439 = por %p437, %p438
    %s441 = sadd.s32 %s440, 1
    %p444 = scmp.eq.s32.totalorder %s28, 1
    %p445 = scmp.ne.s32.totalorder %s440, %s442
    %p446 = scmp.eq.s32.totalorder %s28, 0
    %p447 = por %p445, %p446
    %p448 = scmp.ne.s32.totalorder %s440, %s442
    %p449 = scmp.eq.s32.totalorder %s33, 1
    %p450 = por %p448, %p449
    %p451 = scmp.ne.s32.totalorder %s442, %s443
    %p452 = scmp.eq.s32.totalorder %s33, 0
    %p453 = por %p451, %p452
    %p454 = scmp.ne.s32.totalorder %s442, %s443
    %p455 = scmp.eq.s32.totalorder %s34, 1
    %p456 = por %p454, %p455
    %p458 = scmp.ne.s32.totalorder %s443, %s457
    %p459 = scmp.eq.s32.totalorder %s34, 0
    %p460 = por %p458, %p459
    %s462 = sadd.s32 %s461, 1
    %p465 = scmp.eq.s32.totalorder %s28, 1
    %p466 = scmp.ne.s32.totalorder %s461, %s463
    %p467 = scmp.eq.s32.totalorder %s28, 0
    %p468 = por %p466, %p467
    %p469 = scmp.ne.s32.totalorder %s461, %s463
    %p470 = scmp.eq.s32.totalorder %s33, 1
    %p471 = por %p469, %p470
    %p472 = scmp.ne.s32.totalorder %s463, %s464
    %p473 = scmp.eq.s32.totalorder %s33, 0
    %p474 = por %p472, %p473
    %p475 = scmp.ne.s32.totalorder %s463, %s464
    %p476 = scmp.eq.s32.totalorder %s34, 1
    %p477 = por %p475, %p476
    %p479 = scmp.ne.s32.totalorder %s464, %s478
    %p480 = scmp.eq.s32.totalorder %s34, 0
    %p481 = por %p479, %p480
    %s483 = sadd.s32 %s482, 1
    %p486 = scmp.eq.s32.totalorder %s28, 1
    %p487 = scmp.ne.s32.totalorder %s482, %s484
    %p488 = scmp.eq.s32.totalorder %s28, 0
    %p489 = por %p487, %p488
    %p490 = scmp.ne.s32.totalorder %s482, %s484
    %p491 = scmp.eq.s32.totalorder %s33, 1
    %p492 = por %p490, %p491
    %p493 = scmp.ne.s32.totalorder %s484, %s485
    %p494 = scmp.eq.s32.totalorder %s33, 0
    %p495 = por %p493, %p494
    %p496 = scmp.ne.s32.totalorder %s484, %s485
    %p497 = scmp.eq.s32.totalorder %s34, 1
    %p498 = por %p496, %p497
    %p500 = scmp.ne.s32.totalorder %s485, %s499
    %p501 = scmp.eq.s32.totalorder %s34, 0
    %p502 = por %p500, %p501
    %s503 = ssub.s32 %s28, %s35
    %p504 = scmp.eq.s32.totalorder %s503, 0
    %s506 = sadd.s32 %s505, 1
    %s507 = scalar_select %p504, %s505, %s506
    %p510 = pneg %p504
    %p511 = scmp.eq.s32.totalorder %s28, 1
    %p512 = por %p510, %p511
    %p513 = scmp.ne.s32.totalorder %s505, %s508
    %p514 = scmp.eq.s32.totalorder %s28, 0
    %p515 = por %p513, %p514
    %p516 = scmp.ne.s32.totalorder %s505, %s508
    %p517 = scmp.eq.s32.totalorder %s33, 1
    %p518 = por %p516, %p517
    %p519 = scmp.ne.s32.totalorder %s508, %s509
    %p520 = scmp.eq.s32.totalorder %s33, 0
    %p521 = por %p519, %p520
    %p522 = scmp.ne.s32.totalorder %s508, %s509
    %p523 = scmp.eq.s32.totalorder %s34, 1
    %p524 = por %p522, %p523
    %p526 = scmp.ne.s32.totalorder %s509, %s525
    %p527 = scmp.eq.s32.totalorder %s34, 0
    %p528 = por %p526, %p527
    %p529 = scmp.le.s32.totalorder 1, %s28
    %p530 = scmp.lt.s32.totalorder %s28, 3
    %p531 = pnand %p529, %p530
    %p532 = pneg %p531
    // Predicated region
    $region9: #{_lambda_.2} parent=5 // pred_check
      _
    $region10: #{_lambda_.2} parent=5 // pred_check_branch
      %534 = sbr.rel (%p531) target = $region12
    $region11: #{_lambda_.2} parent=5 // pred_region
      %s535 = ssub.s32 %s28, 1
      // Predicated region
      $region13: #{_lambda_.2} parent=11 // pred_check
        %p536 = pneg %p75
      $region14: #{_lambda_.2} parent=11 // pred_check_branch
        %538 = sbr.rel (%p536) target = $region16
      $region15: #{_lambda_.2} parent=11 // pred_region
        _
      $region16: #{_lambda_.2} parent=11 // pred_fallthru
        _
      // Predicated region
      $region17: #{_lambda_.2} parent=11 // pred_check
        %p539 = pneg %p96
      $region18: #{_lambda_.2} parent=11 // pred_check_branch
        %541 = sbr.rel (%p539) target = $region20
      $region19: #{_lambda_.2} parent=11 // pred_region
        _
      $region20: #{_lambda_.2} parent=11 // pred_fallthru
        _
      // Predicated region
      $region21: #{_lambda_.2} parent=11 // pred_check
        %p542 = pneg %p117
      $region22: #{_lambda_.2} parent=11 // pred_check_branch
        %544 = sbr.rel (%p542) target = $region24
      $region23: #{_lambda_.2} parent=11 // pred_region
        _
      $region24: #{_lambda_.2} parent=11 // pred_fallthru
        _
      // Predicated region
      $region25: #{_lambda_.2} parent=11 // pred_check
        %p545 = pneg %p138
      $region26: #{_lambda_.2} parent=11 // pred_check_branch
        %547 = sbr.rel (%p545) target = $region28
      $region27: #{_lambda_.2} parent=11 // pred_region
        _
      $region28: #{_lambda_.2} parent=11 // pred_fallthru
        _
      // Predicated region
      $region29: #{_lambda_.2} parent=11 // pred_check
        %p548 = pneg %p159
      $region30: #{_lambda_.2} parent=11 // pred_check_branch
        %550 = sbr.rel (%p548) target = $region32
      $region31: #{_lambda_.2} parent=11 // pred_region
        _
      $region32: #{_lambda_.2} parent=11 // pred_fallthru
        _
      // Predicated region
      $region33: #{_lambda_.2} parent=11 // pred_check
        %p551 = pneg %p180
      $region34: #{_lambda_.2} parent=11 // pred_check_branch
        %553 = sbr.rel (%p551) target = $region36
      $region35: #{_lambda_.2} parent=11 // pred_region
        _
      $region36: #{_lambda_.2} parent=11 // pred_fallthru
        _
      // Predicated region
      $region37: #{_lambda_.2} parent=11 // pred_check
        %p554 = pneg %p201
      $region38: #{_lambda_.2} parent=11 // pred_check_branch
        %556 = sbr.rel (%p554) target = $region40
      $region39: #{_lambda_.2} parent=11 // pred_region
        _
      $region40: #{_lambda_.2} parent=11 // pred_fallthru
        _
      // Predicated region
      $region41: #{_lambda_.2} parent=11 // pred_check
        %p557 = pneg %p222
      $region42: #{_lambda_.2} parent=11 // pred_check_branch
        %559 = sbr.rel (%p557) target = $region44
      $region43: #{_lambda_.2} parent=11 // pred_region
        _
      $region44: #{_lambda_.2} parent=11 // pred_fallthru
        _
      // Predicated region
      $region45: #{_lambda_.2} parent=11 // pred_check
        %p560 = pneg %p243
      $region46: #{_lambda_.2} parent=11 // pred_check_branch
        %562 = sbr.rel (%p560) target = $region48
      $region47: #{_lambda_.2} parent=11 // pred_region
        _
      $region48: #{_lambda_.2} parent=11 // pred_fallthru
        _
      // Predicated region
      $region49: #{_lambda_.2} parent=11 // pred_check
        %p563 = pneg %p264
      $region50: #{_lambda_.2} parent=11 // pred_check_branch
        %565 = sbr.rel (%p563) target = $region52
      $region51: #{_lambda_.2} parent=11 // pred_region
        _
      $region52: #{_lambda_.2} parent=11 // pred_fallthru
        _
      // Predicated region
      $region53: #{_lambda_.2} parent=11 // pred_check
        %p566 = pneg %p285
      $region54: #{_lambda_.2} parent=11 // pred_check_branch
        %568 = sbr.rel (%p566) target = $region56
      $region55: #{_lambda_.2} parent=11 // pred_region
        _
      $region56: #{_lambda_.2} parent=11 // pred_fallthru
        _
      // Predicated region
      $region57: #{_lambda_.2} parent=11 // pred_check
        %p569 = pneg %p306
      $region58: #{_lambda_.2} parent=11 // pred_check_branch
        %571 = sbr.rel (%p569) target = $region60
      $region59: #{_lambda_.2} parent=11 // pred_region
        _
      $region60: #{_lambda_.2} parent=11 // pred_fallthru
        _
      // Predicated region
      $region61: #{_lambda_.2} parent=11 // pred_check
        %p572 = pneg %p327
      $region62: #{_lambda_.2} parent=11 // pred_check_branch
        %574 = sbr.rel (%p572) target = $region64
      $region63: #{_lambda_.2} parent=11 // pred_region
        _
      $region64: #{_lambda_.2} parent=11 // pred_fallthru
        _
      // Predicated region
      $region65: #{_lambda_.2} parent=11 // pred_check
        %p575 = pneg %p348
      $region66: #{_lambda_.2} parent=11 // pred_check_branch
        %577 = sbr.rel (%p575) target = $region68
      $region67: #{_lambda_.2} parent=11 // pred_region
        _
      $region68: #{_lambda_.2} parent=11 // pred_fallthru
        _
      // Predicated region
      $region69: #{_lambda_.2} parent=11 // pred_check
        %p578 = pneg %p369
      $region70: #{_lambda_.2} parent=11 // pred_check_branch
        %580 = sbr.rel (%p578) target = $region72
      $region71: #{_lambda_.2} parent=11 // pred_region
        _
      $region72: #{_lambda_.2} parent=11 // pred_fallthru
        _
      // Predicated region
      $region73: #{_lambda_.2} parent=11 // pred_check
        %p581 = pneg %p390
      $region74: #{_lambda_.2} parent=11 // pred_check_branch
        %583 = sbr.rel (%p581) target = $region76
      $region75: #{_lambda_.2} parent=11 // pred_region
        _
      $region76: #{_lambda_.2} parent=11 // pred_fallthru
        _
      // Predicated region
      $region77: #{_lambda_.2} parent=11 // pred_check
        %p584 = pneg %p411
      $region78: #{_lambda_.2} parent=11 // pred_check_branch
        %586 = sbr.rel (%p584) target = $region80
      $region79: #{_lambda_.2} parent=11 // pred_region
        _
      $region80: #{_lambda_.2} parent=11 // pred_fallthru
        _
      // Predicated region
      $region81: #{_lambda_.2} parent=11 // pred_check
        %p587 = pneg %p432
      $region82: #{_lambda_.2} parent=11 // pred_check_branch
        %589 = sbr.rel (%p587) target = $region84
      $region83: #{_lambda_.2} parent=11 // pred_region
        _
      $region84: #{_lambda_.2} parent=11 // pred_fallthru
        _
      // Predicated region
      $region85: #{_lambda_.2} parent=11 // pred_check
        %p590 = pneg %p453
      $region86: #{_lambda_.2} parent=11 // pred_check_branch
        %592 = sbr.rel (%p590) target = $region88
      $region87: #{_lambda_.2} parent=11 // pred_region
        _
      $region88: #{_lambda_.2} parent=11 // pred_fallthru
        _
      // Predicated region
      $region89: #{_lambda_.2} parent=11 // pred_check
        %p593 = pneg %p474
      $region90: #{_lambda_.2} parent=11 // pred_check_branch
        %595 = sbr.rel (%p593) target = $region92
      $region91: #{_lambda_.2} parent=11 // pred_region
        _
      $region92: #{_lambda_.2} parent=11 // pred_fallthru
        _
      // Predicated region
      $region93: #{_lambda_.2} parent=11 // pred_check
        %p596 = pneg %p495
      $region94: #{_lambda_.2} parent=11 // pred_check_branch
        %598 = sbr.rel (%p596) target = $region96
      $region95: #{_lambda_.2} parent=11 // pred_region
        _
      $region96: #{_lambda_.2} parent=11 // pred_fallthru
        _
    $region12: #{_lambda_.2} parent=5 // pred_fallthru
      _
    %p599 = scmp.lt.s32.totalorder %s28, 2
    // Predicated region
    $region97: #{_lambda_.2} parent=5 // pred_check
      %p600 = pneg %p599
    $region98: #{_lambda_.2} parent=5 // pred_check_branch
      %602 = sbr.rel (%p600) target = $region100
    $region99: #{_lambda_.2} parent=5 // pred_region
      // Predicated region
      $region101: #{_lambda_.2} parent=99 // pred_check
        %p603 = pneg %p48
      $region102: #{_lambda_.2} parent=99 // pred_check_branch
        %605 = sbr.rel (%p603) target = $region104
      $region103: #{_lambda_.2} parent=99 // pred_region
        %p606 = scmp.lt.s32.totalorder %s28, 1
        %s607 = scalar_select %p606, %s28, 1
        %s608 = smul.addr %s607, 4
        %s609 = smul.addr %s608, 8
        %s610 = scalar_lea.vmem %s0, %s609
      $region104: #{_lambda_.2} parent=99 // pred_fallthru
        _
    $region100: #{_lambda_.2} parent=5 // pred_fallthru
      _
    %p611 = scmp.le.s32.totalorder 1, %s28
    %p612 = scmp.lt.s32.totalorder %s28, 3
    %p613 = pnand %p611, %p612
    %p614 = pneg %p613
    // Predicated region
    $region105: #{_lambda_.2} parent=5 // pred_check
      _
    $region106: #{_lambda_.2} parent=5 // pred_check_branch
      %616 = sbr.rel (%p613) target = $region108
    $region107: #{_lambda_.2} parent=5 // pred_region
      %s617 = ssub.s32 %s28, 1
      %p618 = scmp.lt.s32.totalorder %s33, 1
      %s619 = scalar_select %p618, %s33, 1
      %s620 = smul.addr %s619, 4
      %s621 = smul.addr %s620, 8
      %s622 = scalar_lea.vmem %s0, %s621
      %p623 = pneg %p54
      %p624 = pneg %p51
      %p625 = pneg %p75
      %p626 = pneg %p72
      %p627 = pneg %p96
      %p628 = pneg %p93
      %p629 = pneg %p117
      %p630 = pneg %p114
      %p631 = pneg %p138
      %p632 = pneg %p135
      %p633 = pneg %p159
      %p634 = pneg %p156
      %p635 = pneg %p180
      %p636 = pneg %p177
      %p637 = pneg %p201
      %p638 = pneg %p198
      %p639 = pneg %p222
      %p640 = pneg %p219
      %p641 = pneg %p243
      %p642 = pneg %p240
      %p643 = pneg %p264
      %p644 = pneg %p261
      %p645 = pneg %p285
      %p646 = pneg %p282
      %p647 = pneg %p306
      %p648 = pneg %p303
      %p649 = pneg %p327
      %p650 = pneg %p324
      %p651 = pneg %p348
      %p652 = pneg %p345
      %p653 = pneg %p369
      %p654 = pneg %p366
      %p655 = pneg %p390
      %p656 = pneg %p387
      %p657 = pneg %p411
      %p658 = pneg %p408
      %p659 = pneg %p432
      %p660 = pneg %p429
      %p661 = pneg %p453
      %p662 = pneg %p450
      %p663 = pneg %p474
      %p664 = pneg %p471
      %p665 = pneg %p495
      %p666 = pneg %p492
      %p667 = pneg %p521
      %p668 = pneg %p518
      %p669 = scmp.lt.s32.totalorder %s33, 1
      %s670 = scalar_select %p669, %s33, 1
      %s671 = scalar_lea.vmem %s22, %s670
      %p672 = scmp.lt.s32.totalorder %s33, 1
      %s673 = scalar_select %p672, %s33, 1
      %s674 = smul.addr %s673, 4
      %s675 = smul.addr %s674, 8
      %s676 = scalar_lea.vmem %s0, %s675
      %p677 = scmp.lt.s32.totalorder %s33, 1
      %s678 = scalar_select %p677, %s33, 1
      %s679 = scalar_lea.vmem %s22, %s678
      %v681 = vld [vmem:[%s676] sm:$0xff]
      %v682 = vld [vmem:[%s676 + $0x8] sm:$0xff]
      %v683 = vld [vmem:[%s676 + $0x10] sm:$0x1]
      %v684 = vld [vmem:[%s676 + $0x18] sm:$0x1]
      %v685 = vld [vmem:[%s1] sm:$0xff]
      %v686 = vld [vmem:[%s1 + $0x8] sm:$0xff]
      %v687 = vld [vmem:[%s1 + $0x10] sm:$0xff]
      %v688 = vld [vmem:[%s1 + $0x18] sm:$0xff]
      %v689 = vld [vmem:[%s1 + $0x20] sm:$0xff]
      %v690 = vld [vmem:[%s1 + $0x28] sm:$0xff]
      %v691 = vld [vmem:[%s1 + $0x30] sm:$0xff]
      %v692 = vld [vmem:[%s1 + $0x38] sm:$0xff]
      %v693 = vld [vmem:[%s1 + $0x40] sm:$0xff]
      %v694 = vld [vmem:[%s1 + $0x48] sm:$0xff]
      %v695 = vld [vmem:[%s1 + $0x50] sm:$0xff]
      %v696 = vld [vmem:[%s1 + $0x58] sm:$0xff]
      %v697 = vld [vmem:[%s1 + $0x60] sm:$0xff]
      %v698 = vld [vmem:[%s1 + $0x68] sm:$0xff]
      %v699 = vld [vmem:[%s1 + $0x70] sm:$0xff]
      %v700 = vld [vmem:[%s1 + $0x78] sm:$0xff]
      %v701 = vld [vmem:[%s1 + $0x80] sm:$0xff]
      %v702 = vld [vmem:[%s1 + $0x88] sm:$0xff]
      %v703 = vld [vmem:[%s1 + $0x90] sm:$0xff]
      %v704 = vld [vmem:[%s1 + $0x98] sm:$0xff]
      %v705 = vld [vmem:[%s1 + $0xa0] sm:$0xff]
      %v706 = vld [vmem:[%s1 + $0xa8] sm:$0xff]
      %v707 = vld [vmem:[%s1 + $0xb0] sm:$0xff]
      %v708 = vld [vmem:[%s1 + $0xb8] sm:$0xff]
      %v709 = vpack.c.bf16 %v683, %v681
      %v710 = vpack.c.bf16 %v684, %v682
      %v711 = vpack.c.bf16 %v686, %v685
      %v712 = vpack.c.bf16 %v688, %v687
      %v713 = vpack.c.bf16 %v690, %v689
      %v714 = vpack.c.bf16 %v692, %v691
      %v715 = vpack.c.bf16 %v694, %v693
      %v716 = vpack.c.bf16 %v696, %v695
      %v717 = vpack.c.bf16 %v698, %v697
      %v718 = vpack.c.bf16 %v700, %v699
      %v719 = vpack.c.bf16 %v702, %v701
      %v720 = vpack.c.bf16 %v704, %v703
      %v721 = vpack.c.bf16 %v706, %v705
      %v722 = vpack.c.bf16 %v708, %v707
      %v723 = vld [vmem:[%s2] sm:$0xff]
      %v724 = vld [vmem:[%s2 + $0x8] sm:$0x1]
      %vm725 = vcmask 523264
      %v727 = vsel %vm725, %v710, 0
      %729 = vmatpush.bf16.msra.mxu0 %v718
      %730 = vmatpush.bf16.msra.mxu0 %v717
      %731 = vmatpush.bf16.msra.mxu0 %v716
      %732 = vmatpush.bf16.msra.mxu0 %v715
      %733 = vmatpush.bf16.msra.mxu0 %v714
      %734 = vmatpush.bf16.msra.mxu0 %v713
      %735 = vmatpush.bf16.msra.mxu0 %v712
      %736 = vmatpush.bf16.msra.mxu0 %v711
      %737 = vmatmul.bf16.gmra.mxu0 %v709
      %v738 = vpop.f32.mrf.mxu0
      %v739 = vadd.f32 %v723, %v738
      %v740 = vpop.f32.mrf.mxu0
      %v741 = vadd.f32 %v724, %v740
      %742 = vdwg.mxu0
      %743 = vmatpush.bf16.msra.mxu0 0
      %744 = vmatpush.bf16.msra.mxu0 0
      %745 = vmatpush.bf16.msra.mxu0 0
      %746 = vmatpush.bf16.msra.mxu0 0
      %747 = vmatpush.bf16.msra.mxu0 %v722
      %748 = vmatpush.bf16.msra.mxu0 %v721
      %749 = vmatpush.bf16.msra.mxu0 %v720
      %750 = vmatpush.bf16.msra.mxu0 %v719
      %751 = vmatmul.bf16.gmra.mxu0 %v727
      %v752 = vpop.f32.mrf.mxu0
      %v753 = vadd.f32 %v739, %v752
      %v754 = vpop.f32.mrf.mxu0
      %v755 = vadd.f32 %v741, %v754
      %756 = vdwg.mxu0
      %v757 = vld [vmem:[%s5] sm:$0x1]
      %v758 = vld [vmem:[%s6] sm:$0x1]
      %vm759 = vcmask 261120
      %v760 = vsel %vm759, %v753, 0.0
      %761 = vadd.xlane.f32.xlu0 %v760
      %v762 = vpop.xlane.xlu0 %761
      %vm763 = vcmask 253952
      %v764 = vsel %vm763, %v755, 0.0
      %765 = vadd.xlane.f32.xlu0 %v764
      %v766 = vpop.xlane.xlu0 %765
      %v767 = vrcp.pop 32.0
      %v768 = vmul.f32 32.0, %v767
      %v769 = vsub.f32 1.0, %v768
      %v770 = vmul.f32 %v767, %v769
      %v771 = vadd.f32 %v767, %v770
      %vm772 = vweird.f32 %v767
      %v773 = vsel %vm772, %v767, %v771
      %v774 = vmul.f32 %v762, %v773
      %v775 = vmul.f32 %v766, %v773
      %v776 = vsub.f32 %v753, %v774
      %v777 = vsub.f32 %v755, %v775
      %v778 = vmul.f32 %v776, %v776
      %v779 = vmul.f32 %v777, %v777
      %v780 = vsel %vm759, %v778, 0.0
      %781 = vadd.xlane.f32.xlu0 %v780
      %v782 = vpop.xlane.xlu0 %781
      %v783 = vsel %vm763, %v779, 0.0
      %784 = vadd.xlane.f32.xlu0 %v783
      %v785 = vpop.xlane.xlu0 %784
      %v786 = vmul.f32 %v782, %v773
      %v787 = vmul.f32 %v785, %v773
      %v788 = vadd.f32 %v786, 1e-05
      %v789 = vadd.f32 %v787, 1e-05
      %v790 = vrsqrt.pop %v788
      %v791 = vmul.f32 %v790, %v788
      %v792 = vmul.f32 %v791, %v790
      %v793 = vmul.f32 0.5, %v792
      %v794 = vsub.f32 1.5, %v793
      %v795 = vmul.f32 %v790, %v794
      %vm796 = vweird.f32 %v788
      %vm797 = vweird.f32 %v790
      %vm798 = vmor %vm796, %vm797
      %v799 = vsel %vm798, %v790, %v795
      %v800 = vrsqrt.pop %v789
      %v801 = vmul.f32 %v800, %v789
      %v802 = vmul.f32 %v801, %v800
      %v803 = vmul.f32 0.5, %v802
      %v804 = vsub.f32 1.5, %v803
      %v805 = vmul.f32 %v800, %v804
      %vm806 = vweird.f32 %v789
      %vm807 = vweird.f32 %v800
      %vm808 = vmor %vm806, %vm807
      %v809 = vsel %vm808, %v800, %v805
      %v810 = vmul.f32 %v776, %v799
      %v811 = vmul.f32 %v777, %v809
      %v813 = vperm.slane %v757, 0
      %v815 = vmul.f32 %v810, %v813
      %v816 = vmul.f32 %v811, %v813
      %v818 = vperm.slane %v758, 0
      %v820 = vadd.f32 %v815, %v818
      %v821 = vadd.f32 %v816, %v818
      %v822 = vld [vmem:[%s7] sm:$0x1]
      %v823 = vld [vmem:[%s8] sm:$0x1]
      %v824 = vsel %vm759, %v820, 0.0
      %825 = vadd.xlane.f32.xlu0 %v824
      %v826 = vpop.xlane.xlu0 %825
      %v827 = vsel %vm763, %v821, 0.0
      %828 = vadd.xlane.f32.xlu0 %v827
      %v829 = vpop.xlane.xlu0 %828
      %v830 = vmul.f32 %v826, %v773
      %v831 = vmul.f32 %v829, %v773
      %v832 = vsub.f32 %v820, %v830
      %v833 = vsub.f32 %v821, %v831
      %v834 = vmul.f32 %v832, %v832
      %v835 = vmul.f32 %v833, %v833
      %v836 = vsel %vm759, %v834, 0.0
      %837 = vadd.xlane.f32.xlu0 %v836
      %v838 = vpop.xlane.xlu0 %837
      %v839 = vsel %vm763, %v835, 0.0
      %840 = vadd.xlane.f32.xlu0 %v839
      %v841 = vpop.xlane.xlu0 %840
      %v842 = vmul.f32 %v838, %v773
      %v843 = vmul.f32 %v841, %v773
      %v844 = vadd.f32 %v842, 1e-05
      %v845 = vadd.f32 %v843, 1e-05
      %v846 = vrsqrt.pop %v844
      %v847 = vmul.f32 %v846, %v844
      %v848 = vmul.f32 %v847, %v846
      %v849 = vmul.f32 0.5, %v848
      %v850 = vsub.f32 1.5, %v849
      %v851 = vmul.f32 %v846, %v850
      %vm852 = vweird.f32 %v844
      %vm853 = vweird.f32 %v846
      %vm854 = vmor %vm852, %vm853
      %v855 = vsel %vm854, %v846, %v851
      %v856 = vrsqrt.pop %v845
      %v857 = vmul.f32 %v856, %v845
      %v858 = vmul.f32 %v857, %v856
      %v859 = vmul.f32 0.5, %v858
      %v860 = vsub.f32 1.5, %v859
      %v861 = vmul.f32 %v856, %v860
      %vm862 = vweird.f32 %v845
      %vm863 = vweird.f32 %v856
      %vm864 = vmor %vm862, %vm863
      %v865 = vsel %vm864, %v856, %v861
      %v866 = vmul.f32 %v832, %v855
      %v867 = vmul.f32 %v833, %v865
      %v869 = vperm.slane %v822, 0
      %v871 = vmul.f32 %v866, %v869
      %v872 = vmul.f32 %v867, %v869
      %v874 = vperm.slane %v823, 0
      %v876 = vadd.f32 %v871, %v874
      %v877 = vadd.f32 %v872, %v874
      %v878 = vld [vmem:[%s11] sm:$0xff]
      %v879 = vld [vmem:[%s11 + $0x8] sm:$0xff]
      %v880 = vld [vmem:[%s11 + $0x10] sm:$0xff]
      %v881 = vld [vmem:[%s11 + $0x18] sm:$0xff]
      %v882 = vpack.c.bf16 %v877, %v876
      %v883 = vpack.c.bf16 %v879, %v878
      %v884 = vpack.c.bf16 %v881, %v880
      %v885 = vld [vmem:[%s12] sm:$0x1]
      %v887 = vperm.slane %v885, 0
      %v890 = vsel %vm759, %v882, 0
      %892 = vmatpush.bf16.msra.mxu0 0
      %893 = vmatpush.bf16.msra.mxu0 0
      %894 = vmatpush.bf16.msra.mxu0 0
      %895 = vmatpush.bf16.msra.mxu0 0
      %896 = vmatpush.bf16.msra.mxu0 0
      %897 = vmatpush.bf16.msra.mxu0 0
      %898 = vmatpush.bf16.msra.mxu0 %v884
      %899 = vmatpush.bf16.msra.mxu0 %v883
      %900 = vmatmul.bf16.gmra.mxu0 %v890
      %v901 = vpop.f32.mrf.mxu0
      %v902 = vadd.f32 %v887, %v901
      %v903 = vpop.f32.mrf.mxu0
      %v904 = vadd.f32 %v887, %v903
      %905 = vdwg.mxu0
      %v906 = vpack.c.bf16 %v904, %v902
      %908 = vrot.lane.b32.xlu0 %v906, 96
      %v909 = vpop.permute.xlu0 %908
      %vm910 = vcmask 130048
      %v912 = vsel %vm910, %v906, 0
      %v915 = vsel %vm910, %v909, 0
      %917 = vmatpush.bf16.xpose.msra.mxu0 0
      %918 = vmatpush.bf16.xpose.msra.mxu0 0
      %919 = vmatpush.bf16.xpose.msra.mxu0 0
      %920 = vmatpush.bf16.xpose.msra.mxu0 0
      %921 = vmatpush.bf16.xpose.msra.mxu0 0
      %922 = vmatpush.bf16.xpose.msra.mxu0 0
      %923 = vmatpush.bf16.xpose.msra.mxu0 0
      %924 = vmatpush.bf16.xpose.msra.mxu0 %v915
      %925 = vmatmul.bf16.gmra.mxu0 %v912
      %v926 = vpop.f32.mrf.mxu0
      %v927 = vadd.f32 0.0, %v926
      %v928 = vpop.f32.mrf.mxu0
      %v929 = vadd.f32 0.0, %v928
      %930 = vdwg.mxu0
      %v931 = vmul.f32 %v927, 0.25
      %v932 = vmul.f32 %v929, 0.25
      %vm933 = vcmask 72704
      %v934 = vsel %vm933, %v931, -inf
      %935 = vmax.xlane.f32.xlu0 %v934
      %v936 = vpop.xlane.xlu0 %935
      %vm937 = vcmask 65536
      %v938 = vsel %vm937, %v932, -inf
      %939 = vmax.xlane.f32.xlu0 %v938
      %v940 = vpop.xlane.xlu0 %939
      %v941 = vsub.f32 %v931, %v936
      %v942 = vsub.f32 %v932, %v940
      %v943 = vmul.f32 %v941, 1.442695
      %v944 = vpow.pop %v943
      %v945 = vmul.f32 %v942, 1.442695
      %v946 = vpow.pop %v945
      %v947 = vsel %vm933, %v944, 0.0
      %948 = vadd.xlane.f32.xlu0 %v947
      %v949 = vpop.xlane.xlu0 %948
      %v950 = vsel %vm937, %v946, 0.0
      %951 = vadd.xlane.f32.xlu0 %v950
      %v952 = vpop.xlane.xlu0 %951
      %v953 = vrcp.pop %v949
      %v954 = vrcp.pop %v952
      %v955 = vmul.f32 %v944, %v953
      %v956 = vmul.f32 %v946, %v954
      %v957 = vpack.c.bf16 %v956, %v955
      %958 = vrot.lane.b32.xlu0 %v906, 64
      %v959 = vpop.permute.xlu0 %958
      %v961 = vsel %vm933, %v957, 0
      %vm963 = vcmask 1043456
      %vm964 = vcmask 1044480
      %v965 = vsel %vm963, 4294967295, 65535
      %v966 = vsel %vm964, %v965, 0
      %v968 = vand.u32 %v959, %v966
      %970 = vmatpush.bf16.msra.mxu0 0
      %971 = vmatpush.bf16.msra.mxu0 0
      %972 = vmatpush.bf16.msra.mxu0 0
      %973 = vmatpush.bf16.msra.mxu0 0
      %974 = vmatpush.bf16.msra.mxu0 0
      %975 = vmatpush.bf16.msra.mxu0 0
      %976 = vmatpush.bf16.msra.mxu0 0
      %977 = vmatpush.bf16.msra.mxu0 %v968
      %978 = vmatmul.bf16.gmra.mxu0 %v961
      %v979 = vpop.f32.mrf.mxu0
      %v980 = vadd.f32 0.0, %v979
      %v981 = vpop.f32.mrf.mxu0
      %v982 = vadd.f32 0.0, %v981
      %983 = vdwg.mxu0
      %984 = vrot.lane.b32.xlu0 %v906, 112
      %v985 = vpop.permute.xlu0 %984
      %986 = vrot.lane.b32.xlu0 %v906, 80
      %v987 = vpop.permute.xlu0 %986
      %v989 = vsel %vm910, %v985, 0
      %v992 = vsel %vm910, %v987, 0
      %994 = vmatpush.bf16.xpose.msra.mxu0 0
      %995 = vmatpush.bf16.xpose.msra.mxu0 0
      %996 = vmatpush.bf16.xpose.msra.mxu0 0
      %997 = vmatpush.bf16.xpose.msra.mxu0 0
      %998 = vmatpush.bf16.xpose.msra.mxu0 0
      %999 = vmatpush.bf16.xpose.msra.mxu0 0
      %1000 = vmatpush.bf16.xpose.msra.mxu0 0
      %1001 = vmatpush.bf16.xpose.msra.mxu0 %v992
      %1002 = vmatmul.bf16.gmra.mxu0 %v989
      %v1003 = vpop.f32.mrf.mxu0
      %v1004 = vadd.f32 0.0, %v1003
      %v1005 = vpop.f32.mrf.mxu0
      %v1006 = vadd.f32 0.0, %v1005
      %1007 = vdwg.mxu0
      %v1008 = vmul.f32 %v1004, 0.25
      %v1009 = vmul.f32 %v1006, 0.25
      %v1010 = vsel %vm933, %v1008, -inf
      %1011 = vmax.xlane.f32.xlu0 %v1010
      %v1012 = vpop.xlane.xlu0 %1011
      %v1013 = vsel %vm937, %v1009, -inf
      %1014 = vmax.xlane.f32.xlu0 %v1013
      %v1015 = vpop.xlane.xlu0 %1014
      %v1016 = vsub.f32 %v1008, %v1012
      %v1017 = vsub.f32 %v1009, %v1015
      %v1018 = vmul.f32 %v1016, 1.442695
      %v1019 = vpow.pop %v1018
      %v1020 = vmul.f32 %v1017, 1.442695
      %v1021 = vpow.pop %v1020
      %v1022 = vsel %vm933, %v1019, 0.0
      %1023 = vadd.xlane.f32.xlu0 %v1022
      %v1024 = vpop.xlane.xlu0 %1023
      %v1025 = vsel %vm937, %v1021, 0.0
      %1026 = vadd.xlane.f32.xlu0 %v1025
      %v1027 = vpop.xlane.xlu0 %1026
      %v1028 = vrcp.pop %v1024
      %v1029 = vrcp.pop %v1027
      %v1030 = vmul.f32 %v1019, %v1028
      %v1031 = vmul.f32 %v1021, %v1029
      %v1032 = vpack.c.bf16 %v1031, %v1030
      %1033 = vrot.lane.b32.xlu0 %v906, 48
      %v1034 = vpop.permute.xlu0 %1033
      %v1036 = vsel %vm933, %v1032, 0
      %v1039 = vand.u32 %v1034, %v966
      %1041 = vmatpush.bf16.msra.mxu0 0
      %1042 = vmatpush.bf16.msra.mxu0 0
      %1043 = vmatpush.bf16.msra.mxu0 0
      %1044 = vmatpush.bf16.msra.mxu0 0
      %1045 = vmatpush.bf16.msra.mxu0 0
      %1046 = vmatpush.bf16.msra.mxu0 0
      %1047 = vmatpush.bf16.msra.mxu0 0
      %1048 = vmatpush.bf16.msra.mxu0 %v1039
      %1049 = vmatmul.bf16.gmra.mxu0 %v1036
      %v1050 = vpop.f32.mrf.mxu0
      %v1051 = vadd.f32 0.0, %v1050
      %v1052 = vpop.f32.mrf.mxu0
      %v1053 = vadd.f32 0.0, %v1052
      %1054 = vdwg.mxu0
      %1057 = vrot.lane.b32.xlu0 %v1051, 16
      %v1058 = vpop.permute.xlu0 %1057
      %1059 = vrot.lane.b32.xlu0 %v1053, 16
      %v1060 = vpop.permute.xlu0 %1059
      %v1063 = vsel %vm910, %v980, %v1058
      %v1064 = vsel %vm910, %v982, %v1060
      %v1065 = vld [vmem:[%s13] sm:$0xff]
      %v1066 = vld [vmem:[%s13 + $0x8] sm:$0xff]
      %v1067 = vld [vmem:[%s13 + $0x10] sm:$0xff]
      %v1068 = vld [vmem:[%s13 + $0x18] sm:$0xff]
      %v1069 = vpack.c.bf16 %v1064, %v1063
      %v1070 = vpack.c.bf16 %v1066, %v1065
      %v1071 = vpack.c.bf16 %v1068, %v1067
      %v1073 = vsel %vm759, %v1069, 0
      %1075 = vmatpush.bf16.msra.mxu0 0
      %1076 = vmatpush.bf16.msra.mxu0 0
      %1077 = vmatpush.bf16.msra.mxu0 0
      %1078 = vmatpush.bf16.msra.mxu0 0
      %1079 = vmatpush.bf16.msra.mxu0 0
      %1080 = vmatpush.bf16.msra.mxu0 0
      %1081 = vmatpush.bf16.msra.mxu0 %v1071
      %1082 = vmatpush.bf16.msra.mxu0 %v1070
      %1083 = vmatmul.bf16.gmra.mxu0 %v1073
      %v1084 = vpop.f32.mrf.mxu0
      %v1085 = vadd.f32 0.0, %v1084
      %v1086 = vpop.f32.mrf.mxu0
      %v1087 = vadd.f32 0.0, %v1086
      %1088 = vdwg.mxu0
      %v1089 = vadd.f32 %v820, %v1085
      %v1090 = vadd.f32 %v821, %v1087
      %v1091 = vld [vmem:[%s14] sm:$0x1]
      %v1093 = vperm.slane %v1091, 0
      %v1095 = vadd.f32 %v1089, %v1093
      %v1096 = vadd.f32 %v1090, %v1093
      %v1097 = vld [vmem:[%s9] sm:$0x1]
      %v1098 = vld [vmem:[%s10] sm:$0x1]
      %v1099 = vsel %vm759, %v1095, 0.0
      %1100 = vadd.xlane.f32.xlu0 %v1099
      %v1101 = vpop.xlane.xlu0 %1100
      %v1102 = vsel %vm763, %v1096, 0.0
      %1103 = vadd.xlane.f32.xlu0 %v1102
      %v1104 = vpop.xlane.xlu0 %1103
      %v1105 = vmul.f32 %v1101, %v773
      %v1106 = vmul.f32 %v1104, %v773
      %v1107 = vsub.f32 %v1095, %v1105
      %v1108 = vsub.f32 %v1096, %v1106
      %v1109 = vmul.f32 %v1107, %v1107
      %v1110 = vmul.f32 %v1108, %v1108
      %v1111 = vsel %vm759, %v1109, 0.0
      %1112 = vadd.xlane.f32.xlu0 %v1111
      %v1113 = vpop.xlane.xlu0 %1112
      %v1114 = vsel %vm763, %v1110, 0.0
      %1115 = vadd.xlane.f32.xlu0 %v1114
      %v1116 = vpop.xlane.xlu0 %1115
      %v1117 = vmul.f32 %v1113, %v773
      %v1118 = vmul.f32 %v1116, %v773
      %v1119 = vadd.f32 %v1117, 1e-05
      %v1120 = vadd.f32 %v1118, 1e-05
      %v1121 = vrsqrt.pop %v1119
      %v1122 = vmul.f32 %v1121, %v1119
      %v1123 = vmul.f32 %v1122, %v1121
      %v1124 = vmul.f32 0.5, %v1123
      %v1125 = vsub.f32 1.5, %v1124
      %v1126 = vmul.f32 %v1121, %v1125
      %vm1127 = vweird.f32 %v1119
      %vm1128 = vweird.f32 %v1121
      %vm1129 = vmor %vm1127, %vm1128
      %v1130 = vsel %vm1129, %v1121, %v1126
      %v1131 = vrsqrt.pop %v1120
      %v1132 = vmul.f32 %v1131, %v1120
      %v1133 = vmul.f32 %v1132, %v1131
      %v1134 = vmul.f32 0.5, %v1133
      %v1135 = vsub.f32 1.5, %v1134
      %v1136 = vmul.f32 %v1131, %v1135
      %vm1137 = vweird.f32 %v1120
      %vm1138 = vweird.f32 %v1131
      %vm1139 = vmor %vm1137, %vm1138
      %v1140 = vsel %vm1139, %v1131, %v1136
      %v1141 = vmul.f32 %v1107, %v1130
      %v1142 = vmul.f32 %v1108, %v1140
      %v1144 = vperm.slane %v1097, 0
      %v1146 = vmul.f32 %v1141, %v1144
      %v1147 = vmul.f32 %v1142, %v1144
      %v1149 = vperm.slane %v1098, 0
      %v1151 = vadd.f32 %v1146, %v1149
      %v1152 = vadd.f32 %v1147, %v1149
      %v1153 = vld [vmem:[%s15] sm:$0xff]
      %v1154 = vld [vmem:[%s15 + $0x8] sm:$0xff]
      %v1155 = vld [vmem:[%s15 + $0x10] sm:$0xff]
      %v1156 = vld [vmem:[%s15 + $0x18] sm:$0xff]
      %v1157 = vpack.c.bf16 %v1152, %v1151
      %v1158 = vpack.c.bf16 %v1154, %v1153
      %v1159 = vpack.c.bf16 %v1156, %v1155
      %v1160 = vld [vmem:[%s16] sm:$0x1]
      %v1162 = vperm.slane %v1160, 0
      %v1165 = vsel %vm759, %v1157, 0
      %1167 = vmatpush.bf16.msra.mxu0 0
      %1168 = vmatpush.bf16.msra.mxu0 0
      %1169 = vmatpush.bf16.msra.mxu0 0
      %1170 = vmatpush.bf16.msra.mxu0 0
      %1171 = vmatpush.bf16.msra.mxu0 0
      %1172 = vmatpush.bf16.msra.mxu0 0
      %1173 = vmatpush.bf16.msra.mxu0 %v1159
      %1174 = vmatpush.bf16.msra.mxu0 %v1158
      %1175 = vmatmul.bf16.gmra.mxu0 %v1165
      %v1176 = vpop.f32.mrf.mxu0
      %v1177 = vadd.f32 %v1162, %v1176
      %v1178 = vpop.f32.mrf.mxu0
      %v1179 = vadd.f32 %v1162, %v1178
      %1180 = vdwg.mxu0
      %v1181 = vmul.f32 %v1177, 1.702
      %v1182 = vmul.f32 %v1179, 1.702
      %v1183 = vxor.u32 %v1181, 2147483648
      %v1184 = vxor.u32 %v1182, 2147483648
      %v1185 = vmul.f32 %v1183, 1.442695
      %v1186 = vpow.pop %v1185
      %v1187 = vmul.f32 %v1184, 1.442695
      %v1188 = vpow.pop %v1187
      %v1189 = vadd.f32 %v1186, 1.0
      %v1190 = vadd.f32 %v1188, 1.0
      %v1191 = vrcp.pop %v1189
      %v1192 = vmul.f32 %v1189, %v1191
      %v1193 = vsub.f32 1.0, %v1192
      %v1194 = vmul.f32 %v1191, %v1193
      %v1195 = vadd.f32 %v1191, %v1194
      %vm1196 = vweird.f32 %v1189
      %vm1197 = vweird.f32 %v1191
      %vm1198 = vmor %vm1196, %vm1197
      %v1199 = vsel %vm1198, %v1191, %v1195
      %v1200 = vand.u32 2147483647, %v1189
      %vm1201 = vcmp.eq.f32.partialorder %v1200, 8.507059e+37
      %v1202 = vand.u32 %v1189, 2147483648
      %v1203 = vor.u32 1.1754944e-38, %v1202
      %v1204 = vsel %vm1201, %v1203, %v1199
      %v1205 = vmul.f32 1.0, %v1204
      %v1206 = vrcp.pop %v1190
      %v1207 = vmul.f32 %v1190, %v1206
      %v1208 = vsub.f32 1.0, %v1207
      %v1209 = vmul.f32 %v1206, %v1208
      %v1210 = vadd.f32 %v1206, %v1209
      %vm1211 = vweird.f32 %v1190
      %vm1212 = vweird.f32 %v1206
      %vm1213 = vmor %vm1211, %vm1212
      %v1214 = vsel %vm1213, %v1206, %v1210
      %v1215 = vand.u32 2147483647, %v1190
      %vm1216 = vcmp.eq.f32.partialorder %v1215, 8.507059e+37
      %v1217 = vand.u32 %v1190, 2147483648
      %v1218 = vor.u32 1.1754944e-38, %v1217
      %v1219 = vsel %vm1216, %v1218, %v1214
      %v1220 = vmul.f32 1.0, %v1219
      %v1221 = vmul.f32 %v1177, %v1205
      %v1222 = vmul.f32 %v1179, %v1220
      %v1223 = vld [vmem:[%s17] sm:$0xff]
      %v1224 = vld [vmem:[%s17 + $0x8] sm:$0xff]
      %v1225 = vld [vmem:[%s17 + $0x10] sm:$0xff]
      %v1226 = vld [vmem:[%s17 + $0x18] sm:$0xff]
      %v1227 = vld [vmem:[%s17 + $0x20] sm:$0xff]
      %v1228 = vld [vmem:[%s17 + $0x28] sm:$0xff]
      %v1229 = vld [vmem:[%s17 + $0x30] sm:$0xff]
      %v1230 = vld [vmem:[%s17 + $0x38] sm:$0xff]
      %v1231 = vld [vmem:[%s17 + $0x40] sm:$0xff]
      %v1232 = vld [vmem:[%s17 + $0x48] sm:$0xff]
      %v1233 = vld [vmem:[%s17 + $0x50] sm:$0xff]
      %v1234 = vld [vmem:[%s17 + $0x58] sm:$0xff]
      %v1235 = vld [vmem:[%s17 + $0x60] sm:$0xff]
      %v1236 = vld [vmem:[%s17 + $0x68] sm:$0xff]
      %v1237 = vld [vmem:[%s17 + $0x70] sm:$0xff]
      %v1238 = vld [vmem:[%s17 + $0x78] sm:$0xff]
      %v1239 = vpack.c.bf16 %v1222, %v1221
      %v1240 = vpack.c.bf16 %v1224, %v1223
      %v1241 = vpack.c.bf16 %v1226, %v1225
      %v1242 = vpack.c.bf16 %v1228, %v1227
      %v1243 = vpack.c.bf16 %v1230, %v1229
      %v1244 = vpack.c.bf16 %v1232, %v1231
      %v1245 = vpack.c.bf16 %v1234, %v1233
      %v1246 = vpack.c.bf16 %v1236, %v1235
      %v1247 = vpack.c.bf16 %v1238, %v1237
      %1248 = vmatpush.bf16.msra.mxu0 %v1247
      %1249 = vmatpush.bf16.msra.mxu0 %v1246
      %1250 = vmatpush.bf16.msra.mxu0 %v1245
      %1251 = vmatpush.bf16.msra.mxu0 %v1244
      %1252 = vmatpush.bf16.msra.mxu0 %v1243
      %1253 = vmatpush.bf16.msra.mxu0 %v1242
      %1254 = vmatpush.bf16.msra.mxu0 %v1241
      %1255 = vmatpush.bf16.msra.mxu0 %v1240
      %1256 = vmatmul.bf16.gmra.mxu0 %v1239
      %v1257 = vpop.f32.mrf.mxu0
      %v1258 = vadd.f32 0.0, %v1257
      %v1259 = vpop.f32.mrf.mxu0
      %v1260 = vadd.f32 0.0, %v1259
      %1261 = vdwg.mxu0
      %v1262 = vadd.f32 %v1095, %v1258
      %v1263 = vadd.f32 %v1096, %v1260
      %v1264 = vld [vmem:[%s18] sm:$0x1]
      %v1266 = vperm.slane %v1264, 0
      %v1268 = vadd.f32 %v1262, %v1266
      %v1269 = vadd.f32 %v1263, %v1266
      %v1270 = vld [vmem:[%s4] sm:$0xff]
      %v1271 = vld [vmem:[%s4 + $0x8] sm:$0x1]
      %1273 = vset.pattern.permute.xlu0 0
      %1274 = vperm.xlu0 %1273, %v1270
      %v1275 = vpop.permute.xlu0 %1274
      %1278 = vset.pattern.permute.xlu0 0
      %1279 = vperm.xlu0 %1278, %v1271
      %v1280 = vpop.permute.xlu0 %1279
      %v1282 = vmul.f32 %v1268, %v1275
      %v1283 = vmul.f32 %v1269, %v1280
      %s1284 = scalar_lea.vmem %s3, 16
      %v1285 = vld [vmem:[%s1284] sm:$0xff]
      %v1286 = vld [vmem:[%s1284 + $0x8] sm:$0x1]
      %v1287 = vadd.f32 %v1282, %v1285
      %v1288 = vadd.f32 %v1283, %v1286
      %s1289 = scalar_lea.vmem %s7, 1
      %v1290 = vld [vmem:[%s1289] sm:$0x1]
      %s1291 = scalar_lea.vmem %s8, 1
      %v1292 = vld [vmem:[%s1291] sm:$0x1]
      %v1293 = vsel %vm759, %v1287, 0.0
      %1294 = vadd.xlane.f32.xlu0 %v1293
      %v1295 = vpop.xlane.xlu0 %1294
      %v1296 = vsel %vm763, %v1288, 0.0
      %1297 = vadd.xlane.f32.xlu0 %v1296
      %v1298 = vpop.xlane.xlu0 %1297
      %v1299 = vmul.f32 %v1295, %v773
      %v1300 = vmul.f32 %v1298, %v773
      %v1301 = vsub.f32 %v1287, %v1299
      %v1302 = vsub.f32 %v1288, %v1300
      %v1303 = vmul.f32 %v1301, %v1301
      %v1304 = vmul.f32 %v1302, %v1302
      %v1305 = vsel %vm759, %v1303, 0.0
      %1306 = vadd.xlane.f32.xlu0 %v1305
      %v1307 = vpop.xlane.xlu0 %1306
      %v1308 = vsel %vm763, %v1304, 0.0
      %1309 = vadd.xlane.f32.xlu0 %v1308
      %v1310 = vpop.xlane.xlu0 %1309
      %v1311 = vmul.f32 %v1307, %v773
      %v1312 = vmul.f32 %v1310, %v773
      %v1313 = vadd.f32 %v1311, 1e-05
      %v1314 = vadd.f32 %v1312, 1e-05
      %v1315 = vrsqrt.pop %v1313
      %v1316 = vmul.f32 %v1315, %v1313
      %v1317 = vmul.f32 %v1316, %v1315
      %v1318 = vmul.f32 0.5, %v1317
      %v1319 = vsub.f32 1.5, %v1318
      %v1320 = vmul.f32 %v1315, %v1319
      %vm1321 = vweird.f32 %v1313
      %vm1322 = vweird.f32 %v1315
      %vm1323 = vmor %vm1321, %vm1322
      %v1324 = vsel %vm1323, %v1315, %v1320
      %v1325 = vrsqrt.pop %v1314
      %v1326 = vmul.f32 %v1325, %v1314
      %v1327 = vmul.f32 %v1326, %v1325
      %v1328 = vmul.f32 0.5, %v1327
      %v1329 = vsub.f32 1.5, %v1328
      %v1330 = vmul.f32 %v1325, %v1329
      %vm1331 = vweird.f32 %v1314
      %vm1332 = vweird.f32 %v1325
      %vm1333 = vmor %vm1331, %vm1332
      %v1334 = vsel %vm1333, %v1325, %v1330
      %v1335 = vmul.f32 %v1301, %v1324
      %v1336 = vmul.f32 %v1302, %v1334
      %v1338 = vperm.slane %v1290, 0
      %v1340 = vmul.f32 %v1335, %v1338
      %v1341 = vmul.f32 %v1336, %v1338
      %v1343 = vperm.slane %v1292, 0
      %v1345 = vadd.f32 %v1340, %v1343
      %v1346 = vadd.f32 %v1341, %v1343
      %s1347 = scalar_lea.vmem %s11, 32
      %v1348 = vld [vmem:[%s1347] sm:$0xff]
      %v1349 = vld [vmem:[%s1347 + $0x8] sm:$0xff]
      %v1350 = vld [vmem:[%s1347 + $0x10] sm:$0xff]
      %v1351 = vld [vmem:[%s1347 + $0x18] sm:$0xff]
      %v1352 = vpack.c.bf16 %v1346, %v1345
      %v1353 = vpack.c.bf16 %v1349, %v1348
      %v1354 = vpack.c.bf16 %v1351, %v1350
      %s1355 = scalar_lea.vmem %s12, 1
      %v1356 = vld [vmem:[%s1355] sm:$0x1]
      %v1358 = vperm.slane %v1356, 0
      %v1361 = vsel %vm759, %v1352, 0
      %1363 = vmatpush.bf16.msra.mxu0 0
      %1364 = vmatpush.bf16.msra.mxu0 0
      %1365 = vmatpush.bf16.msra.mxu0 0
      %1366 = vmatpush.bf16.msra.mxu0 0
      %1367 = vmatpush.bf16.msra.mxu0 0
      %1368 = vmatpush.bf16.msra.mxu0 0
      %1369 = vmatpush.bf16.msra.mxu0 %v1354
      %1370 = vmatpush.bf16.msra.mxu0 %v1353
      %1371 = vmatmul.bf16.gmra.mxu0 %v1361
      %v1372 = vpop.f32.mrf.mxu0
      %v1373 = vadd.f32 %v1358, %v1372
      %v1374 = vpop.f32.mrf.mxu0
      %v1375 = vadd.f32 %v1358, %v1374
      %1376 = vdwg.mxu0
      %v1377 = vpack.c.bf16 %v1375, %v1373
      %1379 = vrot.lane.b32.xlu0 %v1377, 96
      %v1380 = vpop.permute.xlu0 %1379
      %v1382 = vsel %vm910, %v1377, 0
      %v1385 = vsel %vm910, %v1380, 0
      %1387 = vmatpush.bf16.xpose.msra.mxu0 0
      %1388 = vmatpush.bf16.xpose.msra.mxu0 0
      %1389 = vmatpush.bf16.xpose.msra.mxu0 0
      %1390 = vmatpush.bf16.xpose.msra.mxu0 0
      %1391 = vmatpush.bf16.xpose.msra.mxu0 0
      %1392 = vmatpush.bf16.xpose.msra.mxu0 0
      %1393 = vmatpush.bf16.xpose.msra.mxu0 0
      %1394 = vmatpush.bf16.xpose.msra.mxu0 %v1385
      %1395 = vmatmul.bf16.gmra.mxu0 %v1382
      %v1396 = vpop.f32.mrf.mxu0
      %v1397 = vadd.f32 0.0, %v1396
      %v1398 = vpop.f32.mrf.mxu0
      %v1399 = vadd.f32 0.0, %v1398
      %1400 = vdwg.mxu0
      %v1401 = vmul.f32 %v1397, 0.25
      %v1402 = vmul.f32 %v1399, 0.25
      %v1403 = vsel %vm933, %v1401, -inf
      %1404 = vmax.xlane.f32.xlu0 %v1403
      %v1405 = vpop.xlane.xlu0 %1404
      %v1406 = vsel %vm937, %v1402, -inf
      %1407 = vmax.xlane.f32.xlu0 %v1406
      %v1408 = vpop.xlane.xlu0 %1407
      %v1409 = vsub.f32 %v1401, %v1405
      %v1410 = vsub.f32 %v1402, %v1408
      %v1411 = vmul.f32 %v1409, 1.442695
      %v1412 = vpow.pop %v1411
      %v1413 = vmul.f32 %v1410, 1.442695
      %v1414 = vpow.pop %v1413
      %v1415 = vsel %vm933, %v1412, 0.0
      %1416 = vadd.xlane.f32.xlu0 %v1415
      %v1417 = vpop.xlane.xlu0 %1416
      %v1418 = vsel %vm937, %v1414, 0.0
      %1419 = vadd.xlane.f32.xlu0 %v1418
      %v1420 = vpop.xlane.xlu0 %1419
      %v1421 = vrcp.pop %v1417
      %v1422 = vrcp.pop %v1420
      %v1423 = vmul.f32 %v1412, %v1421
      %v1424 = vmul.f32 %v1414, %v1422
      %v1425 = vpack.c.bf16 %v1424, %v1423
      %1426 = vrot.lane.b32.xlu0 %v1377, 64
      %v1427 = vpop.permute.xlu0 %1426
      %v1429 = vsel %vm933, %v1425, 0
      %v1432 = vand.u32 %v1427, %v966
      %1434 = vmatpush.bf16.msra.mxu0 0
      %1435 = vmatpush.bf16.msra.mxu0 0
      %1436 = vmatpush.bf16.msra.mxu0 0
      %1437 = vmatpush.bf16.msra.mxu0 0
      %1438 = vmatpush.bf16.msra.mxu0 0
      %1439 = vmatpush.bf16.msra.mxu0 0
      %1440 = vmatpush.bf16.msra.mxu0 0
      %1441 = vmatpush.bf16.msra.mxu0 %v1432
      %1442 = vmatmul.bf16.gmra.mxu0 %v1429
      %v1443 = vpop.f32.mrf.mxu0
      %v1444 = vadd.f32 0.0, %v1443
      %v1445 = vpop.f32.mrf.mxu0
      %v1446 = vadd.f32 0.0, %v1445
      %1447 = vdwg.mxu0
      %1448 = vrot.lane.b32.xlu0 %v1377, 112
      %v1449 = vpop.permute.xlu0 %1448
      %1450 = vrot.lane.b32.xlu0 %v1377, 80
      %v1451 = vpop.permute.xlu0 %1450
      %v1453 = vsel %vm910, %v1449, 0
      %v1456 = vsel %vm910, %v1451, 0
      %1458 = vmatpush.bf16.xpose.msra.mxu0 0
      %1459 = vmatpush.bf16.xpose.msra.mxu0 0
      %1460 = vmatpush.bf16.xpose.msra.mxu0 0
      %1461 = vmatpush.bf16.xpose.msra.mxu0 0
      %1462 = vmatpush.bf16.xpose.msra.mxu0 0
      %1463 = vmatpush.bf16.xpose.msra.mxu0 0
      %1464 = vmatpush.bf16.xpose.msra.mxu0 0
      %1465 = vmatpush.bf16.xpose.msra.mxu0 %v1456
      %1466 = vmatmul.bf16.gmra.mxu0 %v1453
      %v1467 = vpop.f32.mrf.mxu0
      %v1468 = vadd.f32 0.0, %v1467
      %v1469 = vpop.f32.mrf.mxu0
      %v1470 = vadd.f32 0.0, %v1469
      %1471 = vdwg.mxu0
      %v1472 = vmul.f32 %v1468, 0.25
      %v1473 = vmul.f32 %v1470, 0.25
      %v1474 = vsel %vm933, %v1472, -inf
      %1475 = vmax.xlane.f32.xlu0 %v1474
      %v1476 = vpop.xlane.xlu0 %1475
      %v1477 = vsel %vm937, %v1473, -inf
      %1478 = vmax.xlane.f32.xlu0 %v1477
      %v1479 = vpop.xlane.xlu0 %1478
      %v1480 = vsub.f32 %v1472, %v1476
      %v1481 = vsub.f32 %v1473, %v1479
      %v1482 = vmul.f32 %v1480, 1.442695
      %v1483 = vpow.pop %v1482
      %v1484 = vmul.f32 %v1481, 1.442695
      %v1485 = vpow.pop %v1484
      %v1486 = vsel %vm933, %v1483, 0.0
      %1487 = vadd.xlane.f32.xlu0 %v1486
      %v1488 = vpop.xlane.xlu0 %1487
      %v1489 = vsel %vm937, %v1485, 0.0
      %1490 = vadd.xlane.f32.xlu0 %v1489
      %v1491 = vpop.xlane.xlu0 %1490
      %v1492 = vrcp.pop %v1488
      %v1493 = vrcp.pop %v1491
      %v1494 = vmul.f32 %v1483, %v1492
      %v1495 = vmul.f32 %v1485, %v1493
      %v1496 = vpack.c.bf16 %v1495, %v1494
      %1497 = vrot.lane.b32.xlu0 %v1377, 48
      %v1498 = vpop.permute.xlu0 %1497
      %v1500 = vsel %vm933, %v1496, 0
      %v1503 = vand.u32 %v1498, %v966
      %1505 = vmatpush.bf16.msra.mxu0 0
      %1506 = vmatpush.bf16.msra.mxu0 0
      %1507 = vmatpush.bf16.msra.mxu0 0
      %1508 = vmatpush.bf16.msra.mxu0 0
      %1509 = vmatpush.bf16.msra.mxu0 0
      %1510 = vmatpush.bf16.msra.mxu0 0
      %1511 = vmatpush.bf16.msra.mxu0 0
      %1512 = vmatpush.bf16.msra.mxu0 %v1503
      %1513 = vmatmul.bf16.gmra.mxu0 %v1500
      %v1514 = vpop.f32.mrf.mxu0
      %v1515 = vadd.f32 0.0, %v1514
      %v1516 = vpop.f32.mrf.mxu0
      %v1517 = vadd.f32 0.0, %v1516
      %1518 = vdwg.mxu0
      %1521 = vrot.lane.b32.xlu0 %v1515, 16
      %v1522 = vpop.permute.xlu0 %1521
      %1523 = vrot.lane.b32.xlu0 %v1517, 16
      %v1524 = vpop.permute.xlu0 %1523
      %v1527 = vsel %vm910, %v1444, %v1522
      %v1528 = vsel %vm910, %v1446, %v1524
      %s1529 = scalar_lea.vmem %s13, 32
      %v1530 = vld [vmem:[%s1529] sm:$0xff]
      %v1531 = vld [vmem:[%s1529 + $0x8] sm:$0xff]
      %v1532 = vld [vmem:[%s1529 + $0x10] sm:$0xff]
      %v1533 = vld [vmem:[%s1529 + $0x18] sm:$0xff]
      %v1534 = vpack.c.bf16 %v1528, %v1527
      %v1535 = vpack.c.bf16 %v1531, %v1530
      %v1536 = vpack.c.bf16 %v1533, %v1532
      %v1538 = vsel %vm759, %v1534, 0
      %1540 = vmatpush.bf16.msra.mxu0 0
      %1541 = vmatpush.bf16.msra.mxu0 0
      %1542 = vmatpush.bf16.msra.mxu0 0
      %1543 = vmatpush.bf16.msra.mxu0 0
      %1544 = vmatpush.bf16.msra.mxu0 0
      %1545 = vmatpush.bf16.msra.mxu0 0
      %1546 = vmatpush.bf16.msra.mxu0 %v1536
      %1547 = vmatpush.bf16.msra.mxu0 %v1535
      %1548 = vmatmul.bf16.gmra.mxu0 %v1538
      %v1549 = vpop.f32.mrf.mxu0
      %v1550 = vadd.f32 0.0, %v1549
      %v1551 = vpop.f32.mrf.mxu0
      %v1552 = vadd.f32 0.0, %v1551
      %1553 = vdwg.mxu0
      %v1554 = vadd.f32 %v1287, %v1550
      %v1555 = vadd.f32 %v1288, %v1552
      %s1556 = scalar_lea.vmem %s14, 1
      %v1557 = vld [vmem:[%s1556] sm:$0x1]
      %v1559 = vperm.slane %v1557, 0
      %v1561 = vadd.f32 %v1554, %v1559
      %v1562 = vadd.f32 %v1555, %v1559
      %s1563 = scalar_lea.vmem %s9, 1
      %v1564 = vld [vmem:[%s1563] sm:$0x1]
      %s1565 = scalar_lea.vmem %s10, 1
      %v1566 = vld [vmem:[%s1565] sm:$0x1]
      %v1567 = vsel %vm759, %v1561, 0.0
      %1568 = vadd.xlane.f32.xlu0 %v1567
      %v1569 = vpop.xlane.xlu0 %1568
      %v1570 = vsel %vm763, %v1562, 0.0
      %1571 = vadd.xlane.f32.xlu0 %v1570
      %v1572 = vpop.xlane.xlu0 %1571
      %v1573 = vmul.f32 %v1569, %v773
      %v1574 = vmul.f32 %v1572, %v773
      %v1575 = vsub.f32 %v1561, %v1573
      %v1576 = vsub.f32 %v1562, %v1574
      %v1577 = vmul.f32 %v1575, %v1575
      %v1578 = vmul.f32 %v1576, %v1576
      %v1579 = vsel %vm759, %v1577, 0.0
      %1580 = vadd.xlane.f32.xlu0 %v1579
      %v1581 = vpop.xlane.xlu0 %1580
      %v1582 = vsel %vm763, %v1578, 0.0
      %1583 = vadd.xlane.f32.xlu0 %v1582
      %v1584 = vpop.xlane.xlu0 %1583
      %v1585 = vmul.f32 %v1581, %v773
      %v1586 = vmul.f32 %v1584, %v773
      %v1587 = vadd.f32 %v1585, 1e-05
      %v1588 = vadd.f32 %v1586, 1e-05
      %v1589 = vrsqrt.pop %v1587
      %v1590 = vmul.f32 %v1589, %v1587
      %v1591 = vmul.f32 %v1590, %v1589
      %v1592 = vmul.f32 0.5, %v1591
      %v1593 = vsub.f32 1.5, %v1592
      %v1594 = vmul.f32 %v1589, %v1593
      %vm1595 = vweird.f32 %v1587
      %vm1596 = vweird.f32 %v1589
      %vm1597 = vmor %vm1595, %vm1596
      %v1598 = vsel %vm1597, %v1589, %v1594
      %v1599 = vrsqrt.pop %v1588
      %v1600 = vmul.f32 %v1599, %v1588
      %v1601 = vmul.f32 %v1600, %v1599
      %v1602 = vmul.f32 0.5, %v1601
      %v1603 = vsub.f32 1.5, %v1602
      %v1604 = vmul.f32 %v1599, %v1603
      %vm1605 = vweird.f32 %v1588
      %vm1606 = vweird.f32 %v1599
      %vm1607 = vmor %vm1605, %vm1606
      %v1608 = vsel %vm1607, %v1599, %v1604
      %v1609 = vmul.f32 %v1575, %v1598
      %v1610 = vmul.f32 %v1576, %v1608
      %v1612 = vperm.slane %v1564, 0
      %v1614 = vmul.f32 %v1609, %v1612
      %v1615 = vmul.f32 %v1610, %v1612
      %v1617 = vperm.slane %v1566, 0
      %v1619 = vadd.f32 %v1614, %v1617
      %v1620 = vadd.f32 %v1615, %v1617
      %s1621 = scalar_lea.vmem %s15, 32
      %v1622 = vld [vmem:[%s1621] sm:$0xff]
      %v1623 = vld [vmem:[%s1621 + $0x8] sm:$0xff]
      %v1624 = vld [vmem:[%s1621 + $0x10] sm:$0xff]
      %v1625 = vld [vmem:[%s1621 + $0x18] sm:$0xff]
      %v1626 = vpack.c.bf16 %v1620, %v1619
      %v1627 = vpack.c.bf16 %v1623, %v1622
      %v1628 = vpack.c.bf16 %v1625, %v1624
      %s1629 = scalar_lea.vmem %s16, 1
      %v1630 = vld [vmem:[%s1629] sm:$0x1]
      %v1632 = vperm.slane %v1630, 0
      %v1635 = vsel %vm759, %v1626, 0
      %1637 = vmatpush.bf16.msra.mxu0 0
      %1638 = vmatpush.bf16.msra.mxu0 0
      %1639 = vmatpush.bf16.msra.mxu0 0
      %1640 = vmatpush.bf16.msra.mxu0 0
      %1641 = vmatpush.bf16.msra.mxu0 0
      %1642 = vmatpush.bf16.msra.mxu0 0
      %1643 = vmatpush.bf16.msra.mxu0 %v1628
      %1644 = vmatpush.bf16.msra.mxu0 %v1627
      %1645 = vmatmul.bf16.gmra.mxu0 %v1635
      %v1646 = vpop.f32.mrf.mxu0
      %v1647 = vadd.f32 %v1632, %v1646
      %v1648 = vpop.f32.mrf.mxu0
      %v1649 = vadd.f32 %v1632, %v1648
      %1650 = vdwg.mxu0
      %v1651 = vmul.f32 %v1647, 1.702
      %v1652 = vmul.f32 %v1649, 1.702
      %v1653 = vxor.u32 %v1651, 2147483648
      %v1654 = vxor.u32 %v1652, 2147483648
      %v1655 = vmul.f32 %v1653, 1.442695
      %v1656 = vpow.pop %v1655
      %v1657 = vmul.f32 %v1654, 1.442695
      %v1658 = vpow.pop %v1657
      %v1659 = vadd.f32 %v1656, 1.0
      %v1660 = vadd.f32 %v1658, 1.0
      %v1661 = vrcp.pop %v1659
      %v1662 = vmul.f32 %v1659, %v1661
      %v1663 = vsub.f32 1.0, %v1662
      %v1664 = vmul.f32 %v1661, %v1663
      %v1665 = vadd.f32 %v1661, %v1664
      %vm1666 = vweird.f32 %v1659
      %vm1667 = vweird.f32 %v1661
      %vm1668 = vmor %vm1666, %vm1667
      %v1669 = vsel %vm1668, %v1661, %v1665
      %v1670 = vand.u32 2147483647, %v1659
      %vm1671 = vcmp.eq.f32.partialorder %v1670, 8.507059e+37
      %v1672 = vand.u32 %v1659, 2147483648
      %v1673 = vor.u32 1.1754944e-38, %v1672
      %v1674 = vsel %vm1671, %v1673, %v1669
      %v1675 = vmul.f32 1.0, %v1674
      %v1676 = vrcp.pop %v1660
      %v1677 = vmul.f32 %v1660, %v1676
      %v1678 = vsub.f32 1.0, %v1677
      %v1679 = vmul.f32 %v1676, %v1678
      %v1680 = vadd.f32 %v1676, %v1679
      %vm1681 = vweird.f32 %v1660
      %vm1682 = vweird.f32 %v1676
      %vm1683 = vmor %vm1681, %vm1682
      %v1684 = vsel %vm1683, %v1676, %v1680
      %v1685 = vand.u32 2147483647, %v1660
      %vm1686 = vcmp.eq.f32.partialorder %v1685, 8.507059e+37
      %v1687 = vand.u32 %v1660, 2147483648
      %v1688 = vor.u32 1.1754944e-38, %v1687
      %v1689 = vsel %vm1686, %v1688, %v1684
      %v1690 = vmul.f32 1.0, %v1689
      %v1691 = vmul.f32 %v1647, %v1675
      %v1692 = vmul.f32 %v1649, %v1690
      %s1693 = scalar_lea.vmem %s17, 128
      %v1694 = vld [vmem:[%s1693] sm:$0xff]
      %v1695 = vld [vmem:[%s1693 + $0x8] sm:$0xff]
      %v1696 = vld [vmem:[%s1693 + $0x10] sm:$0xff]
      %v1697 = vld [vmem:[%s1693 + $0x18] sm:$0xff]
      %v1698 = vld [vmem:[%s1693 + $0x20] sm:$0xff]
      %v1699 = vld [vmem:[%s1693 + $0x28] sm:$0xff]
      %v1700 = vld [vmem:[%s1693 + $0x30] sm:$0xff]
      %v1701 = vld [vmem:[%s1693 + $0x38] sm:$0xff]
      %v1702 = vld [vmem:[%s1693 + $0x40] sm:$0xff]
      %v1703 = vld [vmem:[%s1693 + $0x48] sm:$0xff]
      %v1704 = vld [vmem:[%s1693 + $0x50] sm:$0xff]
      %v1705 = vld [vmem:[%s1693 + $0x58] sm:$0xff]
      %v1706 = vld [vmem:[%s1693 + $0x60] sm:$0xff]
      %v1707 = vld [vmem:[%s1693 + $0x68] sm:$0xff]
      %v1708 = vld [vmem:[%s1693 + $0x70] sm:$0xff]
      %v1709 = vld [vmem:[%s1693 + $0x78] sm:$0xff]
      %v1710 = vpack.c.bf16 %v1692, %v1691
      %v1711 = vpack.c.bf16 %v1695, %v1694
      %v1712 = vpack.c.bf16 %v1697, %v1696
      %v1713 = vpack.c.bf16 %v1699, %v1698
      %v1714 = vpack.c.bf16 %v1701, %v1700
      %v1715 = vpack.c.bf16 %v1703, %v1702
      %v1716 = vpack.c.bf16 %v1705, %v1704
      %v1717 = vpack.c.bf16 %v1707, %v1706
      %v1718 = vpack.c.bf16 %v1709, %v1708
      %1719 = vmatpush.bf16.msra.mxu0 %v1718
      %1720 = vmatpush.bf16.msra.mxu0 %v1717
      %1721 = vmatpush.bf16.msra.mxu0 %v1716
      %1722 = vmatpush.bf16.msra.mxu0 %v1715
      %1723 = vmatpush.bf16.msra.mxu0 %v1714
      %1724 = vmatpush.bf16.msra.mxu0 %v1713
      %1725 = vmatpush.bf16.msra.mxu0 %v1712
      %1726 = vmatpush.bf16.msra.mxu0 %v1711
      %1727 = vmatmul.bf16.gmra.mxu0 %v1710
      %v1728 = vpop.f32.mrf.mxu0
      %v1729 = vadd.f32 0.0, %v1728
      %v1730 = vpop.f32.mrf.mxu0
      %1731 = vdwg.mxu0
      %v1732 = vadd.f32 %v1561, %v1729
      %s1733 = scalar_lea.vmem %s18, 1
      %v1734 = vld [vmem:[%s1733] sm:$0x1]
      %v1736 = vperm.slane %v1734, 0
      %v1738 = vadd.f32 %v1732, %v1736
      %v1739 = vld [vmem:[%s19] sm:$0x1]
      %v1740 = vld [vmem:[%s20] sm:$0x1]
      %v1741 = vsel %vm763, %v1738, 0.0
      %1742 = vadd.xlane.f32.xlu0 %v1741
      %v1743 = vpop.xlane.xlu0 %1742
      %v1744 = vmul.f32 %v1743, %v773
      %v1745 = vsub.f32 %v1738, %v1744
      %v1746 = vmul.f32 %v1745, %v1745
      %v1747 = vsel %vm763, %v1746, 0.0
      %1748 = vadd.xlane.f32.xlu0 %v1747
      %v1749 = vpop.xlane.xlu0 %1748
      %v1750 = vmul.f32 %v1749, %v773
      %v1751 = vadd.f32 %v1750, 1e-05
      %v1752 = vrsqrt.pop %v1751
      %v1753 = vmul.f32 %v1752, %v1751
      %v1754 = vmul.f32 %v1753, %v1752
      %v1755 = vmul.f32 0.5, %v1754
      %v1756 = vsub.f32 1.5, %v1755
      %v1757 = vmul.f32 %v1752, %v1756
      %vm1758 = vweird.f32 %v1751
      %vm1759 = vweird.f32 %v1752
      %vm1760 = vmor %vm1758, %vm1759
      %v1761 = vsel %vm1760, %v1752, %v1757
      %v1762 = vmul.f32 %v1745, %v1761
      %v1763 = vmul.f32 %v1762, %v1739
      %v1764 = vadd.f32 %v1763, %v1740
      %v1765 = vld [vmem:[%s21] sm:$0xff]
      %v1766 = vld [vmem:[%s21 + $0x8] sm:$0xff]
      %v1767 = vld [vmem:[%s21 + $0x10] sm:$0xff]
      %v1768 = vld [vmem:[%s21 + $0x18] sm:$0xff]
      %v1769 = vpack.c.bf16 %v1764, %v1764
      %v1770 = vpack.c.bf16 %v1766, %v1765
      %v1771 = vpack.c.bf16 %v1768, %v1767
      %v1773 = vsel %vm759, %v1769, 0
      %1775 = vmatpush.bf16.msra.mxu0 0
      %1776 = vmatpush.bf16.msra.mxu0 0
      %1777 = vmatpush.bf16.msra.mxu0 0
      %1778 = vmatpush.bf16.msra.mxu0 0
      %1779 = vmatpush.bf16.msra.mxu0 0
      %1780 = vmatpush.bf16.msra.mxu0 0
      %1781 = vmatpush.bf16.msra.mxu0 %v1771
      %1782 = vmatpush.bf16.msra.mxu0 %v1770
      %1783 = vmatmul.bf16.gmra.mxu0 %v1773
      %v1784 = vpop.f32.mrf.mxu0
      %v1785 = vadd.f32 0.0, %v1784
      %v1786 = vpop.f32.mrf.mxu0
      %1787 = vdwg.mxu0
      %v1788 = vmul.f32 %v1785, %v1785
      %v1789 = vsel %vm763, %v1788, 0.0
      %1790 = vadd.xlane.f32.xlu0 %v1789
      %v1791 = vpop.xlane.xlu0 %1790
      %v1792 = vadd.f32 %v1791, 1e-12
      %v1793 = vrsqrt.pop %v1792
      %v1794 = vmul.f32 %v1793, %v1792
      %v1795 = vmul.f32 %v1794, %v1793
      %v1796 = vmul.f32 0.5, %v1795
      %v1797 = vsub.f32 1.5, %v1796
      %v1798 = vmul.f32 %v1793, %v1797
      %vm1799 = vweird.f32 %v1792
      %vm1800 = vweird.f32 %v1793
      %vm1801 = vmor %vm1799, %vm1800
      %v1802 = vsel %vm1801, %v1793, %v1798
      %v1803 = vmul.f32 %v1785, %v1802
      %1804 = vst.msk [vmem:[%s679] sm:$0x1] %vm763, %v1803
      %p1805 = scmp.lt.s32.totalorder %s33, 1
      %s1806 = scalar_select %p1805, %s33, 1
      %s1807 = scalar_lea.vmem %s22, %s1806
      // Predicated region
      $region109: #{_lambda_.2} parent=107 // pred_check
        %p1808 = pneg %p518
      $region110: #{_lambda_.2} parent=107 // pred_check_branch
        %1810 = sbr.rel (%p1808) target = $region112
      $region111: #{_lambda_.2} parent=107 // pred_region
        _
      $region112: #{_lambda_.2} parent=107 // pred_fallthru
        _
    $region108: #{_lambda_.2} parent=5 // pred_fallthru
      _
    %p1811 = scmp.le.s32.totalorder 2, %s28
    // Predicated region
    $region113: #{_lambda_.2} parent=5 // pred_check
      %p1812 = pneg %p1811
    $region114: #{_lambda_.2} parent=5 // pred_check_branch
      %1814 = sbr.rel (%p1812) target = $region116
    $region115: #{_lambda_.2} parent=5 // pred_region
      %s1815 = ssub.s32 %s28, 2
      // Predicated region
      $region117: #{_lambda_.2} parent=115 // pred_check
        %p1816 = pneg %p524
      $region118: #{_lambda_.2} parent=115 // pred_check_branch
        %1818 = sbr.rel (%p1816) target = $region120
      $region119: #{_lambda_.2} parent=115 // pred_region
        %p1819 = scmp.lt.s32.totalorder %s34, 1
        %s1820 = scalar_select %p1819, %s34, 1
        %s1821 = scalar_lea.vmem %s22, %s1820
      $region120: #{_lambda_.2} parent=115 // pred_fallthru
        _
    $region116: #{_lambda_.2} parent=5 // pred_fallthru
      _
  $region6: #{_lambda_.2} parent=0 // loop_footer
    %s32 = sadd.s32 1, %s28
  $region7: #{_lambda_.2} parent=0 // loop_footer_branch
    %27 = sbr.rel target = $region3
  $region8: #{_lambda_.2} parent=0 // loop_exit
    _

</llo_original>
